<compile_context>
chip_gen: v5e
topology: v5e:2x2
jax: 0.10.0
libtpu: 0.0.40
codegen_flags: <defaults>
</compile_context>

<pallas_src>
import functools
import math

import jax
import jax.numpy as jnp
import numpy as np
from jax import lax
from jax.experimental import pallas as pl
from jax.experimental.pallas import tpu as pltpu

_LN_EPS = 1e-5
_BN_EPS = 1e-5


# --------------------------------------------------------------------------- helpers
def _round_up(x, m):
    return (x + m - 1) // m * m


def _choose_time_tile(t, cap=256):
    """K1 time-tile: full T if it fits, else a sublane-aligned tile (padding T if needed)."""
    if t <= cap:
        return t, t                      # block dim == full dim -> no (8,128) constraint
    top = cap - cap % 8
    for tt in range(top, 7, -8):
        if t % tt == 0:
            return tt, t
    return top, _round_up(t, top)


def _layernorm(x, g_ref, b_ref):
    """LayerNorm with statistics in f32 (gamma/beta refs are (1, D))."""
    xf = x.astype(jnp.float32)
    mean = jnp.mean(xf, axis=-1, keepdims=True)
    cent = xf - mean
    var = jnp.mean(cent * cent, axis=-1, keepdims=True)
    return (cent * lax.rsqrt(var + _LN_EPS) * g_ref[...].astype(jnp.float32)
            + b_ref[...].astype(jnp.float32))


def _mm(a, w_ref, b_ref):
    """a @ W + b: MXU operands in the (bf16) weight dtype, f32 accumulation."""
    w = w_ref[...]
    return (jnp.dot(a.astype(w.dtype), w, preferred_element_type=jnp.float32)
            + b_ref[...].astype(jnp.float32))


# --------------------------------------------------------------------------- kernel 1
def _in_ffn1_qkv_kernel(x_ref, c_ref, dbias_ref,
                        wc_ref, wix_ref, wic_ref,
                        g1_ref, b1_ref, w1a_ref, b1a_ref, w1b_ref, b1b_ref,
                        ga_ref, ba_ref, wqkv_ref, bqkv_ref,
                        x1_ref, qkv_ref):
    x = x_ref[0]                                          # (tt, D), compute dtype
    c = c_ref[0]

    # cond_projection(cond) (bias folded into dbias) ...
    condp = jnp.dot(c, wc_ref[...], preferred_element_type=jnp.float32)
    # ... in_proj(concat([x, cond])) == x @ W_x + cond @ W_c + per-batch folded bias
    wic = wic_ref[...]
    x0 = (jnp.dot(x, wix_ref[...], preferred_element_type=jnp.float32)
          + jnp.dot(condp.astype(wic.dtype), wic, preferred_element_type=jnp.float32)
          + dbias_ref[0].astype(jnp.float32))             # (1, D) broadcast

    # ffn1: LayerNorm -> Linear -> SiLU -> Linear ; x*0.5 + residual
    ln1 = _layernorm(x0, g1_ref, b1_ref)
    h = _mm(ln1, w1a_ref, b1a_ref)
    h = h * jax.nn.sigmoid(h)
    x1 = x0 + 0.5 * _mm(h, w1b_ref, b1b_ref)
    x1_ref[0] = x1.astype(x1_ref.dtype)

    # self-attention pre-LayerNorm + fused QKV projection (one (D, 3D) matmul)
    lna = _layernorm(x1, ga_ref, ba_ref)
    qkv_ref[0] = _mm(lna, wqkv_ref, bqkv_ref).astype(qkv_ref.dtype)


# --------------------------------------------------------------------------- kernel 2
def _attn_conv_ffn2_kernel(x1_ref, qkv_ref,
                           wo_ref, bo_ref,
                           gc_ref, betac_ref,
                           wpw1_ref, bpw1_ref,
                           wdw_ref, bdw_ref, bns_ref, bnb_ref,
                           wp2_ref, bp2_ref,
                           g2_ref, b2_ref, w2a_ref, b2a_ref, w2b_ref, b2b_ref,
                           gf_ref, bf_ref,
                           o_ref, *, num_heads, ksize, t_valid):
    x1 = x1_ref[0].astype(jnp.float32)                    # (Tp, D)
    qkv = qkv_ref[0]                                      # (Tp, 3D), storage dtype
    tp, d3 = qkv.shape
    d = d3 // 3
    h = num_heads
    dh = d // h
    scale = 1.0 / math.sqrt(dh)

    # ---- multi-head self-attention (all heads, lane-dense I/O) --------------
    # TODO(synk): replace the dense (H, Tp, Tp) scores with an online-softmax KV loop
    # for long sequences.
    q = (qkv[:, :d] * jnp.asarray(scale, qkv.dtype)).reshape(tp, h, dh)
    k = qkv[:, d:2 * d].reshape(tp, h, dh)
    v = qkv[:, 2 * d:].reshape(tp, h, dh)
    s = jnp.einsum("thd,shd->hts", q, k, preferred_element_type=jnp.float32)
    if t_valid != tp:                                     # mask zero-padded keys
        key_mask = lax.broadcasted_iota(jnp.int32, (1, 1, tp), 2) < t_valid
        s = jnp.where(key_mask, s, -1e30)
    s = s - jnp.max(s, axis=-1, keepdims=True)
    p = jnp.exp(s)
    inv = pl.reciprocal(jnp.sum(p, axis=-1, keepdims=True), approx=True)   # (H, Tp, 1)
    o = jnp.einsum("hts,shd->htd", p.astype(v.dtype), v,
                   preferred_element_type=jnp.float32)                     # (H, Tp, dh)
    attn = (o * inv).transpose(1, 0, 2).reshape(tp, d)                     # (Tp, D) f32

    # attention out-projection + residual
    x2 = x1 + _mm(attn, wo_ref, bo_ref)

    # ---- convolution module --------------------------------------------------
    ln_c = _layernorm(x2, gc_ref, betac_ref)
    pw = _mm(ln_c, wpw1_ref, bpw1_ref)                    # (Tp, 2C); fused GLU matmul
    c_ch = pw.shape[-1] // 2
    g = pw[:, :c_ch] * jax.nn.sigmoid(pw[:, c_ch:])       # lane-aligned halves
    if t_valid != tp:                                     # zero padded rows before conv
        row_mask = lax.broadcasted_iota(jnp.int32, (tp, 1), 0) < t_valid
        g = jnp.where(row_mask, g, 0.0)
    pad = (ksize - 1) // 2
    if pad > 0:
        zeros = jnp.zeros((pad, c_ch), jnp.float32)
        gp = jnp.concatenate([zeros, g, zeros], axis=0)   # (Tp + K - 1, C)
    else:
        gp = g
    wdw = wdw_ref[...].astype(jnp.float32)                # (K, C)
    acc = jnp.zeros((tp, c_ch), jnp.float32)
    for kk in range(ksize):                               # depthwise Conv1d along time
        acc = acc + gp[kk:kk + tp, :] * wdw[kk:kk + 1, :]
    y = acc + bdw_ref[...].astype(jnp.float32)
    # BatchNorm1d (eval) folded to per-channel affine, then SiLU
    y = y * bns_ref[...].astype(jnp.float32) + bnb_ref[...].astype(jnp.float32)
    y = y * jax.nn.sigmoid(y)
    # pointwise Conv1d(C -> D) + residual
    x3 = x2 + _mm(y, wp2_ref, bp2_ref)

    # ---- ffn2 (*0.5 + residual) + final LayerNorm ----------------------------
    ln2 = _layernorm(x3, g2_ref, b2_ref)
    h2 = _mm(ln2, w2a_ref, b2a_ref)
    h2 = h2 * jax.nn.sigmoid(h2)
    x4 = x3 + 0.5 * _mm(h2, w2b_ref, b2b_ref)
    o_ref[0] = _layernorm(x4, gf_ref, bf_ref).astype(o_ref.dtype)


# --------------------------------------------------------------------------- wrapper
@functools.partial(jax.jit, static_argnames=("num_heads", "tt_max", "vmem_limit_bytes"))
def conformer_layer_forward(inp, cond, diffusion_step, params, *, num_heads,
                            tt_max=256, vmem_limit_bytes=None):
    """inp, cond: (T, B, D); diffusion_step: (B, D).  Returns (T, B, D)."""
    T, B, D = inp.shape
    assert D % num_heads == 0
    ksize = int(params["w_dw"].shape[0])
    wdtype = params["w_in_x"].dtype                       # compute dtype (bf16)
    out_dtype = inp.dtype
    f32 = lambda a: a.astype(jnp.float32)

    # (T, B, D) -> (B, T, D); cast activations to the compute dtype at the boundary.
    x_bt = jnp.transpose(inp, (1, 0, 2)).astype(wdtype)
    c_bt = jnp.transpose(cond, (1, 0, 2)).astype(wdtype)

    # Tiny per-batch GEMMs hoisted to XLA; fold diffusion/cond/in_proj biases into one
    # per-batch (B, 1, D) f32 bias (no (N, D) broadcast ever written to HBM).
    d_b = (f32(diffusion_step) @ f32(params["w_diff"]) + f32(params["b_diff"])
           + f32(params["b_cond"]))
    d_bias = (d_b @ f32(params["w_in_c"]) + f32(params["b_in"])).reshape(B, 1, D)

    tt, t_pad = _choose_time_tile(T, tt_max)
    if t_pad != T:
        padw = ((0, 0), (0, t_pad - T), (0, 0))
        x_bt = jnp.pad(x_bt, padw)
        c_bt = jnp.pad(c_bt, padw)

    def full(shape):
        zeros = (0,) * len(shape)
        # TODO(synk): on v7x-scale configs add pipeline_mode=pl.Buffered(1) here to
        # single-buffer the resident weights (halves weight VMEM).
        return pl.BlockSpec(shape, lambda *_: zeros)

    row_x = pl.BlockSpec((1, tt, D), lambda b, t: (b, t, 0))
    row_qkv = pl.BlockSpec((1, tt, 3 * D), lambda b, t: (b, t, 0))
    d_spec = pl.BlockSpec((1, 1, D), lambda b, t: (b, 0, 0))

    # ---- K1: cond merge + in_proj + ffn1 + attn-LN + fused QKV ---------------
    w1 = [params[k] for k in ("w_cond", "w_in_x", "w_in_c", "ln1_g", "ln1_b",
                              "w1a", "b1a", "w1b", "b1b", "lna_g", "lna_b",
                              "wqkv", "bqkv")]
    x1_bt, qkv_bt = pl.pallas_call(
        _in_ffn1_qkv_kernel,
        out_shape=(jax.ShapeDtypeStruct((B, t_pad, D), wdtype),
                   jax.ShapeDtypeStruct((B, t_pad, 3 * D), wdtype)),
        grid_spec=pltpu.PrefetchScalarGridSpec(
            num_scalar_prefetch=0,
            grid=(B, t_pad // tt),
            in_specs=[row_x, row_x, d_spec] + [full(w.shape) for w in w1],
            out_specs=[row_x, row_qkv],
        ),
        compiler_params=pltpu.CompilerParams(
            dimension_semantics=("parallel", "parallel"),
            vmem_limit_bytes=vmem_limit_bytes),
    )(x_bt, c_bt, d_bias, *w1)

    # ---- K2: attention + out-proj + conv module + ffn2 + final LN ------------
    bn_scale = f32(params["bn_gamma"]) * lax.rsqrt(f32(params["bn_var"]) + _BN_EPS)
    bn_bias = f32(params["bn_beta"]) - f32(params["bn_mean"]) * bn_scale
    w2 = [params["wo"], params["bo"], params["lnc_g"], params["lnc_b"],
          params["w_pw1"], params["b_pw1"], params["w_dw"], params["b_dw"],
          bn_scale, bn_bias, params["w_pw2"], params["b_pw2"],
          params["ln2_g"], params["ln2_b"], params["w2a"], params["b2a"],
          params["w2b"], params["b2b"], params["lnf_g"], params["lnf_b"]]
    bt_spec = pl.BlockSpec((1, t_pad, D), lambda b: (b, 0, 0))
    qkv_spec = pl.BlockSpec((1, t_pad, 3 * D), lambda b: (b, 0, 0))
    out_bt = pl.pallas_call(
        functools.partial(_attn_conv_ffn2_kernel, num_heads=num_heads,
                          ksize=ksize, t_valid=T),
        out_shape=jax.ShapeDtypeStruct((B, t_pad, D), out_dtype),
        grid_spec=pltpu.PrefetchScalarGridSpec(
            num_scalar_prefetch=0,
            grid=(B,),
            in_specs=[bt_spec, qkv_spec] + [full(w.shape) for w in w2],
            out_specs=bt_spec,
        ),
        compiler_params=pltpu.CompilerParams(
            dimension_semantics=("parallel",),
            vmem_limit_bytes=vmem_limit_bytes),
    )(x1_bt, qkv_bt, *w2)

    return out_bt[:, :T, :].transpose(1, 0, 2).astype(out_dtype)


# --------------------------------------------------------------------------- params
def init_params(key, D, F, ksize, dtype=jnp.bfloat16):
    """Synthetic parameters; matmul weights stored (in_features, out_features) in bf16.
    QKV is packed as one (D, 3D) weight; the GLU pointwise conv as one (D, 2C) weight.
    NOTE: the PyTorch module requires cond_dim == input_dim; num_channels == input_dim == C."""
    ks = iter(jax.random.split(key, 64))
    C = D

    def w(shape, s=0.05):
        return (s * jax.random.normal(next(ks), shape)).astype(dtype)

    def gamma(shape):
        return (1.0 + 0.02 * jax.random.normal(next(ks), shape)).astype(dtype)

    return {
        "w_diff": w((D, D)), "b_diff": w((1, D)),
        "w_cond": w((D, D)), "b_cond": w((1, D)),
        "w_in_x": w((D, D)), "w_in_c": w((D, D)), "b_in": w((1, D)),
        "ln1_g": gamma((1, D)), "ln1_b": w((1, D)),
        "w1a": w((D, F)), "b1a": w((1, F)),
        "w1b": w((F, D)), "b1b": w((1, D)),
        "lna_g": gamma((1, D)), "lna_b": w((1, D)),
        "wqkv": w((D, 3 * D)), "bqkv": w((1, 3 * D)),
        "wo": w((D, D)), "bo": w((1, D)),
        "lnc_g": gamma((1, D)), "lnc_b": w((1, D)),
        "w_pw1": w((D, 2 * C)), "b_pw1": w((1, 2 * C)),
        "w_dw": w((ksize, C), 0.2), "b_dw": w((1, C)),
        "bn_gamma": gamma((1, C)), "bn_beta": w((1, C)),
        "bn_mean": w((1, C)),
        "bn_var": (1.0 + 0.1 * jax.random.uniform(next(ks), (1, C))).astype(dtype),
        "w_pw2": w((C, D)), "b_pw2": w((1, D)),
        "ln2_g": gamma((1, D)), "ln2_b": w((1, D)),
        "w2a": w((D, F)), "b2a": w((1, F)),
        "w2b": w((F, D)), "b2b": w((1, D)),
        "lnf_g": gamma((1, D)), "lnf_b": w((1, D)),
    }


# --------------------------------------------------------------------------- reference
def reference(inp, cond, dstep, p, *, num_heads):
    """Pure-JAX (f32 math) mirror of ConformerLayerconcateLayer.forward (eval)."""
    with jax.default_matmul_precision("float32"):
        f = lambda a: jnp.asarray(a, jnp.float32)
        T, B, D = inp.shape
        H = num_heads
        dh = D // H
        K = p["w_dw"].shape[0]
        C = p["w_pw2"].shape[0]
        silu = lambda t: t * jax.nn.sigmoid(t)

        def ln(x, g, b):
            m = jnp.mean(x, -1, keepdims=True)
            v = jnp.mean((x - m) ** 2, -1, keepdims=True)
            return (x - m) * lax.rsqrt(v + _LN_EPS) * f(g)[0] + f(b)[0]

        inp, cond, dstep = f(inp), f(cond), f(dstep)
        condf = ((dstep @ f(p["w_diff"]) + f(p["b_diff"])[0])[None]
                 + cond @ f(p["w_cond"]) + f(p["b_cond"])[0])
        x0 = inp @ f(p["w_in_x"]) + condf @ f(p["w_in_c"]) + f(p["b_in"])[0]

        h = silu(ln(x0, p["ln1_g"], p["ln1_b"]) @ f(p["w1a"]) + f(p["b1a"])[0]) \
            @ f(p["w1b"]) + f(p["b1b"])[0]
        x1 = x0 + 0.5 * h

        y = ln(x1, p["lna_g"], p["lna_b"])
        qkv = y @ f(p["wqkv"]) + f(p["bqkv"])[0]
        q, k, v = qkv[..., :D], qkv[..., D:2 * D], qkv[..., 2 * D:]

        def heads(t):  # (T,B,D) -> (B,H,T,dh)
            return t.transpose(1, 0, 2).reshape(B, T, H, dh).transpose(0, 2, 1, 3)

        s = jnp.einsum("bhtd,bhsd->bhts", heads(q), heads(k)) / math.sqrt(dh)
        a = jax.nn.softmax(s, axis=-1)
        o = jnp.einsum("bhts,bhsd->bhtd", a, heads(v))
        o = o.transpose(0, 2, 1, 3).reshape(B, T, D).transpose(1, 0, 2)     # (T,B,D)
        x2 = x1 + (o @ f(p["wo"]) + f(p["bo"])[0])

        xb = x2.transpose(1, 0, 2)                                          # (B,T,D)
        z = ln(xb, p["lnc_g"], p["lnc_b"])
        pw = z @ f(p["w_pw1"]) + f(p["b_pw1"])[0]
        g = pw[..., :C] * jax.nn.sigmoid(pw[..., C:])
        pad = (K - 1) // 2
        gp = jnp.pad(g, ((0, 0), (pad, pad), (0, 0)))
        dw = sum(gp[:, kk:kk + T, :] * f(p["w_dw"])[kk] for kk in range(K)) + f(p["b_dw"])[0]
        bn_s = f(p["bn_gamma"])[0] / jnp.sqrt(f(p["bn_var"])[0] + _BN_EPS)
        bn_b = f(p["bn_beta"])[0] - f(p["bn_mean"])[0] * bn_s
        dw = silu(dw * bn_s + bn_b)
        x3 = x2 + (dw @ f(p["w_pw2"]) + f(p["b_pw2"])[0]).transpose(1, 0, 2)

        h2 = silu(ln(x3, p["ln2_g"], p["ln2_b"]) @ f(p["w2a"]) + f(p["b2a"])[0]) \
             @ f(p["w2b"]) + f(p["b2b"])[0]
        x4 = x3 + 0.5 * h2
        return ln(x4, p["lnf_g"], p["lnf_b"])


# --------------------------------------------------------------------------- demo
if __name__ == "__main__":
    T, B, D = 24, 2, 128          # (T, B, D) input layout, as in the PyTorch module
    F = 256                       # ffn_dim
    HEADS = 4                     # num_attention_heads
    KSIZE = 5                     # depthwise_conv_kernel_size (odd)

    key = jax.random.PRNGKey(0)
    kx, kc, kd, kp = jax.random.split(key, 4)
    inp = jax.random.normal(kx, (T, B, D), dtype=jnp.float32)
    cond = jax.random.normal(kc, (T, B, D), dtype=jnp.float32)
    dstep = jax.random.normal(kd, (B, D), dtype=jnp.float32)
    params = init_params(kp, D, F, KSIZE, dtype=jnp.bfloat16)

    out = conformer_layer_forward(inp, cond, dstep, params, num_heads=HEADS)
    out = jax.block_until_ready(out)

    ref = reference(inp, cond, dstep, params, num_heads=HEADS)
    # bf16 matmul operands / boundary activations in the kernel vs an f32-math reference
    # on the same bf16 weights -> loosened tolerance (see perf-review numerics note).
    np.testing.assert_allclose(np.asarray(out, np.float32), np.asarray(ref, np.float32),
                               rtol=5e-2, atol=6e-2)

    print("KERNEL_OK")
</pallas_src>

<mosaic_0001>
module attributes {stable_mosaic.version = 11 : i64} {
  func.func @_attn_conv_ffn2_kernel(%arg0: i32, %arg1: memref<1x24x128xbf16, #tpu.memory_space<vmem>>, %arg2: memref<1x24x384xbf16, #tpu.memory_space<vmem>>, %arg3: memref<128x128xbf16, #tpu.memory_space<vmem>>, %arg4: memref<1x128xbf16, #tpu.memory_space<vmem>>, %arg5: memref<1x128xbf16, #tpu.memory_space<vmem>>, %arg6: memref<1x128xbf16, #tpu.memory_space<vmem>>, %arg7: memref<128x256xbf16, #tpu.memory_space<vmem>>, %arg8: memref<1x256xbf16, #tpu.memory_space<vmem>>, %arg9: memref<5x128xbf16, #tpu.memory_space<vmem>>, %arg10: memref<1x128xbf16, #tpu.memory_space<vmem>>, %arg11: memref<1x128xf32, #tpu.memory_space<vmem>>, %arg12: memref<1x128xf32, #tpu.memory_space<vmem>>, %arg13: memref<128x128xbf16, #tpu.memory_space<vmem>>, %arg14: memref<1x128xbf16, #tpu.memory_space<vmem>>, %arg15: memref<1x128xbf16, #tpu.memory_space<vmem>>, %arg16: memref<1x128xbf16, #tpu.memory_space<vmem>>, %arg17: memref<128x256xbf16, #tpu.memory_space<vmem>>, %arg18: memref<1x256xbf16, #tpu.memory_space<vmem>>, %arg19: memref<256x128xbf16, #tpu.memory_space<vmem>>, %arg20: memref<1x128xbf16, #tpu.memory_space<vmem>>, %arg21: memref<1x128xbf16, #tpu.memory_space<vmem>>, %arg22: memref<1x128xbf16, #tpu.memory_space<vmem>>, %arg23: memref<1x24x128xf32, #tpu.memory_space<vmem>>) attributes {dimension_semantics = [#tpu.dimension_semantics<parallel>], iteration_bounds = array<i64: 2>, scalar_prefetch = 0 : i64, scratch_operands = 0 : i64, tpu.core_type = #tpu.core_type<tc>, window_params = [{transform_indices = @transform_0, window_bounds = array<i64: 1, 24, 128>}, {transform_indices = @transform_1, window_bounds = array<i64: 1, 24, 384>}, {pipeline_mode = #tpu.pipeline_mode<synchronous>, transform_indices = @transform_2, window_bounds = array<i64: 128, 128>}, {pipeline_mode = #tpu.pipeline_mode<synchronous>, transform_indices = @transform_3, window_bounds = array<i64: 1, 128>}, {pipeline_mode = #tpu.pipeline_mode<synchronous>, transform_indices = @transform_4, window_bounds = array<i64: 1, 128>}, {pipeline_mode = #tpu.pipeline_mode<synchronous>, transform_indices = @transform_5, window_bounds = array<i64: 1, 128>}, {pipeline_mode = #tpu.pipeline_mode<synchronous>, transform_indices = @transform_6, window_bounds = array<i64: 128, 256>}, {pipeline_mode = #tpu.pipeline_mode<synchronous>, transform_indices = @transform_7, window_bounds = array<i64: 1, 256>}, {pipeline_mode = #tpu.pipeline_mode<synchronous>, transform_indices = @transform_8, window_bounds = array<i64: 5, 128>}, {pipeline_mode = #tpu.pipeline_mode<synchronous>, transform_indices = @transform_9, window_bounds = array<i64: 1, 128>}, {pipeline_mode = #tpu.pipeline_mode<synchronous>, transform_indices = @transform_10, window_bounds = array<i64: 1, 128>}, {pipeline_mode = #tpu.pipeline_mode<synchronous>, transform_indices = @transform_11, window_bounds = array<i64: 1, 128>}, {pipeline_mode = #tpu.pipeline_mode<synchronous>, transform_indices = @transform_12, window_bounds = array<i64: 128, 128>}, {pipeline_mode = #tpu.pipeline_mode<synchronous>, transform_indices = @transform_13, window_bounds = array<i64: 1, 128>}, {pipeline_mode = #tpu.pipeline_mode<synchronous>, transform_indices = @transform_14, window_bounds = array<i64: 1, 128>}, {pipeline_mode = #tpu.pipeline_mode<synchronous>, transform_indices = @transform_15, window_bounds = array<i64: 1, 128>}, {pipeline_mode = #tpu.pipeline_mode<synchronous>, transform_indices = @transform_16, window_bounds = array<i64: 128, 256>}, {pipeline_mode = #tpu.pipeline_mode<synchronous>, transform_indices = @transform_17, window_bounds = array<i64: 1, 256>}, {pipeline_mode = #tpu.pipeline_mode<synchronous>, transform_indices = @transform_18, window_bounds = array<i64: 256, 128>}, {pipeline_mode = #tpu.pipeline_mode<synchronous>, transform_indices = @transform_19, window_bounds = array<i64: 1, 128>}, {pipeline_mode = #tpu.pipeline_mode<synchronous>, transform_indices = @transform_20, window_bounds = array<i64: 1, 128>}, {pipeline_mode = #tpu.pipeline_mode<synchronous>, transform_indices = @transform_21, window_bounds = array<i64: 1, 128>}, {transform_indices = @transform_22, window_bounds = array<i64: 1, 24, 128>}]} {
    %c0 = arith.constant 0 : index
    %c0_0 = arith.constant 0 : index
    %c0_1 = arith.constant 0 : index
    %0 = vector.load %arg1[%c0, %c0_0, %c0_1] : memref<1x24x128xbf16, #tpu.memory_space<vmem>>, vector<1x24x128xbf16>
    %1 = vector.shape_cast %0 : vector<1x24x128xbf16> to vector<24x128xbf16>
    %2 = arith.extf %1 : vector<24x128xbf16> to vector<24x128xf32>
    %c0_2 = arith.constant 0 : index
    %c0_3 = arith.constant 0 : index
    %c0_4 = arith.constant 0 : index
    %3 = vector.load %arg2[%c0_2, %c0_3, %c0_4] : memref<1x24x384xbf16, #tpu.memory_space<vmem>>, vector<1x24x384xbf16>
    %4 = vector.shape_cast %3 : vector<1x24x384xbf16> to vector<24x384xbf16>
    %5 = vector.extract_strided_slice %4 {offsets = [0, 0], sizes = [24, 128], strides = [1, 1]} : vector<24x384xbf16> to vector<24x128xbf16>
    %cst = arith.constant 1.767580e-01 : bf16
    %6 = vector.broadcast %cst : bf16 to vector<24x128xbf16>
    %7 = arith.mulf %5, %6 : vector<24x128xbf16>
    %8 = vector.shape_cast %7 : vector<24x128xbf16> to vector<24x4x32xbf16>
    %9 = vector.extract_strided_slice %4 {offsets = [0, 128], sizes = [24, 128], strides = [1, 1]} : vector<24x384xbf16> to vector<24x128xbf16>
    %10 = vector.shape_cast %9 : vector<24x128xbf16> to vector<24x4x32xbf16>
    %11 = vector.extract_strided_slice %4 {offsets = [0, 256], sizes = [24, 128], strides = [1, 1]} : vector<24x384xbf16> to vector<24x128xbf16>
    %12 = vector.shape_cast %11 : vector<24x128xbf16> to vector<24x4x32xbf16>
    "tpu.trace_start"() <{level = 10 : i32, message = "thd,shd->hts"}> : () -> ()
    %cst_5 = arith.constant dense<0.000000e+00> : vector<4x24x24xf32>
    %13 = tpu.matmul %8, %10, %cst_5 {dimension_numbers = #tpu.dot_dimension_numbers<[2], [2], [0], [0], [0, 1, 0, 0, 1, 0], [1], [1]>} : vector<24x4x32xbf16>, vector<24x4x32xbf16>, vector<4x24x24xf32> -> vector<4x24x24xf32>
    "tpu.trace_stop"() : () -> ()
    %cst_6 = arith.constant dense<0xFF800000> : vector<4x24xf32>
    %14 = vector.multi_reduction <maximumf>, %13, %cst_6 [2] : vector<4x24x24xf32> to vector<4x24xf32>
    %15 = vector.shape_cast %14 : vector<4x24xf32> to vector<4x24x1xf32>
    %16 = vector.broadcast %15 : vector<4x24x1xf32> to vector<4x24x24xf32>
    %17 = arith.subf %13, %16 : vector<4x24x24xf32>
    %18 = math.exp %17 : vector<4x24x24xf32>
    %cst_7 = arith.constant dense<0.000000e+00> : vector<4x24xf32>
    %19 = vector.multi_reduction <add>, %18, %cst_7 [2] : vector<4x24x24xf32> to vector<4x24xf32>
    %20 = vector.shape_cast %19 : vector<4x24xf32> to vector<4x24x1xf32>
    %21 = tpu.reciprocal %20 {approx = true} : vector<4x24x1xf32> -> vector<4x24x1xf32>
    %22 = arith.truncf %18 : vector<4x24x24xf32> to vector<4x24x24xbf16>
    "tpu.trace_start"() <{level = 10 : i32, message = "hts,shd->htd"}> : () -> ()
    %cst_8 = arith.constant dense<0.000000e+00> : vector<4x24x32xf32>
    %23 = tpu.matmul %22, %12, %cst_8 {dimension_numbers = #tpu.dot_dimension_numbers<[2], [0], [1], [2], [0, 0, 0, 1, 1, 2], [0], [1]>} : vector<4x24x24xbf16>, vector<24x4x32xbf16>, vector<4x24x32xf32> -> vector<4x24x32xf32>
    "tpu.trace_stop"() : () -> ()
    %24 = vector.broadcast %21 : vector<4x24x1xf32> to vector<4x24x32xf32>
    %25 = arith.mulf %23, %24 : vector<4x24x32xf32>
    %26 = tpu.transpose %25, [1, 0, 2] : vector<4x24x32xf32> -> vector<24x4x32xf32>
    %27 = vector.shape_cast %26 : vector<24x4x32xf32> to vector<24x128xf32>
    %c0_9 = arith.constant 0 : index
    %c0_10 = arith.constant 0 : index
    %28 = vector.load %arg3[%c0_9, %c0_10] : memref<128x128xbf16, #tpu.memory_space<vmem>>, vector<128x128xbf16>
    %29 = arith.truncf %27 : vector<24x128xf32> to vector<24x128xbf16>
    %cst_11 = arith.constant dense<0.000000e+00> : vector<24x128xf32>
    %30 = tpu.matmul %29, %28, %cst_11 {dimension_numbers = #tpu.dot_dimension_numbers<[1], [0], [0], [1], [0, 0, 1, 1], [], []>} : vector<24x128xbf16>, vector<128x128xbf16>, vector<24x128xf32> -> vector<24x128xf32>
    %c0_12 = arith.constant 0 : index
    %c0_13 = arith.constant 0 : index
    %31 = vector.load %arg4[%c0_12, %c0_13] : memref<1x128xbf16, #tpu.memory_space<vmem>>, vector<1x128xbf16>
    %32 = arith.extf %31 : vector<1x128xbf16> to vector<1x128xf32>
    %33 = vector.broadcast %32 : vector<1x128xf32> to vector<24x128xf32>
    %34 = arith.addf %30, %33 : vector<24x128xf32>
    %35 = arith.addf %2, %34 : vector<24x128xf32>
    %cst_14 = arith.constant dense<0.000000e+00> : vector<24xf32>
    %36 = vector.multi_reduction <add>, %35, %cst_14 [1] : vector<24x128xf32> to vector<24xf32>
    %37 = vector.shape_cast %36 : vector<24xf32> to vector<24x1xf32>
    %cst_15 = arith.constant 1.280000e+02 : f32
    %38 = vector.broadcast %cst_15 : f32 to vector<24x1xf32>
    %39 = arith.divf %37, %38 : vector<24x1xf32>
    %40 = vector.broadcast %39 : vector<24x1xf32> to vector<24x128xf32>
    %41 = arith.subf %35, %40 : vector<24x128xf32>
    %42 = arith.mulf %41, %41 : vector<24x128xf32>
    %cst_16 = arith.constant dense<0.000000e+00> : vector<24xf32>
    %43 = vector.multi_reduction <add>, %42, %cst_16 [1] : vector<24x128xf32> to vector<24xf32>
    %44 = vector.shape_cast %43 : vector<24xf32> to vector<24x1xf32>
    %cst_17 = arith.constant 1.280000e+02 : f32
    %45 = vector.broadcast %cst_17 : f32 to vector<24x1xf32>
    %46 = arith.divf %44, %45 : vector<24x1xf32>
    %cst_18 = arith.constant 9.99999974E-6 : f32
    %47 = vector.broadcast %cst_18 : f32 to vector<24x1xf32>
    %48 = arith.addf %46, %47 : vector<24x1xf32>
    %49 = math.rsqrt %48 : vector<24x1xf32>
    %50 = vector.broadcast %49 : vector<24x1xf32> to vector<24x128xf32>
    %51 = arith.mulf %41, %50 : vector<24x128xf32>
    %c0_19 = arith.constant 0 : index
    %c0_20 = arith.constant 0 : index
    %52 = vector.load %arg5[%c0_19, %c0_20] : memref<1x128xbf16, #tpu.memory_space<vmem>>, vector<1x128xbf16>
    %53 = arith.extf %52 : vector<1x128xbf16> to vector<1x128xf32>
    %54 = vector.broadcast %53 : vector<1x128xf32> to vector<24x128xf32>
    %55 = arith.mulf %51, %54 : vector<24x128xf32>
    %c0_21 = arith.constant 0 : index
    %c0_22 = arith.constant 0 : index
    %56 = vector.load %arg6[%c0_21, %c0_22] : memref<1x128xbf16, #tpu.memory_space<vmem>>, vector<1x128xbf16>
    %57 = arith.extf %56 : vector<1x128xbf16> to vector<1x128xf32>
    %58 = vector.broadcast %57 : vector<1x128xf32> to vector<24x128xf32>
    %59 = arith.addf %55, %58 : vector<24x128xf32>
    %c0_23 = arith.constant 0 : index
    %c0_24 = arith.constant 0 : index
    %60 = vector.load %arg7[%c0_23, %c0_24] : memref<128x256xbf16, #tpu.memory_space<vmem>>, vector<128x256xbf16>
    %61 = arith.truncf %59 : vector<24x128xf32> to vector<24x128xbf16>
    %cst_25 = arith.constant dense<0.000000e+00> : vector<24x256xf32>
    %62 = tpu.matmul %61, %60, %cst_25 {dimension_numbers = #tpu.dot_dimension_numbers<[1], [0], [0], [1], [0, 0, 1, 1], [], []>} : vector<24x128xbf16>, vector<128x256xbf16>, vector<24x256xf32> -> vector<24x256xf32>
    %c0_26 = arith.constant 0 : index
    %c0_27 = arith.constant 0 : index
    %63 = vector.load %arg8[%c0_26, %c0_27] : memref<1x256xbf16, #tpu.memory_space<vmem>>, vector<1x256xbf16>
    %64 = arith.extf %63 : vector<1x256xbf16> to vector<1x256xf32>
    %65 = vector.broadcast %64 : vector<1x256xf32> to vector<24x256xf32>
    %66 = arith.addf %62, %65 : vector<24x256xf32>
    %67 = vector.extract_strided_slice %66 {offsets = [0, 0], sizes = [24, 128], strides = [1, 1]} : vector<24x256xf32> to vector<24x128xf32>
    %68 = vector.extract_strided_slice %66 {offsets = [0, 128], sizes = [24, 128], strides = [1, 1]} : vector<24x256xf32> to vector<24x128xf32>
    %69 = arith.negf %68 : vector<24x128xf32>
    %70 = math.exp %69 : vector<24x128xf32>
    %cst_28 = arith.constant 1.000000e+00 : f32
    %71 = vector.broadcast %cst_28 : f32 to vector<24x128xf32>
    %72 = arith.addf %71, %70 : vector<24x128xf32>
    %73 = arith.divf %71, %72 : vector<24x128xf32>
    %74 = arith.mulf %67, %73 : vector<24x128xf32>
    %cst_29 = arith.constant 0.000000e+00 : f32
    %75 = vector.broadcast %cst_29 : f32 to vector<2x128xf32>
    %76 = tpu.concatenate %75, %74, %75 in 0 : vector<2x128xf32>, vector<24x128xf32>, vector<2x128xf32> -> vector<28x128xf32>
    %c0_30 = arith.constant 0 : index
    %c0_31 = arith.constant 0 : index
    %77 = vector.load %arg9[%c0_30, %c0_31] : memref<5x128xbf16, #tpu.memory_space<vmem>>, vector<5x128xbf16>
    %78 = arith.extf %77 : vector<5x128xbf16> to vector<5x128xf32>
    %cst_32 = arith.constant 0.000000e+00 : f32
    %79 = vector.broadcast %cst_32 : f32 to vector<24x128xf32>
    %80 = vector.extract_strided_slice %76 {offsets = [0, 0], sizes = [24, 128], strides = [1, 1]} : vector<28x128xf32> to vector<24x128xf32>
    %81 = vector.extract_strided_slice %78 {offsets = [0, 0], sizes = [1, 128], strides = [1, 1]} : vector<5x128xf32> to vector<1x128xf32>
    %82 = vector.broadcast %81 : vector<1x128xf32> to vector<24x128xf32>
    %83 = arith.mulf %80, %82 : vector<24x128xf32>
    %84 = arith.addf %79, %83 : vector<24x128xf32>
    %85 = vector.extract_strided_slice %76 {offsets = [1, 0], sizes = [24, 128], strides = [1, 1]} : vector<28x128xf32> to vector<24x128xf32>
    %86 = vector.extract_strided_slice %78 {offsets = [1, 0], sizes = [1, 128], strides = [1, 1]} : vector<5x128xf32> to vector<1x128xf32>
    %87 = vector.broadcast %86 : vector<1x128xf32> to vector<24x128xf32>
    %88 = arith.mulf %85, %87 : vector<24x128xf32>
    %89 = arith.addf %84, %88 : vector<24x128xf32>
    %90 = vector.extract_strided_slice %76 {offsets = [2, 0], sizes = [24, 128], strides = [1, 1]} : vector<28x128xf32> to vector<24x128xf32>
    %91 = vector.extract_strided_slice %78 {offsets = [2, 0], sizes = [1, 128], strides = [1, 1]} : vector<5x128xf32> to vector<1x128xf32>
    %92 = vector.broadcast %91 : vector<1x128xf32> to vector<24x128xf32>
    %93 = arith.mulf %90, %92 : vector<24x128xf32>
    %94 = arith.addf %89, %93 : vector<24x128xf32>
    %95 = vector.extract_strided_slice %76 {offsets = [3, 0], sizes = [24, 128], strides = [1, 1]} : vector<28x128xf32> to vector<24x128xf32>
    %96 = vector.extract_strided_slice %78 {offsets = [3, 0], sizes = [1, 128], strides = [1, 1]} : vector<5x128xf32> to vector<1x128xf32>
    %97 = vector.broadcast %96 : vector<1x128xf32> to vector<24x128xf32>
    %98 = arith.mulf %95, %97 : vector<24x128xf32>
    %99 = arith.addf %94, %98 : vector<24x128xf32>
    %100 = vector.extract_strided_slice %76 {offsets = [4, 0], sizes = [24, 128], strides = [1, 1]} : vector<28x128xf32> to vector<24x128xf32>
    %101 = vector.extract_strided_slice %78 {offsets = [4, 0], sizes = [1, 128], strides = [1, 1]} : vector<5x128xf32> to vector<1x128xf32>
    %102 = vector.broadcast %101 : vector<1x128xf32> to vector<24x128xf32>
    %103 = arith.mulf %100, %102 : vector<24x128xf32>
    %104 = arith.addf %99, %103 : vector<24x128xf32>
    %c0_33 = arith.constant 0 : index
    %c0_34 = arith.constant 0 : index
    %105 = vector.load %arg10[%c0_33, %c0_34] : memref<1x128xbf16, #tpu.memory_space<vmem>>, vector<1x128xbf16>
    %106 = arith.extf %105 : vector<1x128xbf16> to vector<1x128xf32>
    %107 = vector.broadcast %106 : vector<1x128xf32> to vector<24x128xf32>
    %108 = arith.addf %104, %107 : vector<24x128xf32>
    %c0_35 = arith.constant 0 : index
    %c0_36 = arith.constant 0 : index
    %109 = vector.load %arg11[%c0_35, %c0_36] : memref<1x128xf32, #tpu.memory_space<vmem>>, vector<1x128xf32>
    %110 = vector.broadcast %109 : vector<1x128xf32> to vector<24x128xf32>
    %111 = arith.mulf %108, %110 : vector<24x128xf32>
    %c0_37 = arith.constant 0 : index
    %c0_38 = arith.constant 0 : index
    %112 = vector.load %arg12[%c0_37, %c0_38] : memref<1x128xf32, #tpu.memory_space<vmem>>, vector<1x128xf32>
    %113 = vector.broadcast %112 : vector<1x128xf32> to vector<24x128xf32>
    %114 = arith.addf %111, %113 : vector<24x128xf32>
    %115 = arith.negf %114 : vector<24x128xf32>
    %116 = math.exp %115 : vector<24x128xf32>
    %cst_39 = arith.constant 1.000000e+00 : f32
    %117 = vector.broadcast %cst_39 : f32 to vector<24x128xf32>
    %118 = arith.addf %117, %116 : vector<24x128xf32>
    %119 = arith.divf %117, %118 : vector<24x128xf32>
    %120 = arith.mulf %114, %119 : vector<24x128xf32>
    %c0_40 = arith.constant 0 : index
    %c0_41 = arith.constant 0 : index
    %121 = vector.load %arg13[%c0_40, %c0_41] : memref<128x128xbf16, #tpu.memory_space<vmem>>, vector<128x128xbf16>
    %122 = arith.truncf %120 : vector<24x128xf32> to vector<24x128xbf16>
    %cst_42 = arith.constant dense<0.000000e+00> : vector<24x128xf32>
    %123 = tpu.matmul %122, %121, %cst_42 {dimension_numbers = #tpu.dot_dimension_numbers<[1], [0], [0], [1], [0, 0, 1, 1], [], []>} : vector<24x128xbf16>, vector<128x128xbf16>, vector<24x128xf32> -> vector<24x128xf32>
    %c0_43 = arith.constant 0 : index
    %c0_44 = arith.constant 0 : index
    %124 = vector.load %arg14[%c0_43, %c0_44] : memref<1x128xbf16, #tpu.memory_space<vmem>>, vector<1x128xbf16>
    %125 = arith.extf %124 : vector<1x128xbf16> to vector<1x128xf32>
    %126 = vector.broadcast %125 : vector<1x128xf32> to vector<24x128xf32>
    %127 = arith.addf %123, %126 : vector<24x128xf32>
    %128 = arith.addf %35, %127 : vector<24x128xf32>
    %cst_45 = arith.constant dense<0.000000e+00> : vector<24xf32>
    %129 = vector.multi_reduction <add>, %128, %cst_45 [1] : vector<24x128xf32> to vector<24xf32>
    %130 = vector.shape_cast %129 : vector<24xf32> to vector<24x1xf32>
    %cst_46 = arith.constant 1.280000e+02 : f32
    %131 = vector.broadcast %cst_46 : f32 to vector<24x1xf32>
    %132 = arith.divf %130, %131 : vector<24x1xf32>
    %133 = vector.broadcast %132 : vector<24x1xf32> to vector<24x128xf32>
    %134 = arith.subf %128, %133 : vector<24x128xf32>
    %135 = arith.mulf %134, %134 : vector<24x128xf32>
    %cst_47 = arith.constant dense<0.000000e+00> : vector<24xf32>
    %136 = vector.multi_reduction <add>, %135, %cst_47 [1] : vector<24x128xf32> to vector<24xf32>
    %137 = vector.shape_cast %136 : vector<24xf32> to vector<24x1xf32>
    %cst_48 = arith.constant 1.280000e+02 : f32
    %138 = vector.broadcast %cst_48 : f32 to vector<24x1xf32>
    %139 = arith.divf %137, %138 : vector<24x1xf32>
    %cst_49 = arith.constant 9.99999974E-6 : f32
    %140 = vector.broadcast %cst_49 : f32 to vector<24x1xf32>
    %141 = arith.addf %139, %140 : vector<24x1xf32>
    %142 = math.rsqrt %141 : vector<24x1xf32>
    %143 = vector.broadcast %142 : vector<24x1xf32> to vector<24x128xf32>
    %144 = arith.mulf %134, %143 : vector<24x128xf32>
    %c0_50 = arith.constant 0 : index
    %c0_51 = arith.constant 0 : index
    %145 = vector.load %arg15[%c0_50, %c0_51] : memref<1x128xbf16, #tpu.memory_space<vmem>>, vector<1x128xbf16>
    %146 = arith.extf %145 : vector<1x128xbf16> to vector<1x128xf32>
    %147 = vector.broadcast %146 : vector<1x128xf32> to vector<24x128xf32>
    %148 = arith.mulf %144, %147 : vector<24x128xf32>
    %c0_52 = arith.constant 0 : index
    %c0_53 = arith.constant 0 : index
    %149 = vector.load %arg16[%c0_52, %c0_53] : memref<1x128xbf16, #tpu.memory_space<vmem>>, vector<1x128xbf16>
    %150 = arith.extf %149 : vector<1x128xbf16> to vector<1x128xf32>
    %151 = vector.broadcast %150 : vector<1x128xf32> to vector<24x128xf32>
    %152 = arith.addf %148, %151 : vector<24x128xf32>
    %c0_54 = arith.constant 0 : index
    %c0_55 = arith.constant 0 : index
    %153 = vector.load %arg17[%c0_54, %c0_55] : memref<128x256xbf16, #tpu.memory_space<vmem>>, vector<128x256xbf16>
    %154 = arith.truncf %152 : vector<24x128xf32> to vector<24x128xbf16>
    %cst_56 = arith.constant dense<0.000000e+00> : vector<24x256xf32>
    %155 = tpu.matmul %154, %153, %cst_56 {dimension_numbers = #tpu.dot_dimension_numbers<[1], [0], [0], [1], [0, 0, 1, 1], [], []>} : vector<24x128xbf16>, vector<128x256xbf16>, vector<24x256xf32> -> vector<24x256xf32>
    %c0_57 = arith.constant 0 : index
    %c0_58 = arith.constant 0 : index
    %156 = vector.load %arg18[%c0_57, %c0_58] : memref<1x256xbf16, #tpu.memory_space<vmem>>, vector<1x256xbf16>
    %157 = arith.extf %156 : vector<1x256xbf16> to vector<1x256xf32>
    %158 = vector.broadcast %157 : vector<1x256xf32> to vector<24x256xf32>
    %159 = arith.addf %155, %158 : vector<24x256xf32>
    %160 = arith.negf %159 : vector<24x256xf32>
    %161 = math.exp %160 : vector<24x256xf32>
    %cst_59 = arith.constant 1.000000e+00 : f32
    %162 = vector.broadcast %cst_59 : f32 to vector<24x256xf32>
    %163 = arith.addf %162, %161 : vector<24x256xf32>
    %164 = arith.divf %162, %163 : vector<24x256xf32>
    %165 = arith.mulf %159, %164 : vector<24x256xf32>
    %c0_60 = arith.constant 0 : index
    %c0_61 = arith.constant 0 : index
    %166 = vector.load %arg19[%c0_60, %c0_61] : memref<256x128xbf16, #tpu.memory_space<vmem>>, vector<256x128xbf16>
    %167 = arith.truncf %165 : vector<24x256xf32> to vector<24x256xbf16>
    %cst_62 = arith.constant dense<0.000000e+00> : vector<24x128xf32>
    %168 = tpu.matmul %167, %166, %cst_62 {dimension_numbers = #tpu.dot_dimension_numbers<[1], [0], [0], [1], [0, 0, 1, 1], [], []>} : vector<24x256xbf16>, vector<256x128xbf16>, vector<24x128xf32> -> vector<24x128xf32>
    %c0_63 = arith.constant 0 : index
    %c0_64 = arith.constant 0 : index
    %169 = vector.load %arg20[%c0_63, %c0_64] : memref<1x128xbf16, #tpu.memory_space<vmem>>, vector<1x128xbf16>
    %170 = arith.extf %169 : vector<1x128xbf16> to vector<1x128xf32>
    %171 = vector.broadcast %170 : vector<1x128xf32> to vector<24x128xf32>
    %172 = arith.addf %168, %171 : vector<24x128xf32>
    %cst_65 = arith.constant 5.000000e-01 : f32
    %173 = vector.broadcast %cst_65 : f32 to vector<24x128xf32>
    %174 = arith.mulf %173, %172 : vector<24x128xf32>
    %175 = arith.addf %128, %174 : vector<24x128xf32>
    %cst_66 = arith.constant dense<0.000000e+00> : vector<24xf32>
    %176 = vector.multi_reduction <add>, %175, %cst_66 [1] : vector<24x128xf32> to vector<24xf32>
    %177 = vector.shape_cast %176 : vector<24xf32> to vector<24x1xf32>
    %cst_67 = arith.constant 1.280000e+02 : f32
    %178 = vector.broadcast %cst_67 : f32 to vector<24x1xf32>
    %179 = arith.divf %177, %178 : vector<24x1xf32>
    %180 = vector.broadcast %179 : vector<24x1xf32> to vector<24x128xf32>
    %181 = arith.subf %175, %180 : vector<24x128xf32>
    %182 = arith.mulf %181, %181 : vector<24x128xf32>
    %cst_68 = arith.constant dense<0.000000e+00> : vector<24xf32>
    %183 = vector.multi_reduction <add>, %182, %cst_68 [1] : vector<24x128xf32> to vector<24xf32>
    %184 = vector.shape_cast %183 : vector<24xf32> to vector<24x1xf32>
    %cst_69 = arith.constant 1.280000e+02 : f32
    %185 = vector.broadcast %cst_69 : f32 to vector<24x1xf32>
    %186 = arith.divf %184, %185 : vector<24x1xf32>
    %cst_70 = arith.constant 9.99999974E-6 : f32
    %187 = vector.broadcast %cst_70 : f32 to vector<24x1xf32>
    %188 = arith.addf %186, %187 : vector<24x1xf32>
    %189 = math.rsqrt %188 : vector<24x1xf32>
    %190 = vector.broadcast %189 : vector<24x1xf32> to vector<24x128xf32>
    %191 = arith.mulf %181, %190 : vector<24x128xf32>
    %c0_71 = arith.constant 0 : index
    %c0_72 = arith.constant 0 : index
    %192 = vector.load %arg21[%c0_71, %c0_72] : memref<1x128xbf16, #tpu.memory_space<vmem>>, vector<1x128xbf16>
    %193 = arith.extf %192 : vector<1x128xbf16> to vector<1x128xf32>
    %194 = vector.broadcast %193 : vector<1x128xf32> to vector<24x128xf32>
    %195 = arith.mulf %191, %194 : vector<24x128xf32>
    %c0_73 = arith.constant 0 : index
    %c0_74 = arith.constant 0 : index
    %196 = vector.load %arg22[%c0_73, %c0_74] : memref<1x128xbf16, #tpu.memory_space<vmem>>, vector<1x128xbf16>
    %197 = arith.extf %196 : vector<1x128xbf16> to vector<1x128xf32>
    %198 = vector.broadcast %197 : vector<1x128xf32> to vector<24x128xf32>
    %199 = arith.addf %195, %198 : vector<24x128xf32>
    %c0_75 = arith.constant 0 : index
    %c0_76 = arith.constant 0 : index
    %c0_77 = arith.constant 0 : index
    %200 = vector.load %arg23[%c0_75, %c0_76, %c0_77] : memref<1x24x128xf32, #tpu.memory_space<vmem>>, vector<1x24x128xf32>
    %201 = vector.shape_cast %200 : vector<1x24x128xf32> to vector<24x128xf32>
    %202 = vector.shape_cast %199 : vector<24x128xf32> to vector<1x24x128xf32>
    tpu.vector_store %arg23[%c0_75, %c0_76, %c0_77], %202 {strides = array<i32>} : memref<1x24x128xf32, #tpu.memory_space<vmem>>, vector<1x24x128xf32>,
    return
  }
  func.func @transform_0(%arg0: i32) -> (i32, i32, i32) {
    %c0_i32 = arith.constant 0 : i32
    %c0_i32_0 = arith.constant 0 : i32
    %c0_i32_1 = arith.constant 0 : i32
    return %arg0, %c0_i32, %c0_i32_0 : i32, i32, i32
  }
  func.func @transform_1(%arg0: i32) -> (i32, i32, i32) {
    %c0_i32 = arith.constant 0 : i32
    %c0_i32_0 = arith.constant 0 : i32
    %c0_i32_1 = arith.constant 0 : i32
    return %arg0, %c0_i32, %c0_i32_0 : i32, i32, i32
  }
  func.func @transform_2(%arg0: i32) -> (i32, i32) {
    %c0_i32 = arith.constant 0 : i32
    %c0_i32_0 = arith.constant 0 : i32
    %c0_i32_1 = arith.constant 0 : i32
    return %c0_i32, %c0_i32_0 : i32, i32
  }
  func.func @transform_3(%arg0: i32) -> (i32, i32) {
    %c0_i32 = arith.constant 0 : i32
    %c0_i32_0 = arith.constant 0 : i32
    %c0_i32_1 = arith.constant 0 : i32
    return %c0_i32, %c0_i32_0 : i32, i32
  }
  func.func @transform_4(%arg0: i32) -> (i32, i32) {
    %c0_i32 = arith.constant 0 : i32
    %c0_i32_0 = arith.constant 0 : i32
    %c0_i32_1 = arith.constant 0 : i32
    return %c0_i32, %c0_i32_0 : i32, i32
  }
  func.func @transform_5(%arg0: i32) -> (i32, i32) {
    %c0_i32 = arith.constant 0 : i32
    %c0_i32_0 = arith.constant 0 : i32
    %c0_i32_1 = arith.constant 0 : i32
    return %c0_i32, %c0_i32_0 : i32, i32
  }
  func.func @transform_6(%arg0: i32) -> (i32, i32) {
    %c0_i32 = arith.constant 0 : i32
    %c0_i32_0 = arith.constant 0 : i32
    %c0_i32_1 = arith.constant 0 : i32
    return %c0_i32, %c0_i32_0 : i32, i32
  }
  func.func @transform_7(%arg0: i32) -> (i32, i32) {
    %c0_i32 = arith.constant 0 : i32
    %c0_i32_0 = arith.constant 0 : i32
    %c0_i32_1 = arith.constant 0 : i32
    return %c0_i32, %c0_i32_0 : i32, i32
  }
  func.func @transform_8(%arg0: i32) -> (i32, i32) {
    %c0_i32 = arith.constant 0 : i32
    %c0_i32_0 = arith.constant 0 : i32
    %c0_i32_1 = arith.constant 0 : i32
    return %c0_i32, %c0_i32_0 : i32, i32
  }
  func.func @transform_9(%arg0: i32) -> (i32, i32) {
    %c0_i32 = arith.constant 0 : i32
    %c0_i32_0 = arith.constant 0 : i32
    %c0_i32_1 = arith.constant 0 : i32
    return %c0_i32, %c0_i32_0 : i32, i32
  }
  func.func @transform_10(%arg0: i32) -> (i32, i32) {
    %c0_i32 = arith.constant 0 : i32
    %c0_i32_0 = arith.constant 0 : i32
    %c0_i32_1 = arith.constant 0 : i32
    return %c0_i32, %c0_i32_0 : i32, i32
  }
  func.func @transform_11(%arg0: i32) -> (i32, i32) {
    %c0_i32 = arith.constant 0 : i32
    %c0_i32_0 = arith.constant 0 : i32
    %c0_i32_1 = arith.constant 0 : i32
    return %c0_i32, %c0_i32_0 : i32, i32
  }
  func.func @transform_12(%arg0: i32) -> (i32, i32) {
    %c0_i32 = arith.constant 0 : i32
    %c0_i32_0 = arith.constant 0 : i32
    %c0_i32_1 = arith.constant 0 : i32
    return %c0_i32, %c0_i32_0 : i32, i32
  }
  func.func @transform_13(%arg0: i32) -> (i32, i32) {
    %c0_i32 = arith.constant 0 : i32
    %c0_i32_0 = arith.constant 0 : i32
    %c0_i32_1 = arith.constant 0 : i32
    return %c0_i32, %c0_i32_0 : i32, i32
  }
  func.func @transform_14(%arg0: i32) -> (i32, i32) {
    %c0_i32 = arith.constant 0 : i32
    %c0_i32_0 = arith.constant 0 : i32
    %c0_i32_1 = arith.constant 0 : i32
    return %c0_i32, %c0_i32_0 : i32, i32
  }
  func.func @transform_15(%arg0: i32) -> (i32, i32) {
    %c0_i32 = arith.constant 0 : i32
    %c0_i32_0 = arith.constant 0 : i32
    %c0_i32_1 = arith.constant 0 : i32
    return %c0_i32, %c0_i32_0 : i32, i32
  }
  func.func @transform_16(%arg0: i32) -> (i32, i32) {
    %c0_i32 = arith.constant 0 : i32
    %c0_i32_0 = arith.constant 0 : i32
    %c0_i32_1 = arith.constant 0 : i32
    return %c0_i32, %c0_i32_0 : i32, i32
  }
  func.func @transform_17(%arg0: i32) -> (i32, i32) {
    %c0_i32 = arith.constant 0 : i32
    %c0_i32_0 = arith.constant 0 : i32
    %c0_i32_1 = arith.constant 0 : i32
    return %c0_i32, %c0_i32_0 : i32, i32
  }
  func.func @transform_18(%arg0: i32) -> (i32, i32) {
    %c0_i32 = arith.constant 0 : i32
    %c0_i32_0 = arith.constant 0 : i32
    %c0_i32_1 = arith.constant 0 : i32
    return %c0_i32, %c0_i32_0 : i32, i32
  }
  func.func @transform_19(%arg0: i32) -> (i32, i32) {
    %c0_i32 = arith.constant 0 : i32
    %c0_i32_0 = arith.constant 0 : i32
    %c0_i32_1 = arith.constant 0 : i32
    return %c0_i32, %c0_i32_0 : i32, i32
  }
  func.func @transform_20(%arg0: i32) -> (i32, i32) {
    %c0_i32 = arith.constant 0 : i32
    %c0_i32_0 = arith.constant 0 : i32
    %c0_i32_1 = arith.constant 0 : i32
    return %c0_i32, %c0_i32_0 : i32, i32
  }
  func.func @transform_21(%arg0: i32) -> (i32, i32) {
    %c0_i32 = arith.constant 0 : i32
    %c0_i32_0 = arith.constant 0 : i32
    %c0_i32_1 = arith.constant 0 : i32
    return %c0_i32, %c0_i32_0 : i32, i32
  }
  func.func @transform_22(%arg0: i32) -> (i32, i32, i32) {
    %c0_i32 = arith.constant 0 : i32
    %c0_i32_0 = arith.constant 0 : i32
    %c0_i32_1 = arith.constant 0 : i32
    return %arg0, %c0_i32, %c0_i32_0 : i32, i32, i32
  }
}

module attributes {stable_mosaic.version = 11 : i64} {
  func.func @_in_ffn1_qkv_kernel(%arg0: i32, %arg1: i32, %arg2: memref<1x24x128xbf16, #tpu.memory_space<vmem>>, %arg3: memref<1x24x128xbf16, #tpu.memory_space<vmem>>, %arg4: memref<1x1x128xf32, #tpu.memory_space<vmem>>, %arg5: memref<128x128xbf16, #tpu.memory_space<vmem>>, %arg6: memref<128x128xbf16, #tpu.memory_space<vmem>>, %arg7: memref<128x128xbf16, #tpu.memory_space<vmem>>, %arg8: memref<1x128xbf16, #tpu.memory_space<vmem>>, %arg9: memref<1x128xbf16, #tpu.memory_space<vmem>>, %arg10: memref<128x256xbf16, #tpu.memory_space<vmem>>, %arg11: memref<1x256xbf16, #tpu.memory_space<vmem>>, %arg12: memref<256x128xbf16, #tpu.memory_space<vmem>>, %arg13: memref<1x128xbf16, #tpu.memory_space<vmem>>, %arg14: memref<1x128xbf16, #tpu.memory_space<vmem>>, %arg15: memref<1x128xbf16, #tpu.memory_space<vmem>>, %arg16: memref<128x384xbf16, #tpu.memory_space<vmem>>, %arg17: memref<1x384xbf16, #tpu.memory_space<vmem>>, %arg18: memref<1x24x128xbf16, #tpu.memory_space<vmem>>, %arg19: memref<1x24x384xbf16, #tpu.memory_space<vmem>>) attributes {dimension_semantics = [#tpu.dimension_semantics<parallel>, #tpu.dimension_semantics<parallel>], iteration_bounds = array<i64: 2, 1>, scalar_prefetch = 0 : i64, scratch_operands = 0 : i64, tpu.core_type = #tpu.core_type<tc>, window_params = [{transform_indices = @transform_0, window_bounds = array<i64: 1, 24, 128>}, {transform_indices = @transform_1, window_bounds = array<i64: 1, 24, 128>}, {transform_indices = @transform_2, window_bounds = array<i64: 1, 1, 128>}, {pipeline_mode = #tpu.pipeline_mode<synchronous>, transform_indices = @transform_3, window_bounds = array<i64: 128, 128>}, {pipeline_mode = #tpu.pipeline_mode<synchronous>, transform_indices = @transform_4, window_bounds = array<i64: 128, 128>}, {pipeline_mode = #tpu.pipeline_mode<synchronous>, transform_indices = @transform_5, window_bounds = array<i64: 128, 128>}, {pipeline_mode = #tpu.pipeline_mode<synchronous>, transform_indices = @transform_6, window_bounds = array<i64: 1, 128>}, {pipeline_mode = #tpu.pipeline_mode<synchronous>, transform_indices = @transform_7, window_bounds = array<i64: 1, 128>}, {pipeline_mode = #tpu.pipeline_mode<synchronous>, transform_indices = @transform_8, window_bounds = array<i64: 128, 256>}, {pipeline_mode = #tpu.pipeline_mode<synchronous>, transform_indices = @transform_9, window_bounds = array<i64: 1, 256>}, {pipeline_mode = #tpu.pipeline_mode<synchronous>, transform_indices = @transform_10, window_bounds = array<i64: 256, 128>}, {pipeline_mode = #tpu.pipeline_mode<synchronous>, transform_indices = @transform_11, window_bounds = array<i64: 1, 128>}, {pipeline_mode = #tpu.pipeline_mode<synchronous>, transform_indices = @transform_12, window_bounds = array<i64: 1, 128>}, {pipeline_mode = #tpu.pipeline_mode<synchronous>, transform_indices = @transform_13, window_bounds = array<i64: 1, 128>}, {pipeline_mode = #tpu.pipeline_mode<synchronous>, transform_indices = @transform_14, window_bounds = array<i64: 128, 384>}, {pipeline_mode = #tpu.pipeline_mode<synchronous>, transform_indices = @transform_15, window_bounds = array<i64: 1, 384>}, {transform_indices = @transform_16, window_bounds = array<i64: 1, 24, 128>}, {transform_indices = @transform_17, window_bounds = array<i64: 1, 24, 384>}]} {
    %c0 = arith.constant 0 : index
    %c0_0 = arith.constant 0 : index
    %c0_1 = arith.constant 0 : index
    %0 = vector.load %arg2[%c0, %c0_0, %c0_1] : memref<1x24x128xbf16, #tpu.memory_space<vmem>>, vector<1x24x128xbf16>
    %1 = vector.shape_cast %0 : vector<1x24x128xbf16> to vector<24x128xbf16>
    %c0_2 = arith.constant 0 : index
    %c0_3 = arith.constant 0 : index
    %c0_4 = arith.constant 0 : index
    %2 = vector.load %arg3[%c0_2, %c0_3, %c0_4] : memref<1x24x128xbf16, #tpu.memory_space<vmem>>, vector<1x24x128xbf16>
    %3 = vector.shape_cast %2 : vector<1x24x128xbf16> to vector<24x128xbf16>
    %c0_5 = arith.constant 0 : index
    %c0_6 = arith.constant 0 : index
    %4 = vector.load %arg5[%c0_5, %c0_6] : memref<128x128xbf16, #tpu.memory_space<vmem>>, vector<128x128xbf16>
    %cst = arith.constant dense<0.000000e+00> : vector<24x128xf32>
    %5 = tpu.matmul %3, %4, %cst {dimension_numbers = #tpu.dot_dimension_numbers<[1], [0], [0], [1], [0, 0, 1, 1], [], []>} : vector<24x128xbf16>, vector<128x128xbf16>, vector<24x128xf32> -> vector<24x128xf32>
    %c0_7 = arith.constant 0 : index
    %c0_8 = arith.constant 0 : index
    %6 = vector.load %arg7[%c0_7, %c0_8] : memref<128x128xbf16, #tpu.memory_space<vmem>>, vector<128x128xbf16>
    %c0_9 = arith.constant 0 : index
    %c0_10 = arith.constant 0 : index
    %7 = vector.load %arg6[%c0_9, %c0_10] : memref<128x128xbf16, #tpu.memory_space<vmem>>, vector<128x128xbf16>
    %cst_11 = arith.constant dense<0.000000e+00> : vector<24x128xf32>
    %8 = tpu.matmul %1, %7, %cst_11 {dimension_numbers = #tpu.dot_dimension_numbers<[1], [0], [0], [1], [0, 0, 1, 1], [], []>} : vector<24x128xbf16>, vector<128x128xbf16>, vector<24x128xf32> -> vector<24x128xf32>
    %9 = arith.truncf %5 : vector<24x128xf32> to vector<24x128xbf16>
    %cst_12 = arith.constant dense<0.000000e+00> : vector<24x128xf32>
    %10 = tpu.matmul %9, %6, %cst_12 {dimension_numbers = #tpu.dot_dimension_numbers<[1], [0], [0], [1], [0, 0, 1, 1], [], []>} : vector<24x128xbf16>, vector<128x128xbf16>, vector<24x128xf32> -> vector<24x128xf32>
    %11 = arith.addf %8, %10 : vector<24x128xf32>
    %c0_13 = arith.constant 0 : index
    %c0_14 = arith.constant 0 : index
    %c0_15 = arith.constant 0 : index
    %12 = vector.load %arg4[%c0_13, %c0_14, %c0_15] : memref<1x1x128xf32, #tpu.memory_space<vmem>>, vector<1x1x128xf32>
    %13 = vector.shape_cast %12 : vector<1x1x128xf32> to vector<1x128xf32>
    %14 = vector.broadcast %13 : vector<1x128xf32> to vector<24x128xf32>
    %15 = arith.addf %11, %14 : vector<24x128xf32>
    %cst_16 = arith.constant dense<0.000000e+00> : vector<24xf32>
    %16 = vector.multi_reduction <add>, %15, %cst_16 [1] : vector<24x128xf32> to vector<24xf32>
    %17 = vector.shape_cast %16 : vector<24xf32> to vector<24x1xf32>
    %cst_17 = arith.constant 1.280000e+02 : f32
    %18 = vector.broadcast %cst_17 : f32 to vector<24x1xf32>
    %19 = arith.divf %17, %18 : vector<24x1xf32>
    %20 = vector.broadcast %19 : vector<24x1xf32> to vector<24x128xf32>
    %21 = arith.subf %15, %20 : vector<24x128xf32>
    %22 = arith.mulf %21, %21 : vector<24x128xf32>
    %cst_18 = arith.constant dense<0.000000e+00> : vector<24xf32>
    %23 = vector.multi_reduction <add>, %22, %cst_18 [1] : vector<24x128xf32> to vector<24xf32>
    %24 = vector.shape_cast %23 : vector<24xf32> to vector<24x1xf32>
    %cst_19 = arith.constant 1.280000e+02 : f32
    %25 = vector.broadcast %cst_19 : f32 to vector<24x1xf32>
    %26 = arith.divf %24, %25 : vector<24x1xf32>
    %cst_20 = arith.constant 9.99999974E-6 : f32
    %27 = vector.broadcast %cst_20 : f32 to vector<24x1xf32>
    %28 = arith.addf %26, %27 : vector<24x1xf32>
    %29 = math.rsqrt %28 : vector<24x1xf32>
    %30 = vector.broadcast %29 : vector<24x1xf32> to vector<24x128xf32>
    %31 = arith.mulf %21, %30 : vector<24x128xf32>
    %c0_21 = arith.constant 0 : index
    %c0_22 = arith.constant 0 : index
    %32 = vector.load %arg8[%c0_21, %c0_22] : memref<1x128xbf16, #tpu.memory_space<vmem>>, vector<1x128xbf16>
    %33 = arith.extf %32 : vector<1x128xbf16> to vector<1x128xf32>
    %34 = vector.broadcast %33 : vector<1x128xf32> to vector<24x128xf32>
    %35 = arith.mulf %31, %34 : vector<24x128xf32>
    %c0_23 = arith.constant 0 : index
    %c0_24 = arith.constant 0 : index
    %36 = vector.load %arg9[%c0_23, %c0_24] : memref<1x128xbf16, #tpu.memory_space<vmem>>, vector<1x128xbf16>
    %37 = arith.extf %36 : vector<1x128xbf16> to vector<1x128xf32>
    %38 = vector.broadcast %37 : vector<1x128xf32> to vector<24x128xf32>
    %39 = arith.addf %35, %38 : vector<24x128xf32>
    %c0_25 = arith.constant 0 : index
    %c0_26 = arith.constant 0 : index
    %40 = vector.load %arg10[%c0_25, %c0_26] : memref<128x256xbf16, #tpu.memory_space<vmem>>, vector<128x256xbf16>
    %41 = arith.truncf %39 : vector<24x128xf32> to vector<24x128xbf16>
    %cst_27 = arith.constant dense<0.000000e+00> : vector<24x256xf32>
    %42 = tpu.matmul %41, %40, %cst_27 {dimension_numbers = #tpu.dot_dimension_numbers<[1], [0], [0], [1], [0, 0, 1, 1], [], []>} : vector<24x128xbf16>, vector<128x256xbf16>, vector<24x256xf32> -> vector<24x256xf32>
    %c0_28 = arith.constant 0 : index
    %c0_29 = arith.constant 0 : index
    %43 = vector.load %arg11[%c0_28, %c0_29] : memref<1x256xbf16, #tpu.memory_space<vmem>>, vector<1x256xbf16>
    %44 = arith.extf %43 : vector<1x256xbf16> to vector<1x256xf32>
    %45 = vector.broadcast %44 : vector<1x256xf32> to vector<24x256xf32>
    %46 = arith.addf %42, %45 : vector<24x256xf32>
    %47 = arith.negf %46 : vector<24x256xf32>
    %48 = math.exp %47 : vector<24x256xf32>
    %cst_30 = arith.constant 1.000000e+00 : f32
    %49 = vector.broadcast %cst_30 : f32 to vector<24x256xf32>
    %50 = arith.addf %49, %48 : vector<24x256xf32>
    %51 = arith.divf %49, %50 : vector<24x256xf32>
    %52 = arith.mulf %46, %51 : vector<24x256xf32>
    %c0_31 = arith.constant 0 : index
    %c0_32 = arith.constant 0 : index
    %53 = vector.load %arg12[%c0_31, %c0_32] : memref<256x128xbf16, #tpu.memory_space<vmem>>, vector<256x128xbf16>
    %54 = arith.truncf %52 : vector<24x256xf32> to vector<24x256xbf16>
    %cst_33 = arith.constant dense<0.000000e+00> : vector<24x128xf32>
    %55 = tpu.matmul %54, %53, %cst_33 {dimension_numbers = #tpu.dot_dimension_numbers<[1], [0], [0], [1], [0, 0, 1, 1], [], []>} : vector<24x256xbf16>, vector<256x128xbf16>, vector<24x128xf32> -> vector<24x128xf32>
    %c0_34 = arith.constant 0 : index
    %c0_35 = arith.constant 0 : index
    %56 = vector.load %arg13[%c0_34, %c0_35] : memref<1x128xbf16, #tpu.memory_space<vmem>>, vector<1x128xbf16>
    %57 = arith.extf %56 : vector<1x128xbf16> to vector<1x128xf32>
    %58 = vector.broadcast %57 : vector<1x128xf32> to vector<24x128xf32>
    %59 = arith.addf %55, %58 : vector<24x128xf32>
    %cst_36 = arith.constant 5.000000e-01 : f32
    %60 = vector.broadcast %cst_36 : f32 to vector<24x128xf32>
    %61 = arith.mulf %60, %59 : vector<24x128xf32>
    %62 = arith.addf %15, %61 : vector<24x128xf32>
    %63 = arith.truncf %62 : vector<24x128xf32> to vector<24x128xbf16>
    %c0_37 = arith.constant 0 : index
    %c0_38 = arith.constant 0 : index
    %c0_39 = arith.constant 0 : index
    %64 = vector.load %arg18[%c0_37, %c0_38, %c0_39] : memref<1x24x128xbf16, #tpu.memory_space<vmem>>, vector<1x24x128xbf16>
    %65 = vector.shape_cast %64 : vector<1x24x128xbf16> to vector<24x128xbf16>
    %66 = vector.shape_cast %63 : vector<24x128xbf16> to vector<1x24x128xbf16>
    tpu.vector_store %arg18[%c0_37, %c0_38, %c0_39], %66 {strides = array<i32>} : memref<1x24x128xbf16, #tpu.memory_space<vmem>>, vector<1x24x128xbf16>,
    %cst_40 = arith.constant dense<0.000000e+00> : vector<24xf32>
    %67 = vector.multi_reduction <add>, %62, %cst_40 [1] : vector<24x128xf32> to vector<24xf32>
    %68 = vector.shape_cast %67 : vector<24xf32> to vector<24x1xf32>
    %cst_41 = arith.constant 1.280000e+02 : f32
    %69 = vector.broadcast %cst_41 : f32 to vector<24x1xf32>
    %70 = arith.divf %68, %69 : vector<24x1xf32>
    %71 = vector.broadcast %70 : vector<24x1xf32> to vector<24x128xf32>
    %72 = arith.subf %62, %71 : vector<24x128xf32>
    %73 = arith.mulf %72, %72 : vector<24x128xf32>
    %cst_42 = arith.constant dense<0.000000e+00> : vector<24xf32>
    %74 = vector.multi_reduction <add>, %73, %cst_42 [1] : vector<24x128xf32> to vector<24xf32>
    %75 = vector.shape_cast %74 : vector<24xf32> to vector<24x1xf32>
    %cst_43 = arith.constant 1.280000e+02 : f32
    %76 = vector.broadcast %cst_43 : f32 to vector<24x1xf32>
    %77 = arith.divf %75, %76 : vector<24x1xf32>
    %cst_44 = arith.constant 9.99999974E-6 : f32
    %78 = vector.broadcast %cst_44 : f32 to vector<24x1xf32>
    %79 = arith.addf %77, %78 : vector<24x1xf32>
    %80 = math.rsqrt %79 : vector<24x1xf32>
    %81 = vector.broadcast %80 : vector<24x1xf32> to vector<24x128xf32>
    %82 = arith.mulf %72, %81 : vector<24x128xf32>
    %c0_45 = arith.constant 0 : index
    %c0_46 = arith.constant 0 : index
    %83 = vector.load %arg14[%c0_45, %c0_46] : memref<1x128xbf16, #tpu.memory_space<vmem>>, vector<1x128xbf16>
    %84 = arith.extf %83 : vector<1x128xbf16> to vector<1x128xf32>
    %85 = vector.broadcast %84 : vector<1x128xf32> to vector<24x128xf32>
    %86 = arith.mulf %82, %85 : vector<24x128xf32>
    %c0_47 = arith.constant 0 : index
    %c0_48 = arith.constant 0 : index
    %87 = vector.load %arg15[%c0_47, %c0_48] : memref<1x128xbf16, #tpu.memory_space<vmem>>, vector<1x128xbf16>
    %88 = arith.extf %87 : vector<1x128xbf16> to vector<1x128xf32>
    %89 = vector.broadcast %88 : vector<1x128xf32> to vector<24x128xf32>
    %90 = arith.addf %86, %89 : vector<24x128xf32>
    %c0_49 = arith.constant 0 : index
    %c0_50 = arith.constant 0 : index
    %91 = vector.load %arg16[%c0_49, %c0_50] : memref<128x384xbf16, #tpu.memory_space<vmem>>, vector<128x384xbf16>
    %92 = arith.truncf %90 : vector<24x128xf32> to vector<24x128xbf16>
    %cst_51 = arith.constant dense<0.000000e+00> : vector<24x384xf32>
    %93 = tpu.matmul %92, %91, %cst_51 {dimension_numbers = #tpu.dot_dimension_numbers<[1], [0], [0], [1], [0, 0, 1, 1], [], []>} : vector<24x128xbf16>, vector<128x384xbf16>, vector<24x384xf32> -> vector<24x384xf32>
    %c0_52 = arith.constant 0 : index
    %c0_53 = arith.constant 0 : index
    %94 = vector.load %arg17[%c0_52, %c0_53] : memref<1x384xbf16, #tpu.memory_space<vmem>>, vector<1x384xbf16>
    %95 = arith.extf %94 : vector<1x384xbf16> to vector<1x384xf32>
    %96 = vector.broadcast %95 : vector<1x384xf32> to vector<24x384xf32>
    %97 = arith.addf %93, %96 : vector<24x384xf32>
    %98 = arith.truncf %97 : vector<24x384xf32> to vector<24x384xbf16>
    %c0_54 = arith.constant 0 : index
    %c0_55 = arith.constant 0 : index
    %c0_56 = arith.constant 0 : index
    %99 = vector.load %arg19[%c0_54, %c0_55, %c0_56] : memref<1x24x384xbf16, #tpu.memory_space<vmem>>, vector<1x24x384xbf16>
    %100 = vector.shape_cast %99 : vector<1x24x384xbf16> to vector<24x384xbf16>
    %101 = vector.shape_cast %98 : vector<24x384xbf16> to vector<1x24x384xbf16>
    tpu.vector_store %arg19[%c0_54, %c0_55, %c0_56], %101 {strides = array<i32>} : memref<1x24x384xbf16, #tpu.memory_space<vmem>>, vector<1x24x384xbf16>,
    return
  }
  func.func @transform_0(%arg0: i32, %arg1: i32) -> (i32, i32, i32) {
    %c0_i32 = arith.constant 0 : i32
    %c0_i32_0 = arith.constant 0 : i32
    return %arg0, %arg1, %c0_i32 : i32, i32, i32
  }
  func.func @transform_1(%arg0: i32, %arg1: i32) -> (i32, i32, i32) {
    %c0_i32 = arith.constant 0 : i32
    %c0_i32_0 = arith.constant 0 : i32
    return %arg0, %arg1, %c0_i32 : i32, i32, i32
  }
  func.func @transform_2(%arg0: i32, %arg1: i32) -> (i32, i32, i32) {
    %c0_i32 = arith.constant 0 : i32
    %c0_i32_0 = arith.constant 0 : i32
    %c0_i32_1 = arith.constant 0 : i32
    return %arg0, %c0_i32, %c0_i32_0 : i32, i32, i32
  }
  func.func @transform_3(%arg0: i32, %arg1: i32) -> (i32, i32) {
    %c0_i32 = arith.constant 0 : i32
    %c0_i32_0 = arith.constant 0 : i32
    %c0_i32_1 = arith.constant 0 : i32
    return %c0_i32, %c0_i32_0 : i32, i32
  }
  func.func @transform_4(%arg0: i32, %arg1: i32) -> (i32, i32) {
    %c0_i32 = arith.constant 0 : i32
    %c0_i32_0 = arith.constant 0 : i32
    %c0_i32_1 = arith.constant 0 : i32
    return %c0_i32, %c0_i32_0 : i32, i32
  }
  func.func @transform_5(%arg0: i32, %arg1: i32) -> (i32, i32) {
    %c0_i32 = arith.constant 0 : i32
    %c0_i32_0 = arith.constant 0 : i32
    %c0_i32_1 = arith.constant 0 : i32
    return %c0_i32, %c0_i32_0 : i32, i32
  }
  func.func @transform_6(%arg0: i32, %arg1: i32) -> (i32, i32) {
    %c0_i32 = arith.constant 0 : i32
    %c0_i32_0 = arith.constant 0 : i32
    %c0_i32_1 = arith.constant 0 : i32
    return %c0_i32, %c0_i32_0 : i32, i32
  }
  func.func @transform_7(%arg0: i32, %arg1: i32) -> (i32, i32) {
    %c0_i32 = arith.constant 0 : i32
    %c0_i32_0 = arith.constant 0 : i32
    %c0_i32_1 = arith.constant 0 : i32
    return %c0_i32, %c0_i32_0 : i32, i32
  }
  func.func @transform_8(%arg0: i32, %arg1: i32) -> (i32, i32) {
    %c0_i32 = arith.constant 0 : i32
    %c0_i32_0 = arith.constant 0 : i32
    %c0_i32_1 = arith.constant 0 : i32
    return %c0_i32, %c0_i32_0 : i32, i32
  }
  func.func @transform_9(%arg0: i32, %arg1: i32) -> (i32, i32) {
    %c0_i32 = arith.constant 0 : i32
    %c0_i32_0 = arith.constant 0 : i32
    %c0_i32_1 = arith.constant 0 : i32
    return %c0_i32, %c0_i32_0 : i32, i32
  }
  func.func @transform_10(%arg0: i32, %arg1: i32) -> (i32, i32) {
    %c0_i32 = arith.constant 0 : i32
    %c0_i32_0 = arith.constant 0 : i32
    %c0_i32_1 = arith.constant 0 : i32
    return %c0_i32, %c0_i32_0 : i32, i32
  }
  func.func @transform_11(%arg0: i32, %arg1: i32) -> (i32, i32) {
    %c0_i32 = arith.constant 0 : i32
    %c0_i32_0 = arith.constant 0 : i32
    %c0_i32_1 = arith.constant 0 : i32
    return %c0_i32, %c0_i32_0 : i32, i32
  }
  func.func @transform_12(%arg0: i32, %arg1: i32) -> (i32, i32) {
    %c0_i32 = arith.constant 0 : i32
    %c0_i32_0 = arith.constant 0 : i32
    %c0_i32_1 = arith.constant 0 : i32
    return %c0_i32, %c0_i32_0 : i32, i32
  }
  func.func @transform_13(%arg0: i32, %arg1: i32) -> (i32, i32) {
    %c0_i32 = arith.constant 0 : i32
    %c0_i32_0 = arith.constant 0 : i32
    %c0_i32_1 = arith.constant 0 : i32
    return %c0_i32, %c0_i32_0 : i32, i32
  }
  func.func @transform_14(%arg0: i32, %arg1: i32) -> (i32, i32) {
    %c0_i32 = arith.constant 0 : i32
    %c0_i32_0 = arith.constant 0 : i32
    %c0_i32_1 = arith.constant 0 : i32
    return %c0_i32, %c0_i32_0 : i32, i32
  }
  func.func @transform_15(%arg0: i32, %arg1: i32) -> (i32, i32) {
    %c0_i32 = arith.constant 0 : i32
    %c0_i32_0 = arith.constant 0 : i32
    %c0_i32_1 = arith.constant 0 : i32
    return %c0_i32, %c0_i32_0 : i32, i32
  }
  func.func @transform_16(%arg0: i32, %arg1: i32) -> (i32, i32, i32) {
    %c0_i32 = arith.constant 0 : i32
    %c0_i32_0 = arith.constant 0 : i32
    return %arg0, %arg1, %c0_i32 : i32, i32, i32
  }
  func.func @transform_17(%arg0: i32, %arg1: i32) -> (i32, i32, i32) {
    %c0_i32 = arith.constant 0 : i32
    %c0_i32_0 = arith.constant 0 : i32
    return %arg0, %arg1, %c0_i32 : i32, i32, i32
  }
}

</mosaic_0001>

<llo_original>
// kernel: conformer_layer_forward.2
$region0: #{conformer_layer_forward.2}
  #allocation0 [shape = 'u32[]', space=smem, size = 0x4, offset = 0x4, fixed_abs, tag = 'smem constant byte address 0x4 - core index']
  #allocation1 [shape = 'u32[72,128]{1,0:T(1,128)}', space=vmem, size = 0x9000, scoped, tag = 'internal scratch']
  %s0 = inlined_call_operand.vmem [shape: bf16[2,24,128], index: 0, kind: input, shape index: {}]
  %s1 = inlined_call_operand.vmem [shape: bf16[2,24,128], index: 1, kind: input, shape index: {}]
  %s2 = inlined_call_operand.vmem [shape: f32[2,1,128], index: 2, kind: input, shape index: {}]
  %s3 = inlined_call_operand.hbm [shape: bf16[128,128], index: 3, kind: input, shape index: {}]
  %s4 = inlined_call_operand.hbm [shape: bf16[128,128], index: 4, kind: input, shape index: {}]
  %s5 = inlined_call_operand.vmem [shape: bf16[128,128], index: 5, kind: input, shape index: {}]
  %s6 = inlined_call_operand.vmem [shape: bf16[1,128], index: 6, kind: input, shape index: {}]
  %s7 = inlined_call_operand.vmem [shape: bf16[1,128], index: 7, kind: input, shape index: {}]
  %s8 = inlined_call_operand.vmem [shape: bf16[128,256], index: 8, kind: input, shape index: {}]
  %s9 = inlined_call_operand.vmem [shape: bf16[1,256], index: 9, kind: input, shape index: {}]
  %s10 = inlined_call_operand.hbm [shape: bf16[256,128], index: 10, kind: input, shape index: {}]
  %s11 = inlined_call_operand.vmem [shape: bf16[1,128], index: 11, kind: input, shape index: {}]
  %s12 = inlined_call_operand.vmem [shape: bf16[1,128], index: 12, kind: input, shape index: {}]
  %s13 = inlined_call_operand.vmem [shape: bf16[1,128], index: 13, kind: input, shape index: {}]
  %s14 = inlined_call_operand.hbm [shape: bf16[128,384], index: 14, kind: input, shape index: {}]
  %s15 = inlined_call_operand.vmem [shape: bf16[1,384], index: 15, kind: input, shape index: {}]
  %s16 = inlined_call_operand.vmem [shape: bf16[2,24,128], index: 16, kind: output, shape index: {0}]
  %s17 = inlined_call_operand.vmem [shape: bf16[2,24,384], index: 17, kind: output, shape index: {1}]
  %18 = xla_tuple %s16, %s17
  %s19 = sld [smem:[#allocation0]]
  $region121: #{conformer_layer_forward.2} parent=0
    _
  %s21 = ssub.s32 1, %s19
  %s22 = scalar_select 0, %s21, %s19
  $region1: #{conformer_layer_forward.2} parent=0
    #allocation2 [shape = 'u8[32768]{0}', space=vmem, size = 0x8000, scoped, tag = 'input window, operand 3, single buffered']
    #allocation3 [shape = 's32[2]{0}', space=sflag, size = 0x8, scoped, tag = 'scoped memory for conformer_layer_forward.2']
    #allocation4 [shape = 'u8[32768]{0}', space=vmem, size = 0x8000, scoped, tag = 'input window, operand 4, single buffered']
    #allocation5 [shape = 's32[1]{0}', space=sflag, size = 0x4, scoped, tag = 'scoped memory for conformer_layer_forward.2']
    #allocation6 [shape = 'u8[65536]{0}', space=vmem, size = 0x10000, scoped, tag = 'input window, operand 10, single buffered']
    #allocation7 [shape = 'u8[98304]{0}', space=vmem, size = 0x18000, scoped, tag = 'input window, operand 14, single buffered']
    #allocation8 [shape = 's32[1]{0}', space=sflag, size = 0x4, scoped, tag = 'scoped memory for conformer_layer_forward.2']
    %23 = vsyncpa [#allocation3], 0
    %24 = vsyncpa [#allocation5], 0
    %25 = vsyncpa [#allocation8], 0
    loop: start=0, step=1, limit=4
    $region2: #{conformer_layer_forward.2} parent=1 // loop_pre_header
      _
    $region3: #{conformer_layer_forward.2} parent=1 // loop_header
      %s27 = sphi 0, %s31
      %p28 = scmp.ge.s32.totalorder %s27, 4
      %s34 = sphi 0, %s46
      %s35 = sphi 0, %s42
      %s36 = sphi 0, %s34
      %s37 = sphi 0, %s35
      %s38 = sphi 0, %s36
      %s39 = sphi 0, %s37
      %s51 = sphi 0, %s53
      %s54 = sphi 0, %s51
      %s55 = sphi 0, %s54
      %s71 = sphi 0, %s55
      %s79 = sphi 0, %s81
      %s82 = sphi 0, %s79
      %s83 = sphi 0, %s82
      %s99 = sphi 0, %s83
      %s105 = sphi 0, %s107
      %s108 = sphi 0, %s105
      %s109 = sphi 0, %s108
      %s125 = sphi 0, %s109
      %s129 = sphi 0, %s129
      %s131 = sphi 0, %s129
      %s132 = sphi 0, %s131
      %s146 = sphi 0, %s132
      %s150 = sphi 0, %s150
      %s152 = sphi 0, %s150
      %s153 = sphi 0, %s152
      %s167 = sphi 0, %s153
      %s171 = sphi 0, %s171
      %s173 = sphi 0, %s171
      %s174 = sphi 0, %s173
      %s188 = sphi 0, %s174
      %s192 = sphi 0, %s192
      %s194 = sphi 0, %s192
      %s195 = sphi 0, %s194
      %s209 = sphi 0, %s195
      %s213 = sphi 0, %s213
      %s215 = sphi 0, %s213
      %s216 = sphi 0, %s215
      %s230 = sphi 0, %s216
      %s234 = sphi 0, %s234
      %s236 = sphi 0, %s234
      %s237 = sphi 0, %s236
      %s251 = sphi 0, %s237
      %s255 = sphi 0, %s255
      %s257 = sphi 0, %s255
      %s258 = sphi 0, %s257
      %s272 = sphi 0, %s258
      %s276 = sphi 0, %s276
      %s278 = sphi 0, %s276
      %s279 = sphi 0, %s278
      %s293 = sphi 0, %s279
      %s297 = sphi 0, %s297
      %s299 = sphi 0, %s297
      %s300 = sphi 0, %s299
      %s314 = sphi 0, %s300
      %s318 = sphi 0, %s318
      %s320 = sphi 0, %s318
      %s321 = sphi 0, %s320
      %s335 = sphi 0, %s321
      %s339 = sphi 0, %s339
      %s341 = sphi 0, %s339
      %s342 = sphi 0, %s341
      %s356 = sphi 0, %s342
      %s360 = sphi 0, %s360
      %s362 = sphi 0, %s360
      %s363 = sphi 0, %s362
      %s377 = sphi 0, %s363
      %s381 = sphi 0, %s381
      %s383 = sphi 0, %s381
      %s384 = sphi 0, %s383
      %s398 = sphi 0, %s384
      %s406 = sphi 0, %s408
      %s409 = sphi 0, %s406
      %s410 = sphi 0, %s409
      %s426 = sphi 0, %s410
      %s434 = sphi 0, %s436
      %s437 = sphi 0, %s434
      %s438 = sphi 0, %s437
      %s454 = sphi 0, %s438
    $region4: #{conformer_layer_forward.2} parent=1 // loop_header_branch
      %30 = sbr.rel (%p28) target = $region8
    $region5: #{conformer_layer_forward.2} parent=1 // loop_body
      %s32 = ssub.s32 %s27, 1
      %s33 = ssub.s32 %s27, 2
      %s40 = sadd.s32 1, %s35
      %p41 = scmp.ge.s32.totalorder %s40, 1
      %s42 = scalar_select %p41, 0, %s40
      %s43 = sadd.s32 1, %s34
      %s44 = scalar_select %p41, %s43, %s34
      %p45 = scmp.ge.s32.totalorder %s44, 2
      %s46 = scalar_select %p45, 0, %s44
      %s47 = ssub.s32 %s34, %s46
      %s48 = ssub.s32 %s35, %s42
      %s49 = sor.u32 %s47, %s48
      %p50 = scmp.eq.s32.totalorder %s49, 0
      %s52 = sadd.s32 %s51, 1
      %s53 = scalar_select %p50, %s51, %s52
      %p56 = pneg %p50
      %p57 = scmp.eq.s32.totalorder %s27, 1
      %p58 = por %p56, %p57
      %p59 = scmp.ne.s32.totalorder %s51, %s54
      %p60 = scmp.eq.s32.totalorder %s27, 0
      %p61 = por %p59, %p60
      %p62 = scmp.ne.s32.totalorder %s51, %s54
      %p63 = scmp.eq.s32.totalorder %s32, 1
      %p64 = por %p62, %p63
      %p65 = scmp.ne.s32.totalorder %s54, %s55
      %p66 = scmp.eq.s32.totalorder %s32, 0
      %p67 = por %p65, %p66
      %p68 = scmp.ne.s32.totalorder %s54, %s55
      %p69 = scmp.eq.s32.totalorder %s33, 1
      %p70 = por %p68, %p69
      %p72 = scmp.ne.s32.totalorder %s55, %s71
      %p73 = scmp.eq.s32.totalorder %s33, 0
      %p74 = por %p72, %p73
      %s75 = ssub.s32 %s34, %s46
      %s76 = ssub.s32 %s35, %s42
      %s77 = sor.u32 %s75, %s76
      %p78 = scmp.eq.s32.totalorder %s77, 0
      %s80 = sadd.s32 %s79, 1
      %s81 = scalar_select %p78, %s79, %s80
      %p84 = pneg %p78
      %p85 = scmp.eq.s32.totalorder %s27, 1
      %p86 = por %p84, %p85
      %p87 = scmp.ne.s32.totalorder %s79, %s82
      %p88 = scmp.eq.s32.totalorder %s27, 0
      %p89 = por %p87, %p88
      %p90 = scmp.ne.s32.totalorder %s79, %s82
      %p91 = scmp.eq.s32.totalorder %s32, 1
      %p92 = por %p90, %p91
      %p93 = scmp.ne.s32.totalorder %s82, %s83
      %p94 = scmp.eq.s32.totalorder %s32, 0
      %p95 = por %p93, %p94
      %p96 = scmp.ne.s32.totalorder %s82, %s83
      %p97 = scmp.eq.s32.totalorder %s33, 1
      %p98 = por %p96, %p97
      %p100 = scmp.ne.s32.totalorder %s83, %s99
      %p101 = scmp.eq.s32.totalorder %s33, 0
      %p102 = por %p100, %p101
      %s103 = ssub.s32 %s34, %s46
      %p104 = scmp.eq.s32.totalorder %s103, 0
      %s106 = sadd.s32 %s105, 1
      %s107 = scalar_select %p104, %s105, %s106
      %p110 = pneg %p104
      %p111 = scmp.eq.s32.totalorder %s27, 1
      %p112 = por %p110, %p111
      %p113 = scmp.ne.s32.totalorder %s105, %s108
      %p114 = scmp.eq.s32.totalorder %s27, 0
      %p115 = por %p113, %p114
      %p116 = scmp.ne.s32.totalorder %s105, %s108
      %p117 = scmp.eq.s32.totalorder %s32, 1
      %p118 = por %p116, %p117
      %p119 = scmp.ne.s32.totalorder %s108, %s109
      %p120 = scmp.eq.s32.totalorder %s32, 0
      %p121 = por %p119, %p120
      %p122 = scmp.ne.s32.totalorder %s108, %s109
      %p123 = scmp.eq.s32.totalorder %s33, 1
      %p124 = por %p122, %p123
      %p126 = scmp.ne.s32.totalorder %s109, %s125
      %p127 = scmp.eq.s32.totalorder %s33, 0
      %p128 = por %p126, %p127
      %s130 = sadd.s32 %s129, 1
      %p133 = scmp.eq.s32.totalorder %s27, 1
      %p134 = scmp.ne.s32.totalorder %s129, %s131
      %p135 = scmp.eq.s32.totalorder %s27, 0
      %p136 = por %p134, %p135
      %p137 = scmp.ne.s32.totalorder %s129, %s131
      %p138 = scmp.eq.s32.totalorder %s32, 1
      %p139 = por %p137, %p138
      %p140 = scmp.ne.s32.totalorder %s131, %s132
      %p141 = scmp.eq.s32.totalorder %s32, 0
      %p142 = por %p140, %p141
      %p143 = scmp.ne.s32.totalorder %s131, %s132
      %p144 = scmp.eq.s32.totalorder %s33, 1
      %p145 = por %p143, %p144
      %p147 = scmp.ne.s32.totalorder %s132, %s146
      %p148 = scmp.eq.s32.totalorder %s33, 0
      %p149 = por %p147, %p148
      %s151 = sadd.s32 %s150, 1
      %p154 = scmp.eq.s32.totalorder %s27, 1
      %p155 = scmp.ne.s32.totalorder %s150, %s152
      %p156 = scmp.eq.s32.totalorder %s27, 0
      %p157 = por %p155, %p156
      %p158 = scmp.ne.s32.totalorder %s150, %s152
      %p159 = scmp.eq.s32.totalorder %s32, 1
      %p160 = por %p158, %p159
      %p161 = scmp.ne.s32.totalorder %s152, %s153
      %p162 = scmp.eq.s32.totalorder %s32, 0
      %p163 = por %p161, %p162
      %p164 = scmp.ne.s32.totalorder %s152, %s153
      %p165 = scmp.eq.s32.totalorder %s33, 1
      %p166 = por %p164, %p165
      %p168 = scmp.ne.s32.totalorder %s153, %s167
      %p169 = scmp.eq.s32.totalorder %s33, 0
      %p170 = por %p168, %p169
      %s172 = sadd.s32 %s171, 1
      %p175 = scmp.eq.s32.totalorder %s27, 1
      %p176 = scmp.ne.s32.totalorder %s171, %s173
      %p177 = scmp.eq.s32.totalorder %s27, 0
      %p178 = por %p176, %p177
      %p179 = scmp.ne.s32.totalorder %s171, %s173
      %p180 = scmp.eq.s32.totalorder %s32, 1
      %p181 = por %p179, %p180
      %p182 = scmp.ne.s32.totalorder %s173, %s174
      %p183 = scmp.eq.s32.totalorder %s32, 0
      %p184 = por %p182, %p183
      %p185 = scmp.ne.s32.totalorder %s173, %s174
      %p186 = scmp.eq.s32.totalorder %s33, 1
      %p187 = por %p185, %p186
      %p189 = scmp.ne.s32.totalorder %s174, %s188
      %p190 = scmp.eq.s32.totalorder %s33, 0
      %p191 = por %p189, %p190
      %s193 = sadd.s32 %s192, 1
      %p196 = scmp.eq.s32.totalorder %s27, 1
      %p197 = scmp.ne.s32.totalorder %s192, %s194
      %p198 = scmp.eq.s32.totalorder %s27, 0
      %p199 = por %p197, %p198
      %p200 = scmp.ne.s32.totalorder %s192, %s194
      %p201 = scmp.eq.s32.totalorder %s32, 1
      %p202 = por %p200, %p201
      %p203 = scmp.ne.s32.totalorder %s194, %s195
      %p204 = scmp.eq.s32.totalorder %s32, 0
      %p205 = por %p203, %p204
      %p206 = scmp.ne.s32.totalorder %s194, %s195
      %p207 = scmp.eq.s32.totalorder %s33, 1
      %p208 = por %p206, %p207
      %p210 = scmp.ne.s32.totalorder %s195, %s209
      %p211 = scmp.eq.s32.totalorder %s33, 0
      %p212 = por %p210, %p211
      %s214 = sadd.s32 %s213, 1
      %p217 = scmp.eq.s32.totalorder %s27, 1
      %p218 = scmp.ne.s32.totalorder %s213, %s215
      %p219 = scmp.eq.s32.totalorder %s27, 0
      %p220 = por %p218, %p219
      %p221 = scmp.ne.s32.totalorder %s213, %s215
      %p222 = scmp.eq.s32.totalorder %s32, 1
      %p223 = por %p221, %p222
      %p224 = scmp.ne.s32.totalorder %s215, %s216
      %p225 = scmp.eq.s32.totalorder %s32, 0
      %p226 = por %p224, %p225
      %p227 = scmp.ne.s32.totalorder %s215, %s216
      %p228 = scmp.eq.s32.totalorder %s33, 1
      %p229 = por %p227, %p228
      %p231 = scmp.ne.s32.totalorder %s216, %s230
      %p232 = scmp.eq.s32.totalorder %s33, 0
      %p233 = por %p231, %p232
      %s235 = sadd.s32 %s234, 1
      %p238 = scmp.eq.s32.totalorder %s27, 1
      %p239 = scmp.ne.s32.totalorder %s234, %s236
      %p240 = scmp.eq.s32.totalorder %s27, 0
      %p241 = por %p239, %p240
      %p242 = scmp.ne.s32.totalorder %s234, %s236
      %p243 = scmp.eq.s32.totalorder %s32, 1
      %p244 = por %p242, %p243
      %p245 = scmp.ne.s32.totalorder %s236, %s237
      %p246 = scmp.eq.s32.totalorder %s32, 0
      %p247 = por %p245, %p246
      %p248 = scmp.ne.s32.totalorder %s236, %s237
      %p249 = scmp.eq.s32.totalorder %s33, 1
      %p250 = por %p248, %p249
      %p252 = scmp.ne.s32.totalorder %s237, %s251
      %p253 = scmp.eq.s32.totalorder %s33, 0
      %p254 = por %p252, %p253
      %s256 = sadd.s32 %s255, 1
      %p259 = scmp.eq.s32.totalorder %s27, 1
      %p260 = scmp.ne.s32.totalorder %s255, %s257
      %p261 = scmp.eq.s32.totalorder %s27, 0
      %p262 = por %p260, %p261
      %p263 = scmp.ne.s32.totalorder %s255, %s257
      %p264 = scmp.eq.s32.totalorder %s32, 1
      %p265 = por %p263, %p264
      %p266 = scmp.ne.s32.totalorder %s257, %s258
      %p267 = scmp.eq.s32.totalorder %s32, 0
      %p268 = por %p266, %p267
      %p269 = scmp.ne.s32.totalorder %s257, %s258
      %p270 = scmp.eq.s32.totalorder %s33, 1
      %p271 = por %p269, %p270
      %p273 = scmp.ne.s32.totalorder %s258, %s272
      %p274 = scmp.eq.s32.totalorder %s33, 0
      %p275 = por %p273, %p274
      %s277 = sadd.s32 %s276, 1
      %p280 = scmp.eq.s32.totalorder %s27, 1
      %p281 = scmp.ne.s32.totalorder %s276, %s278
      %p282 = scmp.eq.s32.totalorder %s27, 0
      %p283 = por %p281, %p282
      %p284 = scmp.ne.s32.totalorder %s276, %s278
      %p285 = scmp.eq.s32.totalorder %s32, 1
      %p286 = por %p284, %p285
      %p287 = scmp.ne.s32.totalorder %s278, %s279
      %p288 = scmp.eq.s32.totalorder %s32, 0
      %p289 = por %p287, %p288
      %p290 = scmp.ne.s32.totalorder %s278, %s279
      %p291 = scmp.eq.s32.totalorder %s33, 1
      %p292 = por %p290, %p291
      %p294 = scmp.ne.s32.totalorder %s279, %s293
      %p295 = scmp.eq.s32.totalorder %s33, 0
      %p296 = por %p294, %p295
      %s298 = sadd.s32 %s297, 1
      %p301 = scmp.eq.s32.totalorder %s27, 1
      %p302 = scmp.ne.s32.totalorder %s297, %s299
      %p303 = scmp.eq.s32.totalorder %s27, 0
      %p304 = por %p302, %p303
      %p305 = scmp.ne.s32.totalorder %s297, %s299
      %p306 = scmp.eq.s32.totalorder %s32, 1
      %p307 = por %p305, %p306
      %p308 = scmp.ne.s32.totalorder %s299, %s300
      %p309 = scmp.eq.s32.totalorder %s32, 0
      %p310 = por %p308, %p309
      %p311 = scmp.ne.s32.totalorder %s299, %s300
      %p312 = scmp.eq.s32.totalorder %s33, 1
      %p313 = por %p311, %p312
      %p315 = scmp.ne.s32.totalorder %s300, %s314
      %p316 = scmp.eq.s32.totalorder %s33, 0
      %p317 = por %p315, %p316
      %s319 = sadd.s32 %s318, 1
      %p322 = scmp.eq.s32.totalorder %s27, 1
      %p323 = scmp.ne.s32.totalorder %s318, %s320
      %p324 = scmp.eq.s32.totalorder %s27, 0
      %p325 = por %p323, %p324
      %p326 = scmp.ne.s32.totalorder %s318, %s320
      %p327 = scmp.eq.s32.totalorder %s32, 1
      %p328 = por %p326, %p327
      %p329 = scmp.ne.s32.totalorder %s320, %s321
      %p330 = scmp.eq.s32.totalorder %s32, 0
      %p331 = por %p329, %p330
      %p332 = scmp.ne.s32.totalorder %s320, %s321
      %p333 = scmp.eq.s32.totalorder %s33, 1
      %p334 = por %p332, %p333
      %p336 = scmp.ne.s32.totalorder %s321, %s335
      %p337 = scmp.eq.s32.totalorder %s33, 0
      %p338 = por %p336, %p337
      %s340 = sadd.s32 %s339, 1
      %p343 = scmp.eq.s32.totalorder %s27, 1
      %p344 = scmp.ne.s32.totalorder %s339, %s341
      %p345 = scmp.eq.s32.totalorder %s27, 0
      %p346 = por %p344, %p345
      %p347 = scmp.ne.s32.totalorder %s339, %s341
      %p348 = scmp.eq.s32.totalorder %s32, 1
      %p349 = por %p347, %p348
      %p350 = scmp.ne.s32.totalorder %s341, %s342
      %p351 = scmp.eq.s32.totalorder %s32, 0
      %p352 = por %p350, %p351
      %p353 = scmp.ne.s32.totalorder %s341, %s342
      %p354 = scmp.eq.s32.totalorder %s33, 1
      %p355 = por %p353, %p354
      %p357 = scmp.ne.s32.totalorder %s342, %s356
      %p358 = scmp.eq.s32.totalorder %s33, 0
      %p359 = por %p357, %p358
      %s361 = sadd.s32 %s360, 1
      %p364 = scmp.eq.s32.totalorder %s27, 1
      %p365 = scmp.ne.s32.totalorder %s360, %s362
      %p366 = scmp.eq.s32.totalorder %s27, 0
      %p367 = por %p365, %p366
      %p368 = scmp.ne.s32.totalorder %s360, %s362
      %p369 = scmp.eq.s32.totalorder %s32, 1
      %p370 = por %p368, %p369
      %p371 = scmp.ne.s32.totalorder %s362, %s363
      %p372 = scmp.eq.s32.totalorder %s32, 0
      %p373 = por %p371, %p372
      %p374 = scmp.ne.s32.totalorder %s362, %s363
      %p375 = scmp.eq.s32.totalorder %s33, 1
      %p376 = por %p374, %p375
      %p378 = scmp.ne.s32.totalorder %s363, %s377
      %p379 = scmp.eq.s32.totalorder %s33, 0
      %p380 = por %p378, %p379
      %s382 = sadd.s32 %s381, 1
      %p385 = scmp.eq.s32.totalorder %s27, 1
      %p386 = scmp.ne.s32.totalorder %s381, %s383
      %p387 = scmp.eq.s32.totalorder %s27, 0
      %p388 = por %p386, %p387
      %p389 = scmp.ne.s32.totalorder %s381, %s383
      %p390 = scmp.eq.s32.totalorder %s32, 1
      %p391 = por %p389, %p390
      %p392 = scmp.ne.s32.totalorder %s383, %s384
      %p393 = scmp.eq.s32.totalorder %s32, 0
      %p394 = por %p392, %p393
      %p395 = scmp.ne.s32.totalorder %s383, %s384
      %p396 = scmp.eq.s32.totalorder %s33, 1
      %p397 = por %p395, %p396
      %p399 = scmp.ne.s32.totalorder %s384, %s398
      %p400 = scmp.eq.s32.totalorder %s33, 0
      %p401 = por %p399, %p400
      %s402 = ssub.s32 %s34, %s46
      %s403 = ssub.s32 %s35, %s42
      %s404 = sor.u32 %s402, %s403
      %p405 = scmp.eq.s32.totalorder %s404, 0
      %s407 = sadd.s32 %s406, 1
      %s408 = scalar_select %p405, %s406, %s407
      %p411 = pneg %p405
      %p412 = scmp.eq.s32.totalorder %s27, 1
      %p413 = por %p411, %p412
      %p414 = scmp.ne.s32.totalorder %s406, %s409
      %p415 = scmp.eq.s32.totalorder %s27, 0
      %p416 = por %p414, %p415
      %p417 = scmp.ne.s32.totalorder %s406, %s409
      %p418 = scmp.eq.s32.totalorder %s32, 1
      %p419 = por %p417, %p418
      %p420 = scmp.ne.s32.totalorder %s409, %s410
      %p421 = scmp.eq.s32.totalorder %s32, 0
      %p422 = por %p420, %p421
      %p423 = scmp.ne.s32.totalorder %s409, %s410
      %p424 = scmp.eq.s32.totalorder %s33, 1
      %p425 = por %p423, %p424
      %p427 = scmp.ne.s32.totalorder %s410, %s426
      %p428 = scmp.eq.s32.totalorder %s33, 0
      %p429 = por %p427, %p428
      %s430 = ssub.s32 %s34, %s46
      %s431 = ssub.s32 %s35, %s42
      %s432 = sor.u32 %s430, %s431
      %p433 = scmp.eq.s32.totalorder %s432, 0
      %s435 = sadd.s32 %s434, 1
      %s436 = scalar_select %p433, %s434, %s435
      %p439 = pneg %p433
      %p440 = scmp.eq.s32.totalorder %s27, 1
      %p441 = por %p439, %p440
      %p442 = scmp.ne.s32.totalorder %s434, %s437
      %p443 = scmp.eq.s32.totalorder %s27, 0
      %p444 = por %p442, %p443
      %p445 = scmp.ne.s32.totalorder %s434, %s437
      %p446 = scmp.eq.s32.totalorder %s32, 1
      %p447 = por %p445, %p446
      %p448 = scmp.ne.s32.totalorder %s437, %s438
      %p449 = scmp.eq.s32.totalorder %s32, 0
      %p450 = por %p448, %p449
      %p451 = scmp.ne.s32.totalorder %s437, %s438
      %p452 = scmp.eq.s32.totalorder %s33, 1
      %p453 = por %p451, %p452
      %p455 = scmp.ne.s32.totalorder %s438, %s454
      %p456 = scmp.eq.s32.totalorder %s33, 0
      %p457 = por %p455, %p456
      %p458 = scmp.le.s32.totalorder 1, %s27
      %p459 = scmp.lt.s32.totalorder %s27, 3
      %p460 = pnand %p458, %p459
      %p461 = pneg %p460
      // Predicated region
      $region9: #{conformer_layer_forward.2} parent=5 // pred_check
        _
      $region10: #{conformer_layer_forward.2} parent=5 // pred_check_branch
        %463 = sbr.rel (%p460) target = $region12
      $region11: #{conformer_layer_forward.2} parent=5 // pred_region
        %s464 = ssub.s32 %s27, 1
        // Predicated region
        $region13: #{conformer_layer_forward.2} parent=11 // pred_check
          %p465 = pneg %p142
        $region14: #{conformer_layer_forward.2} parent=11 // pred_check_branch
          %467 = sbr.rel (%p465) target = $region16
        $region15: #{conformer_layer_forward.2} parent=11 // pred_region
          %469 = vsyncadd [#allocation3], 0
          %s470 = sshll.u32 %s3, 4
          %s471 = int_to_ptr.hbm [resolvable:$true] %s470
          %s472 = sshll.u32 [#allocation2], 4
          %s473 = int_to_ptr.vmem [resolvable:$true] %s472
          %478 = dma.hbm_to_vmem [thread:$0]  %s471, 1024, %s473, [#allocation3], 64, 64, 4
        $region16: #{conformer_layer_forward.2} parent=11 // pred_fallthru
          _
        // Predicated region
        $region17: #{conformer_layer_forward.2} parent=11 // pred_check
          %p479 = pneg %p163
        $region18: #{conformer_layer_forward.2} parent=11 // pred_check_branch
          %481 = sbr.rel (%p479) target = $region20
        $region19: #{conformer_layer_forward.2} parent=11 // pred_region
          %483 = vsyncadd [#allocation5], 0
          %s484 = sshll.u32 %s4, 4
          %s485 = int_to_ptr.hbm [resolvable:$true] %s484
          %s486 = sshll.u32 [#allocation4], 4
          %s487 = int_to_ptr.vmem [resolvable:$true] %s486
          %492 = dma.hbm_to_vmem [thread:$0]  %s485, 1024, %s487, [#allocation5], 64, 64, 4
        $region20: #{conformer_layer_forward.2} parent=11 // pred_fallthru
          _
        // Predicated region
        $region21: #{conformer_layer_forward.2} parent=11 // pred_check
          %p493 = pneg %p184
        $region22: #{conformer_layer_forward.2} parent=11 // pred_check_branch
          %495 = sbr.rel (%p493) target = $region24
        $region23: #{conformer_layer_forward.2} parent=11 // pred_region
          _
        $region24: #{conformer_layer_forward.2} parent=11 // pred_fallthru
          _
        // Predicated region
        $region25: #{conformer_layer_forward.2} parent=11 // pred_check
          %p496 = pneg %p205
        $region26: #{conformer_layer_forward.2} parent=11 // pred_check_branch
          %498 = sbr.rel (%p496) target = $region28
        $region27: #{conformer_layer_forward.2} parent=11 // pred_region
          _
        $region28: #{conformer_layer_forward.2} parent=11 // pred_fallthru
          _
        // Predicated region
        $region29: #{conformer_layer_forward.2} parent=11 // pred_check
          %p499 = pneg %p226
        $region30: #{conformer_layer_forward.2} parent=11 // pred_check_branch
          %501 = sbr.rel (%p499) target = $region32
        $region31: #{conformer_layer_forward.2} parent=11 // pred_region
          _
        $region32: #{conformer_layer_forward.2} parent=11 // pred_fallthru
          _
        // Predicated region
        $region33: #{conformer_layer_forward.2} parent=11 // pred_check
          %p502 = pneg %p247
        $region34: #{conformer_layer_forward.2} parent=11 // pred_check_branch
          %504 = sbr.rel (%p502) target = $region36
        $region35: #{conformer_layer_forward.2} parent=11 // pred_region
          _
        $region36: #{conformer_layer_forward.2} parent=11 // pred_fallthru
          _
        // Predicated region
        $region37: #{conformer_layer_forward.2} parent=11 // pred_check
          %p505 = pneg %p268
        $region38: #{conformer_layer_forward.2} parent=11 // pred_check_branch
          %507 = sbr.rel (%p505) target = $region40
        $region39: #{conformer_layer_forward.2} parent=11 // pred_region
          _
        $region40: #{conformer_layer_forward.2} parent=11 // pred_fallthru
          _
        // Predicated region
        $region41: #{conformer_layer_forward.2} parent=11 // pred_check
          %p508 = pneg %p289
        $region42: #{conformer_layer_forward.2} parent=11 // pred_check_branch
          %510 = sbr.rel (%p508) target = $region44
        $region43: #{conformer_layer_forward.2} parent=11 // pred_region
          %512 = vsyncadd [#allocation5], 0
          %s513 = sshll.u32 %s10, 4
          %s514 = int_to_ptr.hbm [resolvable:$true] %s513
          %s515 = sshll.u32 [#allocation6], 4
          %s516 = int_to_ptr.vmem [resolvable:$true] %s515
          %521 = dma.hbm_to_vmem [thread:$0]  %s514, 2048, %s516, [#allocation5], 64, 64, 4
        $region44: #{conformer_layer_forward.2} parent=11 // pred_fallthru
          _
        // Predicated region
        $region45: #{conformer_layer_forward.2} parent=11 // pred_check
          %p522 = pneg %p310
        $region46: #{conformer_layer_forward.2} parent=11 // pred_check_branch
          %524 = sbr.rel (%p522) target = $region48
        $region47: #{conformer_layer_forward.2} parent=11 // pred_region
          _
        $region48: #{conformer_layer_forward.2} parent=11 // pred_fallthru
          _
        // Predicated region
        $region49: #{conformer_layer_forward.2} parent=11 // pred_check
          %p525 = pneg %p331
        $region50: #{conformer_layer_forward.2} parent=11 // pred_check_branch
          %527 = sbr.rel (%p525) target = $region52
        $region51: #{conformer_layer_forward.2} parent=11 // pred_region
          _
        $region52: #{conformer_layer_forward.2} parent=11 // pred_fallthru
          _
        // Predicated region
        $region53: #{conformer_layer_forward.2} parent=11 // pred_check
          %p528 = pneg %p352
        $region54: #{conformer_layer_forward.2} parent=11 // pred_check_branch
          %530 = sbr.rel (%p528) target = $region56
        $region55: #{conformer_layer_forward.2} parent=11 // pred_region
          _
        $region56: #{conformer_layer_forward.2} parent=11 // pred_fallthru
          _
        // Predicated region
        $region57: #{conformer_layer_forward.2} parent=11 // pred_check
          %p531 = pneg %p373
        $region58: #{conformer_layer_forward.2} parent=11 // pred_check_branch
          %533 = sbr.rel (%p531) target = $region60
        $region59: #{conformer_layer_forward.2} parent=11 // pred_region
          %535 = vsyncadd [#allocation8], 0
          %s536 = sshll.u32 %s14, 4
          %s537 = int_to_ptr.hbm [resolvable:$true] %s536
          %s538 = sshll.u32 [#allocation7], 4
          %s539 = int_to_ptr.vmem [resolvable:$true] %s538
          %544 = dma.hbm_to_vmem [thread:$0]  %s537, 3072, %s539, [#allocation8], 192, 192, 12
        $region60: #{conformer_layer_forward.2} parent=11 // pred_fallthru
          _
        // Predicated region
        $region61: #{conformer_layer_forward.2} parent=11 // pred_check
          %p545 = pneg %p394
        $region62: #{conformer_layer_forward.2} parent=11 // pred_check_branch
          %547 = sbr.rel (%p545) target = $region64
        $region63: #{conformer_layer_forward.2} parent=11 // pred_region
          _
        $region64: #{conformer_layer_forward.2} parent=11 // pred_fallthru
          _
      $region12: #{conformer_layer_forward.2} parent=5 // pred_fallthru
        _
      %p548 = scmp.lt.s32.totalorder %s27, 2
      // Predicated region
      $region65: #{conformer_layer_forward.2} parent=5 // pred_check
        %p549 = pneg %p548
      $region66: #{conformer_layer_forward.2} parent=5 // pred_check_branch
        %551 = sbr.rel (%p549) target = $region68
      $region67: #{conformer_layer_forward.2} parent=5 // pred_region
        // Predicated region
        $region69: #{conformer_layer_forward.2} parent=67 // pred_check
          %p552 = pneg %p61
        $region70: #{conformer_layer_forward.2} parent=67 // pred_check_branch
          %554 = sbr.rel (%p552) target = $region72
        $region71: #{conformer_layer_forward.2} parent=67 // pred_region
          %s555 = smul.u32 3, %s35
          %p556 = scmp.lt.s32.totalorder %s34, 1
          %s557 = scalar_select %p556, %s34, 1
          %p558 = scmp.lt.s32.totalorder %s555, 2
          %s559 = scalar_select %p558, %s555, 2
          %s560 = smul.addr %s557, 3
          %s561 = sadd.s32 %s559, %s560
          %s562 = smul.addr %s561, 4
          %s563 = scalar_lea.vmem %s0, %s562
          %s564 = smul.u32 3, %s35
        $region72: #{conformer_layer_forward.2} parent=67 // pred_fallthru
          _
        // Predicated region
        $region73: #{conformer_layer_forward.2} parent=67 // pred_check
          %p565 = pneg %p89
        $region74: #{conformer_layer_forward.2} parent=67 // pred_check_branch
          %567 = sbr.rel (%p565) target = $region76
        $region75: #{conformer_layer_forward.2} parent=67 // pred_region
          %s568 = smul.u32 3, %s35
          %p569 = scmp.lt.s32.totalorder %s34, 1
          %s570 = scalar_select %p569, %s34, 1
          %p571 = scmp.lt.s32.totalorder %s568, 2
          %s572 = scalar_select %p571, %s568, 2
          %s573 = smul.addr %s570, 3
          %s574 = sadd.s32 %s572, %s573
          %s575 = smul.addr %s574, 4
          %s576 = scalar_lea.vmem %s1, %s575
          %s577 = smul.u32 3, %s35
        $region76: #{conformer_layer_forward.2} parent=67 // pred_fallthru
          _
        // Predicated region
        $region77: #{conformer_layer_forward.2} parent=67 // pred_check
          %p578 = pneg %p115
        $region78: #{conformer_layer_forward.2} parent=67 // pred_check_branch
          %580 = sbr.rel (%p578) target = $region80
        $region79: #{conformer_layer_forward.2} parent=67 // pred_region
          %p581 = scmp.lt.s32.totalorder %s34, 1
          %s582 = scalar_select %p581, %s34, 1
          %s583 = scalar_lea.vmem %s2, %s582
        $region80: #{conformer_layer_forward.2} parent=67 // pred_fallthru
          _
      $region68: #{conformer_layer_forward.2} parent=5 // pred_fallthru
        _
      %p584 = scmp.le.s32.totalorder 1, %s27
      %p585 = scmp.lt.s32.totalorder %s27, 3
      %p586 = pnand %p584, %p585
      %p587 = pneg %p586
      // Predicated region
      $region81: #{conformer_layer_forward.2} parent=5 // pred_check
        _
      $region82: #{conformer_layer_forward.2} parent=5 // pred_check_branch
        %589 = sbr.rel (%p586) target = $region84
      $region83: #{conformer_layer_forward.2} parent=5 // pred_region
        %s590 = ssub.s32 %s27, 1
        // Predicated region
        $region85: #{conformer_layer_forward.2} parent=83 // pred_check
          %p591 = pneg %p142
        $region86: #{conformer_layer_forward.2} parent=83 // pred_check_branch
          %593 = sbr.rel (%p591) target = $region88
        $region87: #{conformer_layer_forward.2} parent=83 // pred_region
          %595 = dma.done [#allocation3], 1024
        $region88: #{conformer_layer_forward.2} parent=83 // pred_fallthru
          _
        // Predicated region
        $region89: #{conformer_layer_forward.2} parent=83 // pred_check
          %p596 = pneg %p163
        $region90: #{conformer_layer_forward.2} parent=83 // pred_check_branch
          %598 = sbr.rel (%p596) target = $region92
        $region91: #{conformer_layer_forward.2} parent=83 // pred_region
          %600 = dma.done [#allocation5], 1024
        $region92: #{conformer_layer_forward.2} parent=83 // pred_fallthru
          _
        // Predicated region
        $region93: #{conformer_layer_forward.2} parent=83 // pred_check
          %p601 = pneg %p289
        $region94: #{conformer_layer_forward.2} parent=83 // pred_check_branch
          %603 = sbr.rel (%p601) target = $region96
        $region95: #{conformer_layer_forward.2} parent=83 // pred_region
          %605 = dma.done [#allocation5], 2048
        $region96: #{conformer_layer_forward.2} parent=83 // pred_fallthru
          _
        // Predicated region
        $region97: #{conformer_layer_forward.2} parent=83 // pred_check
          %p606 = pneg %p373
        $region98: #{conformer_layer_forward.2} parent=83 // pred_check_branch
          %608 = sbr.rel (%p606) target = $region100
        $region99: #{conformer_layer_forward.2} parent=83 // pred_region
          %610 = dma.done [#allocation8], 3072
        $region100: #{conformer_layer_forward.2} parent=83 // pred_fallthru
          _
        %s611 = smul.u32 3, %s37
        %p612 = scmp.lt.s32.totalorder %s36, 1
        %s613 = scalar_select %p612, %s36, 1
        %p614 = scmp.lt.s32.totalorder %s611, 2
        %s615 = scalar_select %p614, %s611, 2
        %s616 = smul.addr %s613, 3
        %s617 = sadd.s32 %s615, %s616
        %s618 = smul.addr %s617, 4
        %s619 = scalar_lea.vmem %s0, %s618
        %p620 = pneg %p67
        %p621 = pneg %p64
        %s622 = smul.u32 3, %s37
        %p623 = scmp.lt.s32.totalorder %s36, 1
        %s624 = scalar_select %p623, %s36, 1
        %p625 = scmp.lt.s32.totalorder %s622, 2
        %s626 = scalar_select %p625, %s622, 2
        %s627 = smul.addr %s624, 3
        %s628 = sadd.s32 %s626, %s627
        %s629 = smul.addr %s628, 4
        %s630 = scalar_lea.vmem %s1, %s629
        %p631 = pneg %p95
        %p632 = pneg %p92
        %p633 = scmp.lt.s32.totalorder %s36, 1
        %s634 = scalar_select %p633, %s36, 1
        %s635 = scalar_lea.vmem %s2, %s634
        %p636 = pneg %p121
        %p637 = pneg %p118
        %p638 = pneg %p142
        %p639 = pneg %p139
        %p640 = pneg %p163
        %p641 = pneg %p160
        %p642 = pneg %p184
        %p643 = pneg %p181
        %p644 = pneg %p205
        %p645 = pneg %p202
        %p646 = pneg %p226
        %p647 = pneg %p223
        %p648 = pneg %p247
        %p649 = pneg %p244
        %p650 = pneg %p268
        %p651 = pneg %p265
        %p652 = pneg %p289
        %p653 = pneg %p286
        %p654 = pneg %p310
        %p655 = pneg %p307
        %p656 = pneg %p331
        %p657 = pneg %p328
        %p658 = pneg %p352
        %p659 = pneg %p349
        %p660 = pneg %p373
        %p661 = pneg %p370
        %p662 = pneg %p394
        %p663 = pneg %p391
        %p664 = pneg %p422
        %p665 = pneg %p419
        %s666 = smul.u32 3, %s37
        %p667 = scmp.lt.s32.totalorder %s36, 1
        %s668 = scalar_select %p667, %s36, 1
        %p669 = scmp.lt.s32.totalorder %s666, 2
        %s670 = scalar_select %p669, %s666, 2
        %s671 = smul.addr %s668, 3
        %s672 = sadd.s32 %s670, %s671
        %s673 = smul.addr %s672, 4
        %s674 = scalar_lea.vmem %s16, %s673
        %p675 = pneg %p450
        %p676 = pneg %p447
        %s677 = smul.u32 3, %s37
        %p678 = scmp.lt.s32.totalorder %s36, 1
        %s679 = scalar_select %p678, %s36, 1
        %p680 = scmp.lt.s32.totalorder %s677, 2
        %s681 = scalar_select %p680, %s677, 2
        %s682 = smul.addr %s681, 3
        %s683 = smul.addr %s679, 9
        %s684 = sadd.s32 %s682, %s683
        %s685 = smul.addr %s684, 4
        %s686 = scalar_lea.vmem %s17, %s685
        %s687 = smul.u32 3, %s37
        %p688 = scmp.lt.s32.totalorder %s36, 1
        %s689 = scalar_select %p688, %s36, 1
        %p690 = scmp.lt.s32.totalorder %s687, 2
        %s691 = scalar_select %p690, %s687, 2
        %s692 = smul.addr %s689, 3
        %s693 = sadd.s32 %s691, %s692
        %s694 = smul.addr %s693, 4
        %s695 = scalar_lea.vmem %s0, %s694
        %s696 = smul.u32 3, %s37
        %s697 = smul.u32 3, %s37
        %p698 = scmp.lt.s32.totalorder %s36, 1
        %s699 = scalar_select %p698, %s36, 1
        %p700 = scmp.lt.s32.totalorder %s697, 2
        %s701 = scalar_select %p700, %s697, 2
        %s702 = smul.addr %s699, 3
        %s703 = sadd.s32 %s701, %s702
        %s704 = smul.addr %s703, 4
        %s705 = scalar_lea.vmem %s1, %s704
        %s706 = smul.u32 3, %s37
        %p707 = scmp.lt.s32.totalorder %s36, 1
        %s708 = scalar_select %p707, %s36, 1
        %s709 = scalar_lea.vmem %s2, %s708
        %s710 = smul.u32 3, %s37
        %p711 = scmp.lt.s32.totalorder %s36, 1
        %s712 = scalar_select %p711, %s36, 1
        %p713 = scmp.lt.s32.totalorder %s710, 2
        %s714 = scalar_select %p713, %s710, 2
        %s715 = smul.addr %s712, 3
        %s716 = sadd.s32 %s714, %s715
        %s717 = smul.addr %s716, 4
        %s718 = scalar_lea.vmem %s16, %s717
        %s719 = smul.u32 3, %s37
        %s720 = smul.u32 3, %s37
        %p721 = scmp.lt.s32.totalorder %s36, 1
        %s722 = scalar_select %p721, %s36, 1
        %p723 = scmp.lt.s32.totalorder %s720, 2
        %s724 = scalar_select %p723, %s720, 2
        %s725 = smul.addr %s724, 3
        %s726 = smul.addr %s722, 9
        %s727 = sadd.s32 %s725, %s726
        %s728 = smul.addr %s727, 4
        %s729 = scalar_lea.vmem %s17, %s728
        %s730 = smul.u32 3, %s37
        %v731 = vld [vmem:[%s695] sm:$0xf]
        %v732 = vld [vmem:[%s695 + $0x4] sm:$0xf]
        %v733 = vld [vmem:[%s695 + $0x8] sm:$0xf]
        %v734 = vld [vmem:[%s705] sm:$0xf]
        %v735 = vld [vmem:[%s705 + $0x4] sm:$0xf]
        %v736 = vld [vmem:[%s705 + $0x8] sm:$0xf]
        %v737 = vld [vmem:[#allocation2] sm:$0xf]
        %v738 = vld [vmem:[#allocation2 + $0x4] sm:$0xf]
        %v739 = vld [vmem:[#allocation2 + $0x8] sm:$0xf]
        %v740 = vld [vmem:[#allocation2 + $0xc] sm:$0xf]
        %v741 = vld [vmem:[#allocation2 + $0x10] sm:$0xf]
        %v742 = vld [vmem:[#allocation2 + $0x14] sm:$0xf]
        %v743 = vld [vmem:[#allocation2 + $0x18] sm:$0xf]
        %v744 = vld [vmem:[#allocation2 + $0x1c] sm:$0xf]
        %v745 = vld [vmem:[#allocation2 + $0x20] sm:$0xf]
        %v746 = vld [vmem:[#allocation2 + $0x24] sm:$0xf]
        %v747 = vld [vmem:[#allocation2 + $0x28] sm:$0xf]
        %v748 = vld [vmem:[#allocation2 + $0x2c] sm:$0xf]
        %v749 = vld [vmem:[#allocation2 + $0x30] sm:$0xf]
        %v750 = vld [vmem:[#allocation2 + $0x34] sm:$0xf]
        %v751 = vld [vmem:[#allocation2 + $0x38] sm:$0xf]
        %v752 = vld [vmem:[#allocation2 + $0x3c] sm:$0xf]
        %v756 = vunpack.c.l.b16 %v734
        %v757 = vunpack.c.l.b16 %v735
        %v758 = vunpack.c.l.b16 %v736
        %v759 = vpack.c.b16 %v757, %v756
        %v760 = vpack.c.b16 %v758, %v758
        %v779 = vunpack.c.l.b16 %v737
        %v780 = vunpack.c.l.b16 %v738
        %v781 = vunpack.c.l.b16 %v739
        %v782 = vunpack.c.l.b16 %v740
        %v783 = vunpack.c.l.b16 %v741
        %v784 = vunpack.c.l.b16 %v742
        %v785 = vunpack.c.l.b16 %v743
        %v786 = vunpack.c.l.b16 %v744
        %v787 = vunpack.c.l.b16 %v745
        %v788 = vunpack.c.l.b16 %v746
        %v789 = vunpack.c.l.b16 %v747
        %v790 = vunpack.c.l.b16 %v748
        %v791 = vunpack.c.l.b16 %v749
        %v792 = vunpack.c.l.b16 %v750
        %v793 = vunpack.c.l.b16 %v751
        %v794 = vunpack.c.l.b16 %v752
        %v795 = vpack.c.b16 %v780, %v779
        %v796 = vpack.c.b16 %v782, %v781
        %v797 = vpack.c.b16 %v784, %v783
        %v798 = vpack.c.b16 %v786, %v785
        %v799 = vpack.c.b16 %v788, %v787
        %v800 = vpack.c.b16 %v790, %v789
        %v801 = vpack.c.b16 %v792, %v791
        %v802 = vpack.c.b16 %v794, %v793
        %811 = vmatpush.bf16.msra.mxu0 %v802
        %812 = vmatpush.bf16.msra.mxu0 %v801
        %813 = vmatpush.bf16.msra.mxu0 %v800
        %814 = vmatpush.bf16.msra.mxu0 %v799
        %815 = vmatpush.bf16.msra.mxu0 %v798
        %816 = vmatpush.bf16.msra.mxu0 %v797
        %817 = vmatpush.bf16.msra.mxu0 %v796
        %818 = vmatpush.bf16.msra.mxu0 %v795
        %819 = vmatmul.bf16.gmra.mxu0 %v759
        %v820 = vpop.f32.mrf.mxu0
        %v821 = vadd.f32 0.0, %v820
        %v822 = vpop.f32.mrf.mxu0
        %v823 = vadd.f32 0.0, %v822
        %824 = vmatmul.bf16.gmra.mxu0 %v760
        %v825 = vpop.f32.mrf.mxu0
        %v826 = vadd.f32 0.0, %v825
        %v827 = vpop.f32.mrf.mxu0
        %828 = vdwg.mxu0
        %v829 = vld [vmem:[%s5] sm:$0xf]
        %v830 = vld [vmem:[%s5 + $0x4] sm:$0xf]
        %v831 = vld [vmem:[%s5 + $0x8] sm:$0xf]
        %v832 = vld [vmem:[%s5 + $0xc] sm:$0xf]
        %v833 = vld [vmem:[%s5 + $0x10] sm:$0xf]
        %v834 = vld [vmem:[%s5 + $0x14] sm:$0xf]
        %v835 = vld [vmem:[%s5 + $0x18] sm:$0xf]
        %v836 = vld [vmem:[%s5 + $0x1c] sm:$0xf]
        %v837 = vld [vmem:[%s5 + $0x20] sm:$0xf]
        %v838 = vld [vmem:[%s5 + $0x24] sm:$0xf]
        %v839 = vld [vmem:[%s5 + $0x28] sm:$0xf]
        %v840 = vld [vmem:[%s5 + $0x2c] sm:$0xf]
        %v841 = vld [vmem:[%s5 + $0x30] sm:$0xf]
        %v842 = vld [vmem:[%s5 + $0x34] sm:$0xf]
        %v843 = vld [vmem:[%s5 + $0x38] sm:$0xf]
        %v844 = vld [vmem:[%s5 + $0x3c] sm:$0xf]
        %v845 = vld [vmem:[#allocation4] sm:$0xf]
        %v846 = vld [vmem:[#allocation4 + $0x4] sm:$0xf]
        %v847 = vld [vmem:[#allocation4 + $0x8] sm:$0xf]
        %v848 = vld [vmem:[#allocation4 + $0xc] sm:$0xf]
        %v849 = vld [vmem:[#allocation4 + $0x10] sm:$0xf]
        %v850 = vld [vmem:[#allocation4 + $0x14] sm:$0xf]
        %v851 = vld [vmem:[#allocation4 + $0x18] sm:$0xf]
        %v852 = vld [vmem:[#allocation4 + $0x1c] sm:$0xf]
        %v853 = vld [vmem:[#allocation4 + $0x20] sm:$0xf]
        %v854 = vld [vmem:[#allocation4 + $0x24] sm:$0xf]
        %v855 = vld [vmem:[#allocation4 + $0x28] sm:$0xf]
        %v856 = vld [vmem:[#allocation4 + $0x2c] sm:$0xf]
        %v857 = vld [vmem:[#allocation4 + $0x30] sm:$0xf]
        %v858 = vld [vmem:[#allocation4 + $0x34] sm:$0xf]
        %v859 = vld [vmem:[#allocation4 + $0x38] sm:$0xf]
        %v860 = vld [vmem:[#allocation4 + $0x3c] sm:$0xf]
        %v861 = vpack.c.bf16 %v823, %v821
        %v862 = vpack.c.bf16 %v826, %v826
        %v879 = vunpack.c.l.b16 %v829
        %v880 = vunpack.c.l.b16 %v830
        %v881 = vunpack.c.l.b16 %v831
        %v882 = vunpack.c.l.b16 %v832
        %v883 = vunpack.c.l.b16 %v833
        %v884 = vunpack.c.l.b16 %v834
        %v885 = vunpack.c.l.b16 %v835
        %v886 = vunpack.c.l.b16 %v836
        %v887 = vunpack.c.l.b16 %v837
        %v888 = vunpack.c.l.b16 %v838
        %v889 = vunpack.c.l.b16 %v839
        %v890 = vunpack.c.l.b16 %v840
        %v891 = vunpack.c.l.b16 %v841
        %v892 = vunpack.c.l.b16 %v842
        %v893 = vunpack.c.l.b16 %v843
        %v894 = vunpack.c.l.b16 %v844
        %v895 = vpack.c.b16 %v880, %v879
        %v896 = vpack.c.b16 %v882, %v881
        %v897 = vpack.c.b16 %v884, %v883
        %v898 = vpack.c.b16 %v886, %v885
        %v899 = vpack.c.b16 %v888, %v887
        %v900 = vpack.c.b16 %v890, %v889
        %v901 = vpack.c.b16 %v892, %v891
        %v902 = vpack.c.b16 %v894, %v893
        %911 = vmatpush.bf16.msra.mxu0 %v902
        %912 = vmatpush.bf16.msra.mxu0 %v901
        %913 = vmatpush.bf16.msra.mxu0 %v900
        %914 = vmatpush.bf16.msra.mxu0 %v899
        %915 = vmatpush.bf16.msra.mxu0 %v898
        %916 = vmatpush.bf16.msra.mxu0 %v897
        %917 = vmatpush.bf16.msra.mxu0 %v896
        %918 = vmatpush.bf16.msra.mxu0 %v895
        %919 = vmatmul.bf16.gmra.mxu0 %v861
        %v920 = vpop.f32.mrf.mxu0
        %v921 = vadd.f32 0.0, %v920
        %v922 = vpop.f32.mrf.mxu0
        %v923 = vadd.f32 0.0, %v922
        %924 = vmatmul.bf16.gmra.mxu0 %v862
        %v925 = vpop.f32.mrf.mxu0
        %v926 = vadd.f32 0.0, %v925
        %v927 = vpop.f32.mrf.mxu0
        %928 = vdwg.mxu0
        %v932 = vunpack.c.l.b16 %v731
        %v933 = vunpack.c.l.b16 %v732
        %v934 = vunpack.c.l.b16 %v733
        %v935 = vpack.c.b16 %v933, %v932
        %v936 = vpack.c.b16 %v934, %v934
        %v955 = vunpack.c.l.b16 %v845
        %v956 = vunpack.c.l.b16 %v846
        %v957 = vunpack.c.l.b16 %v847
        %v958 = vunpack.c.l.b16 %v848
        %v959 = vunpack.c.l.b16 %v849
        %v960 = vunpack.c.l.b16 %v850
        %v961 = vunpack.c.l.b16 %v851
        %v962 = vunpack.c.l.b16 %v852
        %v963 = vunpack.c.l.b16 %v853
        %v964 = vunpack.c.l.b16 %v854
        %v965 = vunpack.c.l.b16 %v855
        %v966 = vunpack.c.l.b16 %v856
        %v967 = vunpack.c.l.b16 %v857
        %v968 = vunpack.c.l.b16 %v858
        %v969 = vunpack.c.l.b16 %v859
        %v970 = vunpack.c.l.b16 %v860
        %v971 = vpack.c.b16 %v956, %v955
        %v972 = vpack.c.b16 %v958, %v957
        %v973 = vpack.c.b16 %v960, %v959
        %v974 = vpack.c.b16 %v962, %v961
        %v975 = vpack.c.b16 %v964, %v963
        %v976 = vpack.c.b16 %v966, %v965
        %v977 = vpack.c.b16 %v968, %v967
        %v978 = vpack.c.b16 %v970, %v969
        %987 = vmatpush.bf16.msra.mxu0 %v978
        %988 = vmatpush.bf16.msra.mxu0 %v977
        %989 = vmatpush.bf16.msra.mxu0 %v976
        %990 = vmatpush.bf16.msra.mxu0 %v975
        %991 = vmatpush.bf16.msra.mxu0 %v974
        %992 = vmatpush.bf16.msra.mxu0 %v973
        %993 = vmatpush.bf16.msra.mxu0 %v972
        %994 = vmatpush.bf16.msra.mxu0 %v971
        %995 = vmatmul.bf16.gmra.mxu0 %v935
        %v996 = vpop.f32.mrf.mxu0
        %v997 = vadd.f32 %v921, %v996
        %v998 = vpop.f32.mrf.mxu0
        %v999 = vadd.f32 %v923, %v998
        %1000 = vmatmul.bf16.gmra.mxu0 %v936
        %v1001 = vpop.f32.mrf.mxu0
        %v1002 = vadd.f32 %v926, %v1001
        %v1003 = vpop.f32.mrf.mxu0
        %1004 = vdwg.mxu0
        %v1005 = vld [vmem:[%s709] sm:$0x1]
        %v1007 = vperm.slane %v1005, 0
        %v1009 = vadd.f32 %v997, %v1007
        %v1010 = vadd.f32 %v999, %v1007
        %v1011 = vadd.f32 %v1002, %v1007
        %1012 = vadd.xlane.f32.xlu0 %v1009
        %v1013 = vpop.xlane.xlu0 %1012
        %1014 = vadd.xlane.f32.xlu0 %v1010
        %v1015 = vpop.xlane.xlu0 %1014
        %1016 = vadd.xlane.f32.xlu0 %v1011
        %v1017 = vpop.xlane.xlu0 %1016
        %v1018 = vrcp.pop 128.0
        %v1019 = vmul.f32 128.0, %v1018
        %v1020 = vsub.f32 1.0, %v1019
        %v1021 = vmul.f32 %v1018, %v1020
        %v1022 = vadd.f32 %v1018, %v1021
        %vm1023 = vweird.f32 %v1018
        %v1024 = vsel %vm1023, %v1018, %v1022
        %v1025 = vmul.f32 %v1013, %v1024
        %v1026 = vmul.f32 %v1015, %v1024
        %v1027 = vmul.f32 %v1017, %v1024
        %v1028 = vsub.f32 %v1009, %v1025
        %v1029 = vsub.f32 %v1010, %v1026
        %v1030 = vsub.f32 %v1011, %v1027
        %v1031 = vmul.f32 %v1028, %v1028
        %v1032 = vmul.f32 %v1029, %v1029
        %v1033 = vmul.f32 %v1030, %v1030
        %1034 = vadd.xlane.f32.xlu0 %v1031
        %v1035 = vpop.xlane.xlu0 %1034
        %1036 = vadd.xlane.f32.xlu0 %v1032
        %v1037 = vpop.xlane.xlu0 %1036
        %1038 = vadd.xlane.f32.xlu0 %v1033
        %v1039 = vpop.xlane.xlu0 %1038
        %v1040 = vmul.f32 %v1035, %v1024
        %v1041 = vmul.f32 %v1037, %v1024
        %v1042 = vmul.f32 %v1039, %v1024
        %v1043 = vadd.f32 %v1040, 1e-05
        %v1044 = vadd.f32 %v1041, 1e-05
        %v1045 = vadd.f32 %v1042, 1e-05
        %v1046 = vrsqrt.pop %v1043
        %v1047 = vmul.f32 %v1046, %v1043
        %v1048 = vmul.f32 %v1047, %v1046
        %v1049 = vmul.f32 0.5, %v1048
        %v1050 = vsub.f32 1.5, %v1049
        %v1051 = vmul.f32 %v1046, %v1050
        %vm1052 = vweird.f32 %v1043
        %vm1053 = vweird.f32 %v1046
        %vm1054 = vmor %vm1052, %vm1053
        %v1055 = vsel %vm1054, %v1046, %v1051
        %v1056 = vrsqrt.pop %v1044
        %v1057 = vmul.f32 %v1056, %v1044
        %v1058 = vmul.f32 %v1057, %v1056
        %v1059 = vmul.f32 0.5, %v1058
        %v1060 = vsub.f32 1.5, %v1059
        %v1061 = vmul.f32 %v1056, %v1060
        %vm1062 = vweird.f32 %v1044
        %vm1063 = vweird.f32 %v1056
        %vm1064 = vmor %vm1062, %vm1063
        %v1065 = vsel %vm1064, %v1056, %v1061
        %v1066 = vrsqrt.pop %v1045
        %v1067 = vmul.f32 %v1066, %v1045
        %v1068 = vmul.f32 %v1067, %v1066
        %v1069 = vmul.f32 0.5, %v1068
        %v1070 = vsub.f32 1.5, %v1069
        %v1071 = vmul.f32 %v1066, %v1070
        %vm1072 = vweird.f32 %v1045
        %vm1073 = vweird.f32 %v1066
        %vm1074 = vmor %vm1072, %vm1073
        %v1075 = vsel %vm1074, %v1066, %v1071
        %v1076 = vmul.f32 %v1028, %v1055
        %v1077 = vmul.f32 %v1029, %v1065
        %v1078 = vmul.f32 %v1030, %v1075
        %v1079 = vld [vmem:[%s6] sm:$0x1]
        %v1080 = vunpack.c.l.bf16 %v1079
        %v1081 = vperm.slane %v1080, 0
        %v1082 = vmul.f32 %v1076, %v1081
        %v1083 = vmul.f32 %v1077, %v1081
        %v1084 = vmul.f32 %v1078, %v1081
        %v1085 = vld [vmem:[%s7] sm:$0x1]
        %v1086 = vunpack.c.l.bf16 %v1085
        %v1087 = vperm.slane %v1086, 0
        %v1088 = vadd.f32 %v1082, %v1087
        %v1089 = vadd.f32 %v1083, %v1087
        %v1090 = vadd.f32 %v1084, %v1087
        %v1091 = vld [vmem:[%s8] sm:$0xff]
        %v1092 = vld [vmem:[%s8 + $0x8] sm:$0xff]
        %v1093 = vld [vmem:[%s8 + $0x10] sm:$0xff]
        %v1094 = vld [vmem:[%s8 + $0x18] sm:$0xff]
        %v1095 = vld [vmem:[%s8 + $0x20] sm:$0xff]
        %v1096 = vld [vmem:[%s8 + $0x28] sm:$0xff]
        %v1097 = vld [vmem:[%s8 + $0x30] sm:$0xff]
        %v1098 = vld [vmem:[%s8 + $0x38] sm:$0xff]
        %v1099 = vld [vmem:[%s8 + $0x40] sm:$0xff]
        %v1100 = vld [vmem:[%s8 + $0x48] sm:$0xff]
        %v1101 = vld [vmem:[%s8 + $0x50] sm:$0xff]
        %v1102 = vld [vmem:[%s8 + $0x58] sm:$0xff]
        %v1103 = vld [vmem:[%s8 + $0x60] sm:$0xff]
        %v1104 = vld [vmem:[%s8 + $0x68] sm:$0xff]
        %v1105 = vld [vmem:[%s8 + $0x70] sm:$0xff]
        %v1106 = vld [vmem:[%s8 + $0x78] sm:$0xff]
        %v1107 = vpack.c.bf16 %v1089, %v1088
        %v1108 = vpack.c.bf16 %v1090, %v1090
        %v1109 = vld [vmem:[%s9] sm:$0x3]
        %v1110 = vunpack.c.l.bf16 %v1109
        %v1112 = vperm.slane %v1110, 0
        %v1113 = vperm.slane %v1110, 2
        %v1116 = vperm.slane %v1112, 0
        %v1117 = vperm.slane %v1113, 0
        %v1134 = vunpack.c.l.b16 %v1091
        %v1135 = vunpack.c.h.b16 %v1091
        %v1136 = vunpack.c.l.b16 %v1092
        %v1137 = vunpack.c.h.b16 %v1092
        %v1138 = vunpack.c.l.b16 %v1093
        %v1139 = vunpack.c.h.b16 %v1093
        %v1140 = vunpack.c.l.b16 %v1094
        %v1141 = vunpack.c.h.b16 %v1094
        %v1142 = vunpack.c.l.b16 %v1095
        %v1143 = vunpack.c.h.b16 %v1095
        %v1144 = vunpack.c.l.b16 %v1096
        %v1145 = vunpack.c.h.b16 %v1096
        %v1146 = vunpack.c.l.b16 %v1097
        %v1147 = vunpack.c.h.b16 %v1097
        %v1148 = vunpack.c.l.b16 %v1098
        %v1149 = vunpack.c.h.b16 %v1098
        %v1150 = vunpack.c.l.b16 %v1099
        %v1151 = vunpack.c.h.b16 %v1099
        %v1152 = vunpack.c.l.b16 %v1100
        %v1153 = vunpack.c.h.b16 %v1100
        %v1154 = vunpack.c.l.b16 %v1101
        %v1155 = vunpack.c.h.b16 %v1101
        %v1156 = vunpack.c.l.b16 %v1102
        %v1157 = vunpack.c.h.b16 %v1102
        %v1158 = vunpack.c.l.b16 %v1103
        %v1159 = vunpack.c.h.b16 %v1103
        %v1160 = vunpack.c.l.b16 %v1104
        %v1161 = vunpack.c.h.b16 %v1104
        %v1162 = vunpack.c.l.b16 %v1105
        %v1163 = vunpack.c.h.b16 %v1105
        %v1164 = vunpack.c.l.b16 %v1106
        %v1165 = vunpack.c.h.b16 %v1106
        %v1166 = vpack.c.b16 %v1136, %v1134
        %v1167 = vpack.c.b16 %v1137, %v1135
        %v1168 = vpack.c.b16 %v1140, %v1138
        %v1169 = vpack.c.b16 %v1141, %v1139
        %v1170 = vpack.c.b16 %v1144, %v1142
        %v1171 = vpack.c.b16 %v1145, %v1143
        %v1172 = vpack.c.b16 %v1148, %v1146
        %v1173 = vpack.c.b16 %v1149, %v1147
        %v1174 = vpack.c.b16 %v1152, %v1150
        %v1175 = vpack.c.b16 %v1153, %v1151
        %v1176 = vpack.c.b16 %v1156, %v1154
        %v1177 = vpack.c.b16 %v1157, %v1155
        %v1178 = vpack.c.b16 %v1160, %v1158
        %v1179 = vpack.c.b16 %v1161, %v1159
        %v1180 = vpack.c.b16 %v1164, %v1162
        %v1181 = vpack.c.b16 %v1165, %v1163
        %1198 = vmatpush.bf16.msra.mxu0 %v1180
        %1199 = vmatpush.bf16.msra.mxu0 %v1178
        %1200 = vmatpush.bf16.msra.mxu0 %v1176
        %1201 = vmatpush.bf16.msra.mxu0 %v1174
        %1202 = vmatpush.bf16.msra.mxu0 %v1172
        %1203 = vmatpush.bf16.msra.mxu0 %v1170
        %1204 = vmatpush.bf16.msra.mxu0 %v1168
        %1205 = vmatpush.bf16.msra.mxu0 %v1166
        %1206 = vmatmul.bf16.gmra.mxu0 %v1107
        %v1207 = vpop.f32.mrf.mxu0
        %v1208 = vadd.f32 %v1116, %v1207
        %v1209 = vpop.f32.mrf.mxu0
        %v1210 = vadd.f32 %v1116, %v1209
        %1211 = vmatmul.bf16.gmra.mxu0 %v1108
        %v1212 = vpop.f32.mrf.mxu0
        %v1213 = vadd.f32 %v1116, %v1212
        %v1214 = vpop.f32.mrf.mxu0
        %1215 = vdwg.mxu0
        %1216 = vmatpush.bf16.msra.mxu0 %v1181
        %1217 = vmatpush.bf16.msra.mxu0 %v1179
        %1218 = vmatpush.bf16.msra.mxu0 %v1177
        %1219 = vmatpush.bf16.msra.mxu0 %v1175
        %1220 = vmatpush.bf16.msra.mxu0 %v1173
        %1221 = vmatpush.bf16.msra.mxu0 %v1171
        %1222 = vmatpush.bf16.msra.mxu0 %v1169
        %1223 = vmatpush.bf16.msra.mxu0 %v1167
        %1224 = vmatmul.bf16.gmra.mxu0 %v1107
        %v1225 = vpop.f32.mrf.mxu0
        %v1226 = vadd.f32 %v1117, %v1225
        %v1227 = vpop.f32.mrf.mxu0
        %v1228 = vadd.f32 %v1117, %v1227
        %1229 = vmatmul.bf16.gmra.mxu0 %v1108
        %v1230 = vpop.f32.mrf.mxu0
        %v1231 = vadd.f32 %v1117, %v1230
        %v1232 = vpop.f32.mrf.mxu0
        %1233 = vdwg.mxu0
        %v1234 = vxor.u32 %v1208, 2147483648
        %v1235 = vxor.u32 %v1226, 2147483648
        %v1236 = vxor.u32 %v1210, 2147483648
        %v1237 = vxor.u32 %v1228, 2147483648
        %v1238 = vxor.u32 %v1213, 2147483648
        %v1239 = vxor.u32 %v1231, 2147483648
        %v1240 = vmul.f32 %v1234, 1.442695
        %v1241 = vpow.pop %v1240
        %v1242 = vmul.f32 %v1235, 1.442695
        %v1243 = vpow.pop %v1242
        %v1244 = vmul.f32 %v1236, 1.442695
        %v1245 = vpow.pop %v1244
        %v1246 = vmul.f32 %v1237, 1.442695
        %v1247 = vpow.pop %v1246
        %v1248 = vmul.f32 %v1238, 1.442695
        %v1249 = vpow.pop %v1248
        %v1250 = vmul.f32 %v1239, 1.442695
        %v1251 = vpow.pop %v1250
        %v1252 = vadd.f32 %v1241, 1.0
        %v1253 = vadd.f32 %v1243, 1.0
        %v1254 = vadd.f32 %v1245, 1.0
        %v1255 = vadd.f32 %v1247, 1.0
        %v1256 = vadd.f32 %v1249, 1.0
        %v1257 = vadd.f32 %v1251, 1.0
        %v1258 = vrcp.pop %v1252
        %v1259 = vmul.f32 %v1252, %v1258
        %v1260 = vsub.f32 1.0, %v1259
        %v1261 = vmul.f32 %v1258, %v1260
        %v1262 = vadd.f32 %v1258, %v1261
        %vm1263 = vweird.f32 %v1252
        %vm1264 = vweird.f32 %v1258
        %vm1265 = vmor %vm1263, %vm1264
        %v1266 = vsel %vm1265, %v1258, %v1262
        %v1267 = vand.u32 2147483647, %v1252
        %vm1268 = vcmp.eq.f32.partialorder %v1267, 8.507059e+37
        %v1269 = vand.u32 %v1252, 2147483648
        %v1270 = vor.u32 1.1754944e-38, %v1269
        %v1271 = vsel %vm1268, %v1270, %v1266
        %v1272 = vmul.f32 1.0, %v1271
        %v1273 = vrcp.pop %v1253
        %v1274 = vmul.f32 %v1253, %v1273
        %v1275 = vsub.f32 1.0, %v1274
        %v1276 = vmul.f32 %v1273, %v1275
        %v1277 = vadd.f32 %v1273, %v1276
        %vm1278 = vweird.f32 %v1253
        %vm1279 = vweird.f32 %v1273
        %vm1280 = vmor %vm1278, %vm1279
        %v1281 = vsel %vm1280, %v1273, %v1277
        %v1282 = vand.u32 2147483647, %v1253
        %vm1283 = vcmp.eq.f32.partialorder %v1282, 8.507059e+37
        %v1284 = vand.u32 %v1253, 2147483648
        %v1285 = vor.u32 1.1754944e-38, %v1284
        %v1286 = vsel %vm1283, %v1285, %v1281
        %v1287 = vmul.f32 1.0, %v1286
        %v1288 = vrcp.pop %v1254
        %v1289 = vmul.f32 %v1254, %v1288
        %v1290 = vsub.f32 1.0, %v1289
        %v1291 = vmul.f32 %v1288, %v1290
        %v1292 = vadd.f32 %v1288, %v1291
        %vm1293 = vweird.f32 %v1254
        %vm1294 = vweird.f32 %v1288
        %vm1295 = vmor %vm1293, %vm1294
        %v1296 = vsel %vm1295, %v1288, %v1292
        %v1297 = vand.u32 2147483647, %v1254
        %vm1298 = vcmp.eq.f32.partialorder %v1297, 8.507059e+37
        %v1299 = vand.u32 %v1254, 2147483648
        %v1300 = vor.u32 1.1754944e-38, %v1299
        %v1301 = vsel %vm1298, %v1300, %v1296
        %v1302 = vmul.f32 1.0, %v1301
        %v1303 = vrcp.pop %v1255
        %v1304 = vmul.f32 %v1255, %v1303
        %v1305 = vsub.f32 1.0, %v1304
        %v1306 = vmul.f32 %v1303, %v1305
        %v1307 = vadd.f32 %v1303, %v1306
        %vm1308 = vweird.f32 %v1255
        %vm1309 = vweird.f32 %v1303
        %vm1310 = vmor %vm1308, %vm1309
        %v1311 = vsel %vm1310, %v1303, %v1307
        %v1312 = vand.u32 2147483647, %v1255
        %vm1313 = vcmp.eq.f32.partialorder %v1312, 8.507059e+37
        %v1314 = vand.u32 %v1255, 2147483648
        %v1315 = vor.u32 1.1754944e-38, %v1314
        %v1316 = vsel %vm1313, %v1315, %v1311
        %v1317 = vmul.f32 1.0, %v1316
        %v1318 = vrcp.pop %v1256
        %v1319 = vmul.f32 %v1256, %v1318
        %v1320 = vsub.f32 1.0, %v1319
        %v1321 = vmul.f32 %v1318, %v1320
        %v1322 = vadd.f32 %v1318, %v1321
        %vm1323 = vweird.f32 %v1256
        %vm1324 = vweird.f32 %v1318
        %vm1325 = vmor %vm1323, %vm1324
        %v1326 = vsel %vm1325, %v1318, %v1322
        %v1327 = vand.u32 2147483647, %v1256
        %vm1328 = vcmp.eq.f32.partialorder %v1327, 8.507059e+37
        %v1329 = vand.u32 %v1256, 2147483648
        %v1330 = vor.u32 1.1754944e-38, %v1329
        %v1331 = vsel %vm1328, %v1330, %v1326
        %v1332 = vmul.f32 1.0, %v1331
        %v1333 = vrcp.pop %v1257
        %v1334 = vmul.f32 %v1257, %v1333
        %v1335 = vsub.f32 1.0, %v1334
        %v1336 = vmul.f32 %v1333, %v1335
        %v1337 = vadd.f32 %v1333, %v1336
        %vm1338 = vweird.f32 %v1257
        %vm1339 = vweird.f32 %v1333
        %vm1340 = vmor %vm1338, %vm1339
        %v1341 = vsel %vm1340, %v1333, %v1337
        %v1342 = vand.u32 2147483647, %v1257
        %vm1343 = vcmp.eq.f32.partialorder %v1342, 8.507059e+37
        %v1344 = vand.u32 %v1257, 2147483648
        %v1345 = vor.u32 1.1754944e-38, %v1344
        %v1346 = vsel %vm1343, %v1345, %v1341
        %v1347 = vmul.f32 1.0, %v1346
        %v1348 = vmul.f32 %v1208, %v1272
        %v1349 = vmul.f32 %v1226, %v1287
        %v1350 = vmul.f32 %v1210, %v1302
        %v1351 = vmul.f32 %v1228, %v1317
        %v1352 = vmul.f32 %v1213, %v1332
        %v1353 = vmul.f32 %v1231, %v1347
        %v1354 = vld [vmem:[#allocation6] sm:$0xf]
        %v1355 = vld [vmem:[#allocation6 + $0x4] sm:$0xf]
        %v1356 = vld [vmem:[#allocation6 + $0x8] sm:$0xf]
        %v1357 = vld [vmem:[#allocation6 + $0xc] sm:$0xf]
        %v1358 = vld [vmem:[#allocation6 + $0x10] sm:$0xf]
        %v1359 = vld [vmem:[#allocation6 + $0x14] sm:$0xf]
        %v1360 = vld [vmem:[#allocation6 + $0x18] sm:$0xf]
        %v1361 = vld [vmem:[#allocation6 + $0x1c] sm:$0xf]
        %v1362 = vld [vmem:[#allocation6 + $0x20] sm:$0xf]
        %v1363 = vld [vmem:[#allocation6 + $0x24] sm:$0xf]
        %v1364 = vld [vmem:[#allocation6 + $0x28] sm:$0xf]
        %v1365 = vld [vmem:[#allocation6 + $0x2c] sm:$0xf]
        %v1366 = vld [vmem:[#allocation6 + $0x30] sm:$0xf]
        %v1367 = vld [vmem:[#allocation6 + $0x34] sm:$0xf]
        %v1368 = vld [vmem:[#allocation6 + $0x38] sm:$0xf]
        %v1369 = vld [vmem:[#allocation6 + $0x3c] sm:$0xf]
        %v1370 = vld [vmem:[#allocation6 + $0x40] sm:$0xf]
        %v1371 = vld [vmem:[#allocation6 + $0x44] sm:$0xf]
        %v1372 = vld [vmem:[#allocation6 + $0x48] sm:$0xf]
        %v1373 = vld [vmem:[#allocation6 + $0x4c] sm:$0xf]
        %v1374 = vld [vmem:[#allocation6 + $0x50] sm:$0xf]
        %v1375 = vld [vmem:[#allocation6 + $0x54] sm:$0xf]
        %v1376 = vld [vmem:[#allocation6 + $0x58] sm:$0xf]
        %v1377 = vld [vmem:[#allocation6 + $0x5c] sm:$0xf]
        %v1378 = vld [vmem:[#allocation6 + $0x60] sm:$0xf]
        %v1379 = vld [vmem:[#allocation6 + $0x64] sm:$0xf]
        %v1380 = vld [vmem:[#allocation6 + $0x68] sm:$0xf]
        %v1381 = vld [vmem:[#allocation6 + $0x6c] sm:$0xf]
        %v1382 = vld [vmem:[#allocation6 + $0x70] sm:$0xf]
        %v1383 = vld [vmem:[#allocation6 + $0x74] sm:$0xf]
        %v1384 = vld [vmem:[#allocation6 + $0x78] sm:$0xf]
        %v1385 = vld [vmem:[#allocation6 + $0x7c] sm:$0xf]
        %v1386 = vpack.c.bf16 %v1350, %v1348
        %v1387 = vpack.c.bf16 %v1351, %v1349
        %v1388 = vpack.c.bf16 %v1352, %v1352
        %v1389 = vpack.c.bf16 %v1353, %v1353
        %v1390 = vld [vmem:[%s11] sm:$0x1]
        %v1391 = vunpack.c.l.bf16 %v1390
        %v1392 = vperm.slane %v1391, 0
        %v1425 = vunpack.c.l.b16 %v1354
        %v1426 = vunpack.c.l.b16 %v1355
        %v1427 = vunpack.c.l.b16 %v1356
        %v1428 = vunpack.c.l.b16 %v1357
        %v1429 = vunpack.c.l.b16 %v1358
        %v1430 = vunpack.c.l.b16 %v1359
        %v1431 = vunpack.c.l.b16 %v1360
        %v1432 = vunpack.c.l.b16 %v1361
        %v1433 = vunpack.c.l.b16 %v1362
        %v1434 = vunpack.c.l.b16 %v1363
        %v1435 = vunpack.c.l.b16 %v1364
        %v1436 = vunpack.c.l.b16 %v1365
        %v1437 = vunpack.c.l.b16 %v1366
        %v1438 = vunpack.c.l.b16 %v1367
        %v1439 = vunpack.c.l.b16 %v1368
        %v1440 = vunpack.c.l.b16 %v1369
        %v1441 = vunpack.c.l.b16 %v1370
        %v1442 = vunpack.c.l.b16 %v1371
        %v1443 = vunpack.c.l.b16 %v1372
        %v1444 = vunpack.c.l.b16 %v1373
        %v1445 = vunpack.c.l.b16 %v1374
        %v1446 = vunpack.c.l.b16 %v1375
        %v1447 = vunpack.c.l.b16 %v1376
        %v1448 = vunpack.c.l.b16 %v1377
        %v1449 = vunpack.c.l.b16 %v1378
        %v1450 = vunpack.c.l.b16 %v1379
        %v1451 = vunpack.c.l.b16 %v1380
        %v1452 = vunpack.c.l.b16 %v1381
        %v1453 = vunpack.c.l.b16 %v1382
        %v1454 = vunpack.c.l.b16 %v1383
        %v1455 = vunpack.c.l.b16 %v1384
        %v1456 = vunpack.c.l.b16 %v1385
        %v1457 = vpack.c.b16 %v1426, %v1425
        %v1458 = vpack.c.b16 %v1428, %v1427
        %v1459 = vpack.c.b16 %v1430, %v1429
        %v1460 = vpack.c.b16 %v1432, %v1431
        %v1461 = vpack.c.b16 %v1434, %v1433
        %v1462 = vpack.c.b16 %v1436, %v1435
        %v1463 = vpack.c.b16 %v1438, %v1437
        %v1464 = vpack.c.b16 %v1440, %v1439
        %v1465 = vpack.c.b16 %v1442, %v1441
        %v1466 = vpack.c.b16 %v1444, %v1443
        %v1467 = vpack.c.b16 %v1446, %v1445
        %v1468 = vpack.c.b16 %v1448, %v1447
        %v1469 = vpack.c.b16 %v1450, %v1449
        %v1470 = vpack.c.b16 %v1452, %v1451
        %v1471 = vpack.c.b16 %v1454, %v1453
        %v1472 = vpack.c.b16 %v1456, %v1455
        %1489 = vmatpush.bf16.msra.mxu0 %v1464
        %1490 = vmatpush.bf16.msra.mxu0 %v1463
        %1491 = vmatpush.bf16.msra.mxu0 %v1462
        %1492 = vmatpush.bf16.msra.mxu0 %v1461
        %1493 = vmatpush.bf16.msra.mxu0 %v1460
        %1494 = vmatpush.bf16.msra.mxu0 %v1459
        %1495 = vmatpush.bf16.msra.mxu0 %v1458
        %1496 = vmatpush.bf16.msra.mxu0 %v1457
        %1497 = vmatmul.bf16.gmra.mxu0 %v1386
        %v1498 = vpop.f32.mrf.mxu0
        %v1499 = vadd.f32 %v1392, %v1498
        %v1500 = vpop.f32.mrf.mxu0
        %v1501 = vadd.f32 %v1392, %v1500
        %1502 = vmatmul.bf16.gmra.mxu0 %v1388
        %v1503 = vpop.f32.mrf.mxu0
        %v1504 = vadd.f32 %v1392, %v1503
        %v1505 = vpop.f32.mrf.mxu0
        %1506 = vdwg.mxu0
        %1507 = vmatpush.bf16.msra.mxu0 %v1472
        %1508 = vmatpush.bf16.msra.mxu0 %v1471
        %1509 = vmatpush.bf16.msra.mxu0 %v1470
        %1510 = vmatpush.bf16.msra.mxu0 %v1469
        %1511 = vmatpush.bf16.msra.mxu0 %v1468
        %1512 = vmatpush.bf16.msra.mxu0 %v1467
        %1513 = vmatpush.bf16.msra.mxu0 %v1466
        %1514 = vmatpush.bf16.msra.mxu0 %v1465
        %1515 = vmatmul.bf16.gmra.mxu0 %v1387
        %v1516 = vpop.f32.mrf.mxu0
        %v1517 = vadd.f32 %v1499, %v1516
        %v1518 = vpop.f32.mrf.mxu0
        %v1519 = vadd.f32 %v1501, %v1518
        %1520 = vmatmul.bf16.gmra.mxu0 %v1389
        %v1521 = vpop.f32.mrf.mxu0
        %v1522 = vadd.f32 %v1504, %v1521
        %v1523 = vpop.f32.mrf.mxu0
        %1524 = vdwg.mxu0
        %v1525 = vmul.f32 %v1517, 0.5
        %v1526 = vmul.f32 %v1519, 0.5
        %v1527 = vmul.f32 %v1522, 0.5
        %v1528 = vadd.f32 %v1009, %v1525
        %v1529 = vadd.f32 %v1010, %v1526
        %v1530 = vadd.f32 %v1011, %v1527
        %v1531 = vpack.c.bf16 %v1528, %v1528
        %v1532 = vpack.c.bf16 %v1529, %v1529
        %v1533 = vpack.c.bf16 %v1530, %v1530
        %1534 = vst [vmem:[%s718] sm:$0xf] %v1531
        %1535 = vst [vmem:[%s718 + $0x4] sm:$0xf] %v1532
        %1536 = vst [vmem:[%s718 + $0x8] sm:$0xf] %v1533
        %1537 = vadd.xlane.f32.xlu0 %v1528
        %v1538 = vpop.xlane.xlu0 %1537
        %1539 = vadd.xlane.f32.xlu0 %v1529
        %v1540 = vpop.xlane.xlu0 %1539
        %1541 = vadd.xlane.f32.xlu0 %v1530
        %v1542 = vpop.xlane.xlu0 %1541
        %v1543 = vmul.f32 %v1538, %v1024
        %v1544 = vmul.f32 %v1540, %v1024
        %v1545 = vmul.f32 %v1542, %v1024
        %v1546 = vsub.f32 %v1528, %v1543
        %v1547 = vsub.f32 %v1529, %v1544
        %v1548 = vsub.f32 %v1530, %v1545
        %v1549 = vmul.f32 %v1546, %v1546
        %v1550 = vmul.f32 %v1547, %v1547
        %v1551 = vmul.f32 %v1548, %v1548
        %1552 = vadd.xlane.f32.xlu0 %v1549
        %v1553 = vpop.xlane.xlu0 %1552
        %1554 = vadd.xlane.f32.xlu0 %v1550
        %v1555 = vpop.xlane.xlu0 %1554
        %1556 = vadd.xlane.f32.xlu0 %v1551
        %v1557 = vpop.xlane.xlu0 %1556
        %v1558 = vmul.f32 %v1553, %v1024
        %v1559 = vmul.f32 %v1555, %v1024
        %v1560 = vmul.f32 %v1557, %v1024
        %v1561 = vadd.f32 %v1558, 1e-05
        %v1562 = vadd.f32 %v1559, 1e-05
        %v1563 = vadd.f32 %v1560, 1e-05
        %v1564 = vrsqrt.pop %v1561
        %v1565 = vmul.f32 %v1564, %v1561
        %v1566 = vmul.f32 %v1565, %v1564
        %v1567 = vmul.f32 0.5, %v1566
        %v1568 = vsub.f32 1.5, %v1567
        %v1569 = vmul.f32 %v1564, %v1568
        %vm1570 = vweird.f32 %v1561
        %vm1571 = vweird.f32 %v1564
        %vm1572 = vmor %vm1570, %vm1571
        %v1573 = vsel %vm1572, %v1564, %v1569
        %v1574 = vrsqrt.pop %v1562
        %v1575 = vmul.f32 %v1574, %v1562
        %v1576 = vmul.f32 %v1575, %v1574
        %v1577 = vmul.f32 0.5, %v1576
        %v1578 = vsub.f32 1.5, %v1577
        %v1579 = vmul.f32 %v1574, %v1578
        %vm1580 = vweird.f32 %v1562
        %vm1581 = vweird.f32 %v1574
        %vm1582 = vmor %vm1580, %vm1581
        %v1583 = vsel %vm1582, %v1574, %v1579
        %v1584 = vrsqrt.pop %v1563
        %v1585 = vmul.f32 %v1584, %v1563
        %v1586 = vmul.f32 %v1585, %v1584
        %v1587 = vmul.f32 0.5, %v1586
        %v1588 = vsub.f32 1.5, %v1587
        %v1589 = vmul.f32 %v1584, %v1588
        %vm1590 = vweird.f32 %v1563
        %vm1591 = vweird.f32 %v1584
        %vm1592 = vmor %vm1590, %vm1591
        %v1593 = vsel %vm1592, %v1584, %v1589
        %v1594 = vmul.f32 %v1546, %v1573
        %v1595 = vmul.f32 %v1547, %v1583
        %v1596 = vmul.f32 %v1548, %v1593
        %v1597 = vld [vmem:[%s12] sm:$0x1]
        %v1598 = vunpack.c.l.bf16 %v1597
        %v1599 = vperm.slane %v1598, 0
        %v1600 = vmul.f32 %v1594, %v1599
        %v1601 = vmul.f32 %v1595, %v1599
        %v1602 = vmul.f32 %v1596, %v1599
        %v1603 = vld [vmem:[%s13] sm:$0x1]
        %v1604 = vunpack.c.l.bf16 %v1603
        %v1605 = vperm.slane %v1604, 0
        %v1606 = vadd.f32 %v1600, %v1605
        %v1607 = vadd.f32 %v1601, %v1605
        %v1608 = vadd.f32 %v1602, %v1605
        %v1609 = vld [vmem:[#allocation7] sm:$0xff]
        %v1610 = vld [vmem:[#allocation7 + $0x8] sm:$0xf]
        %v1611 = vld [vmem:[#allocation7 + $0xc] sm:$0xff]
        %v1612 = vld [vmem:[#allocation7 + $0x14] sm:$0xf]
        %v1613 = vld [vmem:[#allocation7 + $0x18] sm:$0xff]
        %v1614 = vld [vmem:[#allocation7 + $0x20] sm:$0xf]
        %v1615 = vld [vmem:[#allocation7 + $0x24] sm:$0xff]
        %v1616 = vld [vmem:[#allocation7 + $0x2c] sm:$0xf]
        %v1617 = vld [vmem:[#allocation7 + $0x30] sm:$0xff]
        %v1618 = vld [vmem:[#allocation7 + $0x38] sm:$0xf]
        %v1619 = vld [vmem:[#allocation7 + $0x3c] sm:$0xff]
        %v1620 = vld [vmem:[#allocation7 + $0x44] sm:$0xf]
        %v1621 = vld [vmem:[#allocation7 + $0x48] sm:$0xff]
        %v1622 = vld [vmem:[#allocation7 + $0x50] sm:$0xf]
        %v1623 = vld [vmem:[#allocation7 + $0x54] sm:$0xff]
        %v1624 = vld [vmem:[#allocation7 + $0x5c] sm:$0xf]
        %v1625 = vld [vmem:[#allocation7 + $0x60] sm:$0xff]
        %v1626 = vld [vmem:[#allocation7 + $0x68] sm:$0xf]
        %v1627 = vld [vmem:[#allocation7 + $0x6c] sm:$0xff]
        %v1628 = vld [vmem:[#allocation7 + $0x74] sm:$0xf]
        %v1629 = vld [vmem:[#allocation7 + $0x78] sm:$0xff]
        %v1630 = vld [vmem:[#allocation7 + $0x80] sm:$0xf]
        %v1631 = vld [vmem:[#allocation7 + $0x84] sm:$0xff]
        %v1632 = vld [vmem:[#allocation7 + $0x8c] sm:$0xf]
        %v1633 = vld [vmem:[#allocation7 + $0x90] sm:$0xff]
        %v1634 = vld [vmem:[#allocation7 + $0x98] sm:$0xf]
        %v1635 = vld [vmem:[#allocation7 + $0x9c] sm:$0xff]
        %v1636 = vld [vmem:[#allocation7 + $0xa4] sm:$0xf]
        %v1637 = vld [vmem:[#allocation7 + $0xa8] sm:$0xff]
        %v1638 = vld [vmem:[#allocation7 + $0xb0] sm:$0xf]
        %v1639 = vld [vmem:[#allocation7 + $0xb4] sm:$0xff]
        %v1640 = vld [vmem:[#allocation7 + $0xbc] sm:$0xf]
        %v1641 = vpack.c.bf16 %v1607, %v1606
        %v1642 = vpack.c.bf16 %v1608, %v1608
        %v1643 = vld [vmem:[%s15] sm:$0x7]
        %v1644 = vunpack.c.l.bf16 %v1643
        %v1646 = vperm.slane %v1644, 0
        %v1647 = vperm.slane %v1644, 2
        %v1648 = vperm.slane %v1644, 4
        %v1652 = vperm.slane %v1646, 0
        %v1653 = vperm.slane %v1647, 0
        %v1654 = vperm.slane %v1648, 0
        %v1687 = vunpack.c.l.b16 %v1609
        %v1688 = vunpack.c.h.b16 %v1609
        %v1689 = vunpack.c.l.b16 %v1610
        %v1690 = vunpack.c.l.b16 %v1611
        %v1691 = vunpack.c.h.b16 %v1611
        %v1692 = vunpack.c.l.b16 %v1612
        %v1693 = vunpack.c.l.b16 %v1613
        %v1694 = vunpack.c.h.b16 %v1613
        %v1695 = vunpack.c.l.b16 %v1614
        %v1696 = vunpack.c.l.b16 %v1615
        %v1697 = vunpack.c.h.b16 %v1615
        %v1698 = vunpack.c.l.b16 %v1616
        %v1699 = vunpack.c.l.b16 %v1617
        %v1700 = vunpack.c.h.b16 %v1617
        %v1701 = vunpack.c.l.b16 %v1618
        %v1702 = vunpack.c.l.b16 %v1619
        %v1703 = vunpack.c.h.b16 %v1619
        %v1704 = vunpack.c.l.b16 %v1620
        %v1705 = vunpack.c.l.b16 %v1621
        %v1706 = vunpack.c.h.b16 %v1621
        %v1707 = vunpack.c.l.b16 %v1622
        %v1708 = vunpack.c.l.b16 %v1623
        %v1709 = vunpack.c.h.b16 %v1623
        %v1710 = vunpack.c.l.b16 %v1624
        %v1711 = vunpack.c.l.b16 %v1625
        %v1712 = vunpack.c.h.b16 %v1625
        %v1713 = vunpack.c.l.b16 %v1626
        %v1714 = vunpack.c.l.b16 %v1627
        %v1715 = vunpack.c.h.b16 %v1627
        %v1716 = vunpack.c.l.b16 %v1628
        %v1717 = vunpack.c.l.b16 %v1629
        %v1718 = vunpack.c.h.b16 %v1629
        %v1719 = vunpack.c.l.b16 %v1630
        %v1720 = vunpack.c.l.b16 %v1631
        %v1721 = vunpack.c.h.b16 %v1631
        %v1722 = vunpack.c.l.b16 %v1632
        %v1723 = vunpack.c.l.b16 %v1633
        %v1724 = vunpack.c.h.b16 %v1633
        %v1725 = vunpack.c.l.b16 %v1634
        %v1726 = vunpack.c.l.b16 %v1635
        %v1727 = vunpack.c.h.b16 %v1635
        %v1728 = vunpack.c.l.b16 %v1636
        %v1729 = vunpack.c.l.b16 %v1637
        %v1730 = vunpack.c.h.b16 %v1637
        %v1731 = vunpack.c.l.b16 %v1638
        %v1732 = vunpack.c.l.b16 %v1639
        %v1733 = vunpack.c.h.b16 %v1639
        %v1734 = vunpack.c.l.b16 %v1640
        %v1735 = vpack.c.b16 %v1690, %v1687
        %v1736 = vpack.c.b16 %v1691, %v1688
        %v1737 = vpack.c.b16 %v1692, %v1689
        %v1738 = vpack.c.b16 %v1696, %v1693
        %v1739 = vpack.c.b16 %v1697, %v1694
        %v1740 = vpack.c.b16 %v1698, %v1695
        %v1741 = vpack.c.b16 %v1702, %v1699
        %v1742 = vpack.c.b16 %v1703, %v1700
        %v1743 = vpack.c.b16 %v1704, %v1701
        %v1744 = vpack.c.b16 %v1708, %v1705
        %v1745 = vpack.c.b16 %v1709, %v1706
        %v1746 = vpack.c.b16 %v1710, %v1707
        %v1747 = vpack.c.b16 %v1714, %v1711
        %v1748 = vpack.c.b16 %v1715, %v1712
        %v1749 = vpack.c.b16 %v1716, %v1713
        %v1750 = vpack.c.b16 %v1720, %v1717
        %v1751 = vpack.c.b16 %v1721, %v1718
        %v1752 = vpack.c.b16 %v1722, %v1719
        %v1753 = vpack.c.b16 %v1726, %v1723
        %v1754 = vpack.c.b16 %v1727, %v1724
        %v1755 = vpack.c.b16 %v1728, %v1725
        %v1756 = vpack.c.b16 %v1732, %v1729
        %v1757 = vpack.c.b16 %v1733, %v1730
        %v1758 = vpack.c.b16 %v1734, %v1731
        %1783 = vmatpush.bf16.msra.mxu0 %v1756
        %1784 = vmatpush.bf16.msra.mxu0 %v1753
        %1785 = vmatpush.bf16.msra.mxu0 %v1750
        %1786 = vmatpush.bf16.msra.mxu0 %v1747
        %1787 = vmatpush.bf16.msra.mxu0 %v1744
        %1788 = vmatpush.bf16.msra.mxu0 %v1741
        %1789 = vmatpush.bf16.msra.mxu0 %v1738
        %1790 = vmatpush.bf16.msra.mxu0 %v1735
        %1791 = vmatmul.bf16.gmra.mxu0 %v1641
        %v1792 = vpop.f32.mrf.mxu0
        %v1793 = vadd.f32 %v1652, %v1792
        %v1794 = vpop.f32.mrf.mxu0
        %v1795 = vadd.f32 %v1652, %v1794
        %1796 = vmatmul.bf16.gmra.mxu0 %v1642
        %v1797 = vpop.f32.mrf.mxu0
        %v1798 = vadd.f32 %v1652, %v1797
        %v1799 = vpop.f32.mrf.mxu0
        %1800 = vdwg.mxu0
        %1801 = vmatpush.bf16.msra.mxu0 %v1757
        %1802 = vmatpush.bf16.msra.mxu0 %v1754
        %1803 = vmatpush.bf16.msra.mxu0 %v1751
        %1804 = vmatpush.bf16.msra.mxu0 %v1748
        %1805 = vmatpush.bf16.msra.mxu0 %v1745
        %1806 = vmatpush.bf16.msra.mxu0 %v1742
        %1807 = vmatpush.bf16.msra.mxu0 %v1739
        %1808 = vmatpush.bf16.msra.mxu0 %v1736
        %1809 = vmatmul.bf16.gmra.mxu0 %v1641
        %v1810 = vpop.f32.mrf.mxu0
        %v1811 = vadd.f32 %v1653, %v1810
        %v1812 = vpop.f32.mrf.mxu0
        %v1813 = vadd.f32 %v1653, %v1812
        %1814 = vmatmul.bf16.gmra.mxu0 %v1642
        %v1815 = vpop.f32.mrf.mxu0
        %v1816 = vadd.f32 %v1653, %v1815
        %v1817 = vpop.f32.mrf.mxu0
        %1818 = vdwg.mxu0
        %1819 = vmatpush.bf16.msra.mxu0 %v1758
        %1820 = vmatpush.bf16.msra.mxu0 %v1755
        %1821 = vmatpush.bf16.msra.mxu0 %v1752
        %1822 = vmatpush.bf16.msra.mxu0 %v1749
        %1823 = vmatpush.bf16.msra.mxu0 %v1746
        %1824 = vmatpush.bf16.msra.mxu0 %v1743
        %1825 = vmatpush.bf16.msra.mxu0 %v1740
        %1826 = vmatpush.bf16.msra.mxu0 %v1737
        %1827 = vmatmul.bf16.gmra.mxu0 %v1641
        %v1828 = vpop.f32.mrf.mxu0
        %v1829 = vadd.f32 %v1654, %v1828
        %v1830 = vpop.f32.mrf.mxu0
        %v1831 = vadd.f32 %v1654, %v1830
        %1832 = vmatmul.bf16.gmra.mxu0 %v1642
        %v1833 = vpop.f32.mrf.mxu0
        %v1834 = vadd.f32 %v1654, %v1833
        %v1835 = vpop.f32.mrf.mxu0
        %1836 = vdwg.mxu0
        %v1837 = vpack.c.bf16 %v1811, %v1793
        %v1838 = vpack.c.bf16 %v1829, %v1829
        %v1839 = vpack.c.bf16 %v1813, %v1795
        %v1840 = vpack.c.bf16 %v1831, %v1831
        %v1841 = vpack.c.bf16 %v1816, %v1798
        %v1842 = vpack.c.bf16 %v1834, %v1834
        %1843 = vst [vmem:[%s729] sm:$0xff] %v1837
        %1844 = vst [vmem:[%s729 + $0x8] sm:$0xf] %v1838
        %1845 = vst [vmem:[%s729 + $0xc] sm:$0xff] %v1839
        %1846 = vst [vmem:[%s729 + $0x14] sm:$0xf] %v1840
        %1847 = vst [vmem:[%s729 + $0x18] sm:$0xff] %v1841
        %1848 = vst [vmem:[%s729 + $0x20] sm:$0xf] %v1842
        %s1849 = smul.u32 3, %s37
        %p1850 = scmp.lt.s32.totalorder %s36, 1
        %s1851 = scalar_select %p1850, %s36, 1
        %p1852 = scmp.lt.s32.totalorder %s1849, 2
        %s1853 = scalar_select %p1852, %s1849, 2
        %s1854 = smul.addr %s1851, 3
        %s1855 = sadd.s32 %s1853, %s1854
        %s1856 = smul.addr %s1855, 4
        %s1857 = scalar_lea.vmem %s16, %s1856
        %s1858 = smul.u32 3, %s37
        %p1859 = scmp.lt.s32.totalorder %s36, 1
        %s1860 = scalar_select %p1859, %s36, 1
        %p1861 = scmp.lt.s32.totalorder %s1858, 2
        %s1862 = scalar_select %p1861, %s1858, 2
        %s1863 = smul.addr %s1862, 3
        %s1864 = smul.addr %s1860, 9
        %s1865 = sadd.s32 %s1863, %s1864
        %s1866 = smul.addr %s1865, 4
        %s1867 = scalar_lea.vmem %s17, %s1866
        // Predicated region
        $region101: #{conformer_layer_forward.2} parent=83 // pred_check
          %p1868 = pneg %p419
        $region102: #{conformer_layer_forward.2} parent=83 // pred_check_branch
          %1870 = sbr.rel (%p1868) target = $region104
        $region103: #{conformer_layer_forward.2} parent=83 // pred_region
          %s1871 = smul.u32 3, %s37
        $region104: #{conformer_layer_forward.2} parent=83 // pred_fallthru
          _
        // Predicated region
        $region105: #{conformer_layer_forward.2} parent=83 // pred_check
          %p1872 = pneg %p447
        $region106: #{conformer_layer_forward.2} parent=83 // pred_check_branch
          %1874 = sbr.rel (%p1872) target = $region108
        $region107: #{conformer_layer_forward.2} parent=83 // pred_region
          %s1875 = smul.u32 3, %s37
        $region108: #{conformer_layer_forward.2} parent=83 // pred_fallthru
          _
      $region84: #{conformer_layer_forward.2} parent=5 // pred_fallthru
        _
      %p1876 = scmp.le.s32.totalorder 2, %s27
      // Predicated region
      $region109: #{conformer_layer_forward.2} parent=5 // pred_check
        %p1877 = pneg %p1876
      $region110: #{conformer_layer_forward.2} parent=5 // pred_check_branch
        %1879 = sbr.rel (%p1877) target = $region112
      $region111: #{conformer_layer_forward.2} parent=5 // pred_region
        %s1880 = ssub.s32 %s27, 2
        // Predicated region
        $region113: #{conformer_layer_forward.2} parent=111 // pred_check
          %p1881 = pneg %p425
        $region114: #{conformer_layer_forward.2} parent=111 // pred_check_branch
          %1883 = sbr.rel (%p1881) target = $region116
        $region115: #{conformer_layer_forward.2} parent=111 // pred_region
          %s1884 = smul.u32 3, %s39
          %p1885 = scmp.lt.s32.totalorder %s38, 1
          %s1886 = scalar_select %p1885, %s38, 1
          %p1887 = scmp.lt.s32.totalorder %s1884, 2
          %s1888 = scalar_select %p1887, %s1884, 2
          %s1889 = smul.addr %s1886, 3
          %s1890 = sadd.s32 %s1888, %s1889
          %s1891 = smul.addr %s1890, 4
          %s1892 = scalar_lea.vmem %s16, %s1891
        $region116: #{conformer_layer_forward.2} parent=111 // pred_fallthru
          _
        // Predicated region
        $region117: #{conformer_layer_forward.2} parent=111 // pred_check
          %p1893 = pneg %p453
        $region118: #{conformer_layer_forward.2} parent=111 // pred_check_branch
          %1895 = sbr.rel (%p1893) target = $region120
        $region119: #{conformer_layer_forward.2} parent=111 // pred_region
          %s1896 = smul.u32 3, %s39
          %p1897 = scmp.lt.s32.totalorder %s38, 1
          %s1898 = scalar_select %p1897, %s38, 1
          %p1899 = scmp.lt.s32.totalorder %s1896, 2
          %s1900 = scalar_select %p1899, %s1896, 2
          %s1901 = smul.addr %s1900, 3
          %s1902 = smul.addr %s1898, 9
          %s1903 = sadd.s32 %s1901, %s1902
          %s1904 = smul.addr %s1903, 4
          %s1905 = scalar_lea.vmem %s17, %s1904
        $region120: #{conformer_layer_forward.2} parent=111 // pred_fallthru
          _
      $region112: #{conformer_layer_forward.2} parent=5 // pred_fallthru
        _
    $region6: #{conformer_layer_forward.2} parent=1 // loop_footer
      %s31 = sadd.s32 1, %s27
    $region7: #{conformer_layer_forward.2} parent=1 // loop_footer_branch
      %26 = sbr.rel target = $region3
    $region8: #{conformer_layer_forward.2} parent=1 // loop_exit
      _
    %1906 = vsyncpa [#allocation3], 1
    %s1907 = scalar_lea.sflag [#allocation3], 1
    %1908 = vsyncpa %s1907, 1
    %1909 = vsyncpa [#allocation5], 1
    %1910 = vsyncpa [#allocation8], 1

// kernel: conformer_layer_forward.3
$region0: #{conformer_layer_forward.3}
  #allocation0 [shape = 'u32[]', space=smem, size = 0x4, offset = 0x4, fixed_abs, tag = 'smem constant byte address 0x4 - core index']
  #allocation1 [shape = 'u32[72,128]{1,0:T(1,128)}', space=vmem, size = 0x9000, scoped, tag = 'internal scratch']
  %s0 = inlined_call_operand.vmem [shape: bf16[2,24,128], index: 0, kind: input, shape index: {}]
  %s1 = inlined_call_operand.vmem [shape: bf16[2,24,384], index: 1, kind: input, shape index: {}]
  %s2 = inlined_call_operand.hbm [shape: bf16[128,128], index: 2, kind: input, shape index: {}]
  %s3 = inlined_call_operand.vmem [shape: bf16[1,128], index: 3, kind: input, shape index: {}]
  %s4 = inlined_call_operand.vmem [shape: bf16[1,128], index: 4, kind: input, shape index: {}]
  %s5 = inlined_call_operand.vmem [shape: bf16[1,128], index: 5, kind: input, shape index: {}]
  %s6 = inlined_call_operand.hbm [shape: bf16[128,256], index: 6, kind: input, shape index: {}]
  %s7 = inlined_call_operand.vmem [shape: bf16[1,256], index: 7, kind: input, shape index: {}]
  %s8 = inlined_call_operand.vmem [shape: bf16[5,128], index: 8, kind: input, shape index: {}]
  %s9 = inlined_call_operand.vmem [shape: bf16[1,128], index: 9, kind: input, shape index: {}]
  %s10 = inlined_call_operand.vmem [shape: f32[1,128], index: 10, kind: input, shape index: {}]
  %s11 = inlined_call_operand.vmem [shape: f32[1,128], index: 11, kind: input, shape index: {}]
  %s12 = inlined_call_operand.hbm [shape: bf16[128,128], index: 12, kind: input, shape index: {}]
  %s13 = inlined_call_operand.vmem [shape: bf16[1,128], index: 13, kind: input, shape index: {}]
  %s14 = inlined_call_operand.vmem [shape: bf16[1,128], index: 14, kind: input, shape index: {}]
  %s15 = inlined_call_operand.vmem [shape: bf16[1,128], index: 15, kind: input, shape index: {}]
  %s16 = inlined_call_operand.hbm [shape: bf16[128,256], index: 16, kind: input, shape index: {}]
  %s17 = inlined_call_operand.vmem [shape: bf16[1,256], index: 17, kind: input, shape index: {}]
  %s18 = inlined_call_operand.hbm [shape: bf16[256,128], index: 18, kind: input, shape index: {}]
  %s19 = inlined_call_operand.vmem [shape: bf16[1,128], index: 19, kind: input, shape index: {}]
  %s20 = inlined_call_operand.vmem [shape: bf16[1,128], index: 20, kind: input, shape index: {}]
  %s21 = inlined_call_operand.vmem [shape: bf16[1,128], index: 21, kind: input, shape index: {}]
  %s22 = inlined_call_operand.vmem [shape: f32[2,24,128], index: 22, kind: output, shape index: {}]
  %s23 = sld [smem:[#allocation0]]
  $region141: #{conformer_layer_forward.3} parent=0
    _
  %s25 = ssub.s32 1, %s23
  %s26 = scalar_select 0, %s25, %s23
  $region1: #{conformer_layer_forward.3} parent=0
    #allocation2 [shape = 'u8[32768]{0}', space=vmem, size = 0x8000, scoped, tag = 'input window, operand 2, single buffered']
    #allocation3 [shape = 's32[2]{0}', space=sflag, size = 0x8, scoped, tag = 'scoped memory for conformer_layer_forward.3']
    #allocation4 [shape = 'u8[65536]{0}', space=vmem, size = 0x10000, scoped, tag = 'input window, operand 6, single buffered']
    #allocation5 [shape = 's32[1]{0}', space=sflag, size = 0x4, scoped, tag = 'scoped memory for conformer_layer_forward.3']
    #allocation6 [shape = 'u8[32768]{0}', space=vmem, size = 0x8000, scoped, tag = 'input window, operand 12, single buffered']
    #allocation7 [shape = 'u8[65536]{0}', space=vmem, size = 0x10000, scoped, tag = 'input window, operand 16, single buffered']
    #allocation8 [shape = 's32[1]{0}', space=sflag, size = 0x4, scoped, tag = 'scoped memory for conformer_layer_forward.3']
    #allocation9 [shape = 'u8[65536]{0}', space=vmem, size = 0x10000, scoped, tag = 'input window, operand 18, single buffered']
    %27 = vsyncpa [#allocation3], 0
    %28 = vsyncpa [#allocation5], 0
    %29 = vsyncpa [#allocation8], 0
    loop: start=0, step=1, limit=4
    $region2: #{conformer_layer_forward.3} parent=1 // loop_pre_header
      _
    $region3: #{conformer_layer_forward.3} parent=1 // loop_header
      %s31 = sphi 0, %s35
      %p32 = scmp.ge.s32.totalorder %s31, 4
      %s41 = sphi 0, %s43
      %s44 = sphi 0, %s41
      %s45 = sphi 0, %s44
      %s61 = sphi 0, %s45
      %s67 = sphi 0, %s69
      %s70 = sphi 0, %s67
      %s71 = sphi 0, %s70
      %s87 = sphi 0, %s71
      %s91 = sphi 0, %s91
      %s93 = sphi 0, %s91
      %s94 = sphi 0, %s93
      %s108 = sphi 0, %s94
      %s112 = sphi 0, %s112
      %s114 = sphi 0, %s112
      %s115 = sphi 0, %s114
      %s129 = sphi 0, %s115
      %s133 = sphi 0, %s133
      %s135 = sphi 0, %s133
      %s136 = sphi 0, %s135
      %s150 = sphi 0, %s136
      %s154 = sphi 0, %s154
      %s156 = sphi 0, %s154
      %s157 = sphi 0, %s156
      %s171 = sphi 0, %s157
      %s175 = sphi 0, %s175
      %s177 = sphi 0, %s175
      %s178 = sphi 0, %s177
      %s192 = sphi 0, %s178
      %s196 = sphi 0, %s196
      %s198 = sphi 0, %s196
      %s199 = sphi 0, %s198
      %s213 = sphi 0, %s199
      %s217 = sphi 0, %s217
      %s219 = sphi 0, %s217
      %s220 = sphi 0, %s219
      %s234 = sphi 0, %s220
      %s238 = sphi 0, %s238
      %s240 = sphi 0, %s238
      %s241 = sphi 0, %s240
      %s255 = sphi 0, %s241
      %s259 = sphi 0, %s259
      %s261 = sphi 0, %s259
      %s262 = sphi 0, %s261
      %s276 = sphi 0, %s262
      %s280 = sphi 0, %s280
      %s282 = sphi 0, %s280
      %s283 = sphi 0, %s282
      %s297 = sphi 0, %s283
      %s301 = sphi 0, %s301
      %s303 = sphi 0, %s301
      %s304 = sphi 0, %s303
      %s318 = sphi 0, %s304
      %s322 = sphi 0, %s322
      %s324 = sphi 0, %s322
      %s325 = sphi 0, %s324
      %s339 = sphi 0, %s325
      %s343 = sphi 0, %s343
      %s345 = sphi 0, %s343
      %s346 = sphi 0, %s345
      %s360 = sphi 0, %s346
      %s364 = sphi 0, %s364
      %s366 = sphi 0, %s364
      %s367 = sphi 0, %s366
      %s381 = sphi 0, %s367
      %s385 = sphi 0, %s385
      %s387 = sphi 0, %s385
      %s388 = sphi 0, %s387
      %s402 = sphi 0, %s388
      %s406 = sphi 0, %s406
      %s408 = sphi 0, %s406
      %s409 = sphi 0, %s408
      %s423 = sphi 0, %s409
      %s427 = sphi 0, %s427
      %s429 = sphi 0, %s427
      %s430 = sphi 0, %s429
      %s444 = sphi 0, %s430
      %s448 = sphi 0, %s448
      %s450 = sphi 0, %s448
      %s451 = sphi 0, %s450
      %s465 = sphi 0, %s451
      %s469 = sphi 0, %s469
      %s471 = sphi 0, %s469
      %s472 = sphi 0, %s471
      %s486 = sphi 0, %s472
      %s490 = sphi 0, %s490
      %s492 = sphi 0, %s490
      %s493 = sphi 0, %s492
      %s507 = sphi 0, %s493
      %s513 = sphi 0, %s515
      %s516 = sphi 0, %s513
      %s517 = sphi 0, %s516
      %s533 = sphi 0, %s517
    $region4: #{conformer_layer_forward.3} parent=1 // loop_header_branch
      %34 = sbr.rel (%p32) target = $region8
    $region5: #{conformer_layer_forward.3} parent=1 // loop_body
      %s36 = ssub.s32 %s31, 1
      %s37 = ssub.s32 %s31, 2
      %s38 = sadd.s32 %s31, 1
      %s39 = ssub.s32 %s31, %s38
      %p40 = scmp.eq.s32.totalorder %s39, 0
      %s42 = sadd.s32 %s41, 1
      %s43 = scalar_select %p40, %s41, %s42
      %p46 = pneg %p40
      %p47 = scmp.eq.s32.totalorder %s31, 1
      %p48 = por %p46, %p47
      %p49 = scmp.ne.s32.totalorder %s41, %s44
      %p50 = scmp.eq.s32.totalorder %s31, 0
      %p51 = por %p49, %p50
      %p52 = scmp.ne.s32.totalorder %s41, %s44
      %p53 = scmp.eq.s32.totalorder %s36, 1
      %p54 = por %p52, %p53
      %p55 = scmp.ne.s32.totalorder %s44, %s45
      %p56 = scmp.eq.s32.totalorder %s36, 0
      %p57 = por %p55, %p56
      %p58 = scmp.ne.s32.totalorder %s44, %s45
      %p59 = scmp.eq.s32.totalorder %s37, 1
      %p60 = por %p58, %p59
      %p62 = scmp.ne.s32.totalorder %s45, %s61
      %p63 = scmp.eq.s32.totalorder %s37, 0
      %p64 = por %p62, %p63
      %s65 = ssub.s32 %s31, %s38
      %p66 = scmp.eq.s32.totalorder %s65, 0
      %s68 = sadd.s32 %s67, 1
      %s69 = scalar_select %p66, %s67, %s68
      %p72 = pneg %p66
      %p73 = scmp.eq.s32.totalorder %s31, 1
      %p74 = por %p72, %p73
      %p75 = scmp.ne.s32.totalorder %s67, %s70
      %p76 = scmp.eq.s32.totalorder %s31, 0
      %p77 = por %p75, %p76
      %p78 = scmp.ne.s32.totalorder %s67, %s70
      %p79 = scmp.eq.s32.totalorder %s36, 1
      %p80 = por %p78, %p79
      %p81 = scmp.ne.s32.totalorder %s70, %s71
      %p82 = scmp.eq.s32.totalorder %s36, 0
      %p83 = por %p81, %p82
      %p84 = scmp.ne.s32.totalorder %s70, %s71
      %p85 = scmp.eq.s32.totalorder %s37, 1
      %p86 = por %p84, %p85
      %p88 = scmp.ne.s32.totalorder %s71, %s87
      %p89 = scmp.eq.s32.totalorder %s37, 0
      %p90 = por %p88, %p89
      %s92 = sadd.s32 %s91, 1
      %p95 = scmp.eq.s32.totalorder %s31, 1
      %p96 = scmp.ne.s32.totalorder %s91, %s93
      %p97 = scmp.eq.s32.totalorder %s31, 0
      %p98 = por %p96, %p97
      %p99 = scmp.ne.s32.totalorder %s91, %s93
      %p100 = scmp.eq.s32.totalorder %s36, 1
      %p101 = por %p99, %p100
      %p102 = scmp.ne.s32.totalorder %s93, %s94
      %p103 = scmp.eq.s32.totalorder %s36, 0
      %p104 = por %p102, %p103
      %p105 = scmp.ne.s32.totalorder %s93, %s94
      %p106 = scmp.eq.s32.totalorder %s37, 1
      %p107 = por %p105, %p106
      %p109 = scmp.ne.s32.totalorder %s94, %s108
      %p110 = scmp.eq.s32.totalorder %s37, 0
      %p111 = por %p109, %p110
      %s113 = sadd.s32 %s112, 1
      %p116 = scmp.eq.s32.totalorder %s31, 1
      %p117 = scmp.ne.s32.totalorder %s112, %s114
      %p118 = scmp.eq.s32.totalorder %s31, 0
      %p119 = por %p117, %p118
      %p120 = scmp.ne.s32.totalorder %s112, %s114
      %p121 = scmp.eq.s32.totalorder %s36, 1
      %p122 = por %p120, %p121
      %p123 = scmp.ne.s32.totalorder %s114, %s115
      %p124 = scmp.eq.s32.totalorder %s36, 0
      %p125 = por %p123, %p124
      %p126 = scmp.ne.s32.totalorder %s114, %s115
      %p127 = scmp.eq.s32.totalorder %s37, 1
      %p128 = por %p126, %p127
      %p130 = scmp.ne.s32.totalorder %s115, %s129
      %p131 = scmp.eq.s32.totalorder %s37, 0
      %p132 = por %p130, %p131
      %s134 = sadd.s32 %s133, 1
      %p137 = scmp.eq.s32.totalorder %s31, 1
      %p138 = scmp.ne.s32.totalorder %s133, %s135
      %p139 = scmp.eq.s32.totalorder %s31, 0
      %p140 = por %p138, %p139
      %p141 = scmp.ne.s32.totalorder %s133, %s135
      %p142 = scmp.eq.s32.totalorder %s36, 1
      %p143 = por %p141, %p142
      %p144 = scmp.ne.s32.totalorder %s135, %s136
      %p145 = scmp.eq.s32.totalorder %s36, 0
      %p146 = por %p144, %p145
      %p147 = scmp.ne.s32.totalorder %s135, %s136
      %p148 = scmp.eq.s32.totalorder %s37, 1
      %p149 = por %p147, %p148
      %p151 = scmp.ne.s32.totalorder %s136, %s150
      %p152 = scmp.eq.s32.totalorder %s37, 0
      %p153 = por %p151, %p152
      %s155 = sadd.s32 %s154, 1
      %p158 = scmp.eq.s32.totalorder %s31, 1
      %p159 = scmp.ne.s32.totalorder %s154, %s156
      %p160 = scmp.eq.s32.totalorder %s31, 0
      %p161 = por %p159, %p160
      %p162 = scmp.ne.s32.totalorder %s154, %s156
      %p163 = scmp.eq.s32.totalorder %s36, 1
      %p164 = por %p162, %p163
      %p165 = scmp.ne.s32.totalorder %s156, %s157
      %p166 = scmp.eq.s32.totalorder %s36, 0
      %p167 = por %p165, %p166
      %p168 = scmp.ne.s32.totalorder %s156, %s157
      %p169 = scmp.eq.s32.totalorder %s37, 1
      %p170 = por %p168, %p169
      %p172 = scmp.ne.s32.totalorder %s157, %s171
      %p173 = scmp.eq.s32.totalorder %s37, 0
      %p174 = por %p172, %p173
      %s176 = sadd.s32 %s175, 1
      %p179 = scmp.eq.s32.totalorder %s31, 1
      %p180 = scmp.ne.s32.totalorder %s175, %s177
      %p181 = scmp.eq.s32.totalorder %s31, 0
      %p182 = por %p180, %p181
      %p183 = scmp.ne.s32.totalorder %s175, %s177
      %p184 = scmp.eq.s32.totalorder %s36, 1
      %p185 = por %p183, %p184
      %p186 = scmp.ne.s32.totalorder %s177, %s178
      %p187 = scmp.eq.s32.totalorder %s36, 0
      %p188 = por %p186, %p187
      %p189 = scmp.ne.s32.totalorder %s177, %s178
      %p190 = scmp.eq.s32.totalorder %s37, 1
      %p191 = por %p189, %p190
      %p193 = scmp.ne.s32.totalorder %s178, %s192
      %p194 = scmp.eq.s32.totalorder %s37, 0
      %p195 = por %p193, %p194
      %s197 = sadd.s32 %s196, 1
      %p200 = scmp.eq.s32.totalorder %s31, 1
      %p201 = scmp.ne.s32.totalorder %s196, %s198
      %p202 = scmp.eq.s32.totalorder %s31, 0
      %p203 = por %p201, %p202
      %p204 = scmp.ne.s32.totalorder %s196, %s198
      %p205 = scmp.eq.s32.totalorder %s36, 1
      %p206 = por %p204, %p205
      %p207 = scmp.ne.s32.totalorder %s198, %s199
      %p208 = scmp.eq.s32.totalorder %s36, 0
      %p209 = por %p207, %p208
      %p210 = scmp.ne.s32.totalorder %s198, %s199
      %p211 = scmp.eq.s32.totalorder %s37, 1
      %p212 = por %p210, %p211
      %p214 = scmp.ne.s32.totalorder %s199, %s213
      %p215 = scmp.eq.s32.totalorder %s37, 0
      %p216 = por %p214, %p215
      %s218 = sadd.s32 %s217, 1
      %p221 = scmp.eq.s32.totalorder %s31, 1
      %p222 = scmp.ne.s32.totalorder %s217, %s219
      %p223 = scmp.eq.s32.totalorder %s31, 0
      %p224 = por %p222, %p223
      %p225 = scmp.ne.s32.totalorder %s217, %s219
      %p226 = scmp.eq.s32.totalorder %s36, 1
      %p227 = por %p225, %p226
      %p228 = scmp.ne.s32.totalorder %s219, %s220
      %p229 = scmp.eq.s32.totalorder %s36, 0
      %p230 = por %p228, %p229
      %p231 = scmp.ne.s32.totalorder %s219, %s220
      %p232 = scmp.eq.s32.totalorder %s37, 1
      %p233 = por %p231, %p232
      %p235 = scmp.ne.s32.totalorder %s220, %s234
      %p236 = scmp.eq.s32.totalorder %s37, 0
      %p237 = por %p235, %p236
      %s239 = sadd.s32 %s238, 1
      %p242 = scmp.eq.s32.totalorder %s31, 1
      %p243 = scmp.ne.s32.totalorder %s238, %s240
      %p244 = scmp.eq.s32.totalorder %s31, 0
      %p245 = por %p243, %p244
      %p246 = scmp.ne.s32.totalorder %s238, %s240
      %p247 = scmp.eq.s32.totalorder %s36, 1
      %p248 = por %p246, %p247
      %p249 = scmp.ne.s32.totalorder %s240, %s241
      %p250 = scmp.eq.s32.totalorder %s36, 0
      %p251 = por %p249, %p250
      %p252 = scmp.ne.s32.totalorder %s240, %s241
      %p253 = scmp.eq.s32.totalorder %s37, 1
      %p254 = por %p252, %p253
      %p256 = scmp.ne.s32.totalorder %s241, %s255
      %p257 = scmp.eq.s32.totalorder %s37, 0
      %p258 = por %p256, %p257
      %s260 = sadd.s32 %s259, 1
      %p263 = scmp.eq.s32.totalorder %s31, 1
      %p264 = scmp.ne.s32.totalorder %s259, %s261
      %p265 = scmp.eq.s32.totalorder %s31, 0
      %p266 = por %p264, %p265
      %p267 = scmp.ne.s32.totalorder %s259, %s261
      %p268 = scmp.eq.s32.totalorder %s36, 1
      %p269 = por %p267, %p268
      %p270 = scmp.ne.s32.totalorder %s261, %s262
      %p271 = scmp.eq.s32.totalorder %s36, 0
      %p272 = por %p270, %p271
      %p273 = scmp.ne.s32.totalorder %s261, %s262
      %p274 = scmp.eq.s32.totalorder %s37, 1
      %p275 = por %p273, %p274
      %p277 = scmp.ne.s32.totalorder %s262, %s276
      %p278 = scmp.eq.s32.totalorder %s37, 0
      %p279 = por %p277, %p278
      %s281 = sadd.s32 %s280, 1
      %p284 = scmp.eq.s32.totalorder %s31, 1
      %p285 = scmp.ne.s32.totalorder %s280, %s282
      %p286 = scmp.eq.s32.totalorder %s31, 0
      %p287 = por %p285, %p286
      %p288 = scmp.ne.s32.totalorder %s280, %s282
      %p289 = scmp.eq.s32.totalorder %s36, 1
      %p290 = por %p288, %p289
      %p291 = scmp.ne.s32.totalorder %s282, %s283
      %p292 = scmp.eq.s32.totalorder %s36, 0
      %p293 = por %p291, %p292
      %p294 = scmp.ne.s32.totalorder %s282, %s283
      %p295 = scmp.eq.s32.totalorder %s37, 1
      %p296 = por %p294, %p295
      %p298 = scmp.ne.s32.totalorder %s283, %s297
      %p299 = scmp.eq.s32.totalorder %s37, 0
      %p300 = por %p298, %p299
      %s302 = sadd.s32 %s301, 1
      %p305 = scmp.eq.s32.totalorder %s31, 1
      %p306 = scmp.ne.s32.totalorder %s301, %s303
      %p307 = scmp.eq.s32.totalorder %s31, 0
      %p308 = por %p306, %p307
      %p309 = scmp.ne.s32.totalorder %s301, %s303
      %p310 = scmp.eq.s32.totalorder %s36, 1
      %p311 = por %p309, %p310
      %p312 = scmp.ne.s32.totalorder %s303, %s304
      %p313 = scmp.eq.s32.totalorder %s36, 0
      %p314 = por %p312, %p313
      %p315 = scmp.ne.s32.totalorder %s303, %s304
      %p316 = scmp.eq.s32.totalorder %s37, 1
      %p317 = por %p315, %p316
      %p319 = scmp.ne.s32.totalorder %s304, %s318
      %p320 = scmp.eq.s32.totalorder %s37, 0
      %p321 = por %p319, %p320
      %s323 = sadd.s32 %s322, 1
      %p326 = scmp.eq.s32.totalorder %s31, 1
      %p327 = scmp.ne.s32.totalorder %s322, %s324
      %p328 = scmp.eq.s32.totalorder %s31, 0
      %p329 = por %p327, %p328
      %p330 = scmp.ne.s32.totalorder %s322, %s324
      %p331 = scmp.eq.s32.totalorder %s36, 1
      %p332 = por %p330, %p331
      %p333 = scmp.ne.s32.totalorder %s324, %s325
      %p334 = scmp.eq.s32.totalorder %s36, 0
      %p335 = por %p333, %p334
      %p336 = scmp.ne.s32.totalorder %s324, %s325
      %p337 = scmp.eq.s32.totalorder %s37, 1
      %p338 = por %p336, %p337
      %p340 = scmp.ne.s32.totalorder %s325, %s339
      %p341 = scmp.eq.s32.totalorder %s37, 0
      %p342 = por %p340, %p341
      %s344 = sadd.s32 %s343, 1
      %p347 = scmp.eq.s32.totalorder %s31, 1
      %p348 = scmp.ne.s32.totalorder %s343, %s345
      %p349 = scmp.eq.s32.totalorder %s31, 0
      %p350 = por %p348, %p349
      %p351 = scmp.ne.s32.totalorder %s343, %s345
      %p352 = scmp.eq.s32.totalorder %s36, 1
      %p353 = por %p351, %p352
      %p354 = scmp.ne.s32.totalorder %s345, %s346
      %p355 = scmp.eq.s32.totalorder %s36, 0
      %p356 = por %p354, %p355
      %p357 = scmp.ne.s32.totalorder %s345, %s346
      %p358 = scmp.eq.s32.totalorder %s37, 1
      %p359 = por %p357, %p358
      %p361 = scmp.ne.s32.totalorder %s346, %s360
      %p362 = scmp.eq.s32.totalorder %s37, 0
      %p363 = por %p361, %p362
      %s365 = sadd.s32 %s364, 1
      %p368 = scmp.eq.s32.totalorder %s31, 1
      %p369 = scmp.ne.s32.totalorder %s364, %s366
      %p370 = scmp.eq.s32.totalorder %s31, 0
      %p371 = por %p369, %p370
      %p372 = scmp.ne.s32.totalorder %s364, %s366
      %p373 = scmp.eq.s32.totalorder %s36, 1
      %p374 = por %p372, %p373
      %p375 = scmp.ne.s32.totalorder %s366, %s367
      %p376 = scmp.eq.s32.totalorder %s36, 0
      %p377 = por %p375, %p376
      %p378 = scmp.ne.s32.totalorder %s366, %s367
      %p379 = scmp.eq.s32.totalorder %s37, 1
      %p380 = por %p378, %p379
      %p382 = scmp.ne.s32.totalorder %s367, %s381
      %p383 = scmp.eq.s32.totalorder %s37, 0
      %p384 = por %p382, %p383
      %s386 = sadd.s32 %s385, 1
      %p389 = scmp.eq.s32.totalorder %s31, 1
      %p390 = scmp.ne.s32.totalorder %s385, %s387
      %p391 = scmp.eq.s32.totalorder %s31, 0
      %p392 = por %p390, %p391
      %p393 = scmp.ne.s32.totalorder %s385, %s387
      %p394 = scmp.eq.s32.totalorder %s36, 1
      %p395 = por %p393, %p394
      %p396 = scmp.ne.s32.totalorder %s387, %s388
      %p397 = scmp.eq.s32.totalorder %s36, 0
      %p398 = por %p396, %p397
      %p399 = scmp.ne.s32.totalorder %s387, %s388
      %p400 = scmp.eq.s32.totalorder %s37, 1
      %p401 = por %p399, %p400
      %p403 = scmp.ne.s32.totalorder %s388, %s402
      %p404 = scmp.eq.s32.totalorder %s37, 0
      %p405 = por %p403, %p404
      %s407 = sadd.s32 %s406, 1
      %p410 = scmp.eq.s32.totalorder %s31, 1
      %p411 = scmp.ne.s32.totalorder %s406, %s408
      %p412 = scmp.eq.s32.totalorder %s31, 0
      %p413 = por %p411, %p412
      %p414 = scmp.ne.s32.totalorder %s406, %s408
      %p415 = scmp.eq.s32.totalorder %s36, 1
      %p416 = por %p414, %p415
      %p417 = scmp.ne.s32.totalorder %s408, %s409
      %p418 = scmp.eq.s32.totalorder %s36, 0
      %p419 = por %p417, %p418
      %p420 = scmp.ne.s32.totalorder %s408, %s409
      %p421 = scmp.eq.s32.totalorder %s37, 1
      %p422 = por %p420, %p421
      %p424 = scmp.ne.s32.totalorder %s409, %s423
      %p425 = scmp.eq.s32.totalorder %s37, 0
      %p426 = por %p424, %p425
      %s428 = sadd.s32 %s427, 1
      %p431 = scmp.eq.s32.totalorder %s31, 1
      %p432 = scmp.ne.s32.totalorder %s427, %s429
      %p433 = scmp.eq.s32.totalorder %s31, 0
      %p434 = por %p432, %p433
      %p435 = scmp.ne.s32.totalorder %s427, %s429
      %p436 = scmp.eq.s32.totalorder %s36, 1
      %p437 = por %p435, %p436
      %p438 = scmp.ne.s32.totalorder %s429, %s430
      %p439 = scmp.eq.s32.totalorder %s36, 0
      %p440 = por %p438, %p439
      %p441 = scmp.ne.s32.totalorder %s429, %s430
      %p442 = scmp.eq.s32.totalorder %s37, 1
      %p443 = por %p441, %p442
      %p445 = scmp.ne.s32.totalorder %s430, %s444
      %p446 = scmp.eq.s32.totalorder %s37, 0
      %p447 = por %p445, %p446
      %s449 = sadd.s32 %s448, 1
      %p452 = scmp.eq.s32.totalorder %s31, 1
      %p453 = scmp.ne.s32.totalorder %s448, %s450
      %p454 = scmp.eq.s32.totalorder %s31, 0
      %p455 = por %p453, %p454
      %p456 = scmp.ne.s32.totalorder %s448, %s450
      %p457 = scmp.eq.s32.totalorder %s36, 1
      %p458 = por %p456, %p457
      %p459 = scmp.ne.s32.totalorder %s450, %s451
      %p460 = scmp.eq.s32.totalorder %s36, 0
      %p461 = por %p459, %p460
      %p462 = scmp.ne.s32.totalorder %s450, %s451
      %p463 = scmp.eq.s32.totalorder %s37, 1
      %p464 = por %p462, %p463
      %p466 = scmp.ne.s32.totalorder %s451, %s465
      %p467 = scmp.eq.s32.totalorder %s37, 0
      %p468 = por %p466, %p467
      %s470 = sadd.s32 %s469, 1
      %p473 = scmp.eq.s32.totalorder %s31, 1
      %p474 = scmp.ne.s32.totalorder %s469, %s471
      %p475 = scmp.eq.s32.totalorder %s31, 0
      %p476 = por %p474, %p475
      %p477 = scmp.ne.s32.totalorder %s469, %s471
      %p478 = scmp.eq.s32.totalorder %s36, 1
      %p479 = por %p477, %p478
      %p480 = scmp.ne.s32.totalorder %s471, %s472
      %p481 = scmp.eq.s32.totalorder %s36, 0
      %p482 = por %p480, %p481
      %p483 = scmp.ne.s32.totalorder %s471, %s472
      %p484 = scmp.eq.s32.totalorder %s37, 1
      %p485 = por %p483, %p484
      %p487 = scmp.ne.s32.totalorder %s472, %s486
      %p488 = scmp.eq.s32.totalorder %s37, 0
      %p489 = por %p487, %p488
      %s491 = sadd.s32 %s490, 1
      %p494 = scmp.eq.s32.totalorder %s31, 1
      %p495 = scmp.ne.s32.totalorder %s490, %s492
      %p496 = scmp.eq.s32.totalorder %s31, 0
      %p497 = por %p495, %p496
      %p498 = scmp.ne.s32.totalorder %s490, %s492
      %p499 = scmp.eq.s32.totalorder %s36, 1
      %p500 = por %p498, %p499
      %p501 = scmp.ne.s32.totalorder %s492, %s493
      %p502 = scmp.eq.s32.totalorder %s36, 0
      %p503 = por %p501, %p502
      %p504 = scmp.ne.s32.totalorder %s492, %s493
      %p505 = scmp.eq.s32.totalorder %s37, 1
      %p506 = por %p504, %p505
      %p508 = scmp.ne.s32.totalorder %s493, %s507
      %p509 = scmp.eq.s32.totalorder %s37, 0
      %p510 = por %p508, %p509
      %s511 = ssub.s32 %s31, %s38
      %p512 = scmp.eq.s32.totalorder %s511, 0
      %s514 = sadd.s32 %s513, 1
      %s515 = scalar_select %p512, %s513, %s514
      %p518 = pneg %p512
      %p519 = scmp.eq.s32.totalorder %s31, 1
      %p520 = por %p518, %p519
      %p521 = scmp.ne.s32.totalorder %s513, %s516
      %p522 = scmp.eq.s32.totalorder %s31, 0
      %p523 = por %p521, %p522
      %p524 = scmp.ne.s32.totalorder %s513, %s516
      %p525 = scmp.eq.s32.totalorder %s36, 1
      %p526 = por %p524, %p525
      %p527 = scmp.ne.s32.totalorder %s516, %s517
      %p528 = scmp.eq.s32.totalorder %s36, 0
      %p529 = por %p527, %p528
      %p530 = scmp.ne.s32.totalorder %s516, %s517
      %p531 = scmp.eq.s32.totalorder %s37, 1
      %p532 = por %p530, %p531
      %p534 = scmp.ne.s32.totalorder %s517, %s533
      %p535 = scmp.eq.s32.totalorder %s37, 0
      %p536 = por %p534, %p535
      %p537 = scmp.le.s32.totalorder 1, %s31
      %p538 = scmp.lt.s32.totalorder %s31, 3
      %p539 = pnand %p537, %p538
      %p540 = pneg %p539
      // Predicated region
      $region9: #{conformer_layer_forward.3} parent=5 // pred_check
        _
      $region10: #{conformer_layer_forward.3} parent=5 // pred_check_branch
        %542 = sbr.rel (%p539) target = $region12
      $region11: #{conformer_layer_forward.3} parent=5 // pred_region
        %s543 = ssub.s32 %s31, 1
        // Predicated region
        $region13: #{conformer_layer_forward.3} parent=11 // pred_check
          %p544 = pneg %p104
        $region14: #{conformer_layer_forward.3} parent=11 // pred_check_branch
          %546 = sbr.rel (%p544) target = $region16
        $region15: #{conformer_layer_forward.3} parent=11 // pred_region
          %548 = vsyncadd [#allocation3], 0
          %s549 = sshll.u32 %s2, 4
          %s550 = int_to_ptr.hbm [resolvable:$true] %s549
          %s551 = sshll.u32 [#allocation2], 4
          %s552 = int_to_ptr.vmem [resolvable:$true] %s551
          %557 = dma.hbm_to_vmem [thread:$0]  %s550, 1024, %s552, [#allocation3], 64, 64, 4
        $region16: #{conformer_layer_forward.3} parent=11 // pred_fallthru
          _
        // Predicated region
        $region17: #{conformer_layer_forward.3} parent=11 // pred_check
          %p558 = pneg %p125
        $region18: #{conformer_layer_forward.3} parent=11 // pred_check_branch
          %560 = sbr.rel (%p558) target = $region20
        $region19: #{conformer_layer_forward.3} parent=11 // pred_region
          _
        $region20: #{conformer_layer_forward.3} parent=11 // pred_fallthru
          _
        // Predicated region
        $region21: #{conformer_layer_forward.3} parent=11 // pred_check
          %p561 = pneg %p146
        $region22: #{conformer_layer_forward.3} parent=11 // pred_check_branch
          %563 = sbr.rel (%p561) target = $region24
        $region23: #{conformer_layer_forward.3} parent=11 // pred_region
          _
        $region24: #{conformer_layer_forward.3} parent=11 // pred_fallthru
          _
        // Predicated region
        $region25: #{conformer_layer_forward.3} parent=11 // pred_check
          %p564 = pneg %p167
        $region26: #{conformer_layer_forward.3} parent=11 // pred_check_branch
          %566 = sbr.rel (%p564) target = $region28
        $region27: #{conformer_layer_forward.3} parent=11 // pred_region
          _
        $region28: #{conformer_layer_forward.3} parent=11 // pred_fallthru
          _
        // Predicated region
        $region29: #{conformer_layer_forward.3} parent=11 // pred_check
          %p567 = pneg %p188
        $region30: #{conformer_layer_forward.3} parent=11 // pred_check_branch
          %569 = sbr.rel (%p567) target = $region32
        $region31: #{conformer_layer_forward.3} parent=11 // pred_region
          %571 = vsyncadd [#allocation5], 0
          %s572 = sshll.u32 %s6, 4
          %s573 = int_to_ptr.hbm [resolvable:$true] %s572
          %s574 = sshll.u32 [#allocation4], 4
          %s575 = int_to_ptr.vmem [resolvable:$true] %s574
          %580 = dma.hbm_to_vmem [thread:$0]  %s573, 2048, %s575, [#allocation5], 128, 128, 8
        $region32: #{conformer_layer_forward.3} parent=11 // pred_fallthru
          _
        // Predicated region
        $region33: #{conformer_layer_forward.3} parent=11 // pred_check
          %p581 = pneg %p209
        $region34: #{conformer_layer_forward.3} parent=11 // pred_check_branch
          %583 = sbr.rel (%p581) target = $region36
        $region35: #{conformer_layer_forward.3} parent=11 // pred_region
          _
        $region36: #{conformer_layer_forward.3} parent=11 // pred_fallthru
          _
        // Predicated region
        $region37: #{conformer_layer_forward.3} parent=11 // pred_check
          %p584 = pneg %p230
        $region38: #{conformer_layer_forward.3} parent=11 // pred_check_branch
          %586 = sbr.rel (%p584) target = $region40
        $region39: #{conformer_layer_forward.3} parent=11 // pred_region
          _
        $region40: #{conformer_layer_forward.3} parent=11 // pred_fallthru
          _
        // Predicated region
        $region41: #{conformer_layer_forward.3} parent=11 // pred_check
          %p587 = pneg %p251
        $region42: #{conformer_layer_forward.3} parent=11 // pred_check_branch
          %589 = sbr.rel (%p587) target = $region44
        $region43: #{conformer_layer_forward.3} parent=11 // pred_region
          _
        $region44: #{conformer_layer_forward.3} parent=11 // pred_fallthru
          _
        // Predicated region
        $region45: #{conformer_layer_forward.3} parent=11 // pred_check
          %p590 = pneg %p272
        $region46: #{conformer_layer_forward.3} parent=11 // pred_check_branch
          %592 = sbr.rel (%p590) target = $region48
        $region47: #{conformer_layer_forward.3} parent=11 // pred_region
          _
        $region48: #{conformer_layer_forward.3} parent=11 // pred_fallthru
          _
        // Predicated region
        $region49: #{conformer_layer_forward.3} parent=11 // pred_check
          %p593 = pneg %p293
        $region50: #{conformer_layer_forward.3} parent=11 // pred_check_branch
          %595 = sbr.rel (%p593) target = $region52
        $region51: #{conformer_layer_forward.3} parent=11 // pred_region
          _
        $region52: #{conformer_layer_forward.3} parent=11 // pred_fallthru
          _
        // Predicated region
        $region53: #{conformer_layer_forward.3} parent=11 // pred_check
          %p596 = pneg %p314
        $region54: #{conformer_layer_forward.3} parent=11 // pred_check_branch
          %598 = sbr.rel (%p596) target = $region56
        $region55: #{conformer_layer_forward.3} parent=11 // pred_region
          %600 = vsyncadd [#allocation5], 0
          %s601 = sshll.u32 %s12, 4
          %s602 = int_to_ptr.hbm [resolvable:$true] %s601
          %s603 = sshll.u32 [#allocation6], 4
          %s604 = int_to_ptr.vmem [resolvable:$true] %s603
          %609 = dma.hbm_to_vmem [thread:$0]  %s602, 1024, %s604, [#allocation5], 64, 64, 4
        $region56: #{conformer_layer_forward.3} parent=11 // pred_fallthru
          _
        // Predicated region
        $region57: #{conformer_layer_forward.3} parent=11 // pred_check
          %p610 = pneg %p335
        $region58: #{conformer_layer_forward.3} parent=11 // pred_check_branch
          %612 = sbr.rel (%p610) target = $region60
        $region59: #{conformer_layer_forward.3} parent=11 // pred_region
          _
        $region60: #{conformer_layer_forward.3} parent=11 // pred_fallthru
          _
        // Predicated region
        $region61: #{conformer_layer_forward.3} parent=11 // pred_check
          %p613 = pneg %p356
        $region62: #{conformer_layer_forward.3} parent=11 // pred_check_branch
          %615 = sbr.rel (%p613) target = $region64
        $region63: #{conformer_layer_forward.3} parent=11 // pred_region
          _
        $region64: #{conformer_layer_forward.3} parent=11 // pred_fallthru
          _
        // Predicated region
        $region65: #{conformer_layer_forward.3} parent=11 // pred_check
          %p616 = pneg %p377
        $region66: #{conformer_layer_forward.3} parent=11 // pred_check_branch
          %618 = sbr.rel (%p616) target = $region68
        $region67: #{conformer_layer_forward.3} parent=11 // pred_region
          _
        $region68: #{conformer_layer_forward.3} parent=11 // pred_fallthru
          _
        // Predicated region
        $region69: #{conformer_layer_forward.3} parent=11 // pred_check
          %p619 = pneg %p398
        $region70: #{conformer_layer_forward.3} parent=11 // pred_check_branch
          %621 = sbr.rel (%p619) target = $region72
        $region71: #{conformer_layer_forward.3} parent=11 // pred_region
          %623 = vsyncadd [#allocation8], 0
          %s624 = sshll.u32 %s16, 4
          %s625 = int_to_ptr.hbm [resolvable:$true] %s624
          %s626 = sshll.u32 [#allocation7], 4
          %s627 = int_to_ptr.vmem [resolvable:$true] %s626
          %632 = dma.hbm_to_vmem [thread:$0]  %s625, 2048, %s627, [#allocation8], 128, 128, 8
        $region72: #{conformer_layer_forward.3} parent=11 // pred_fallthru
          _
        // Predicated region
        $region73: #{conformer_layer_forward.3} parent=11 // pred_check
          %p633 = pneg %p419
        $region74: #{conformer_layer_forward.3} parent=11 // pred_check_branch
          %635 = sbr.rel (%p633) target = $region76
        $region75: #{conformer_layer_forward.3} parent=11 // pred_region
          _
        $region76: #{conformer_layer_forward.3} parent=11 // pred_fallthru
          _
        // Predicated region
        $region77: #{conformer_layer_forward.3} parent=11 // pred_check
          %p636 = pneg %p440
        $region78: #{conformer_layer_forward.3} parent=11 // pred_check_branch
          %638 = sbr.rel (%p636) target = $region80
        $region79: #{conformer_layer_forward.3} parent=11 // pred_region
          %640 = vsyncadd [#allocation8], 0
          %s641 = sshll.u32 %s18, 4
          %s642 = int_to_ptr.hbm [resolvable:$true] %s641
          %s643 = sshll.u32 [#allocation9], 4
          %s644 = int_to_ptr.vmem [resolvable:$true] %s643
          %649 = dma.hbm_to_vmem [thread:$0]  %s642, 2048, %s644, [#allocation8], 64, 64, 4
        $region80: #{conformer_layer_forward.3} parent=11 // pred_fallthru
          _
        // Predicated region
        $region81: #{conformer_layer_forward.3} parent=11 // pred_check
          %p650 = pneg %p461
        $region82: #{conformer_layer_forward.3} parent=11 // pred_check_branch
          %652 = sbr.rel (%p650) target = $region84
        $region83: #{conformer_layer_forward.3} parent=11 // pred_region
          _
        $region84: #{conformer_layer_forward.3} parent=11 // pred_fallthru
          _
        // Predicated region
        $region85: #{conformer_layer_forward.3} parent=11 // pred_check
          %p653 = pneg %p482
        $region86: #{conformer_layer_forward.3} parent=11 // pred_check_branch
          %655 = sbr.rel (%p653) target = $region88
        $region87: #{conformer_layer_forward.3} parent=11 // pred_region
          _
        $region88: #{conformer_layer_forward.3} parent=11 // pred_fallthru
          _
        // Predicated region
        $region89: #{conformer_layer_forward.3} parent=11 // pred_check
          %p656 = pneg %p503
        $region90: #{conformer_layer_forward.3} parent=11 // pred_check_branch
          %658 = sbr.rel (%p656) target = $region92
        $region91: #{conformer_layer_forward.3} parent=11 // pred_region
          _
        $region92: #{conformer_layer_forward.3} parent=11 // pred_fallthru
          _
      $region12: #{conformer_layer_forward.3} parent=5 // pred_fallthru
        _
      %p659 = scmp.lt.s32.totalorder %s31, 2
      // Predicated region
      $region93: #{conformer_layer_forward.3} parent=5 // pred_check
        %p660 = pneg %p659
      $region94: #{conformer_layer_forward.3} parent=5 // pred_check_branch
        %662 = sbr.rel (%p660) target = $region96
      $region95: #{conformer_layer_forward.3} parent=5 // pred_region
        // Predicated region
        $region97: #{conformer_layer_forward.3} parent=95 // pred_check
          %p663 = pneg %p51
        $region98: #{conformer_layer_forward.3} parent=95 // pred_check_branch
          %665 = sbr.rel (%p663) target = $region100
        $region99: #{conformer_layer_forward.3} parent=95 // pred_region
          %p666 = scmp.lt.s32.totalorder %s31, 1
          %s667 = scalar_select %p666, %s31, 1
          %s668 = smul.addr %s667, 3
          %s669 = smul.addr %s668, 4
          %s670 = scalar_lea.vmem %s0, %s669
        $region100: #{conformer_layer_forward.3} parent=95 // pred_fallthru
          _
        // Predicated region
        $region101: #{conformer_layer_forward.3} parent=95 // pred_check
          %p671 = pneg %p77
        $region102: #{conformer_layer_forward.3} parent=95 // pred_check_branch
          %673 = sbr.rel (%p671) target = $region104
        $region103: #{conformer_layer_forward.3} parent=95 // pred_region
          %p674 = scmp.lt.s32.totalorder %s31, 1
          %s675 = scalar_select %p674, %s31, 1
          %s676 = smul.addr %s675, 9
          %s677 = smul.addr %s676, 4
          %s678 = scalar_lea.vmem %s1, %s677
        $region104: #{conformer_layer_forward.3} parent=95 // pred_fallthru
          _
      $region96: #{conformer_layer_forward.3} parent=5 // pred_fallthru
        _
      %p679 = scmp.le.s32.totalorder 1, %s31
      %p680 = scmp.lt.s32.totalorder %s31, 3
      %p681 = pnand %p679, %p680
      %p682 = pneg %p681
      // Predicated region
      $region105: #{conformer_layer_forward.3} parent=5 // pred_check
        _
      $region106: #{conformer_layer_forward.3} parent=5 // pred_check_branch
        %684 = sbr.rel (%p681) target = $region108
      $region107: #{conformer_layer_forward.3} parent=5 // pred_region
        %s685 = ssub.s32 %s31, 1
        // Predicated region
        $region109: #{conformer_layer_forward.3} parent=107 // pred_check
          %p686 = pneg %p104
        $region110: #{conformer_layer_forward.3} parent=107 // pred_check_branch
          %688 = sbr.rel (%p686) target = $region112
        $region111: #{conformer_layer_forward.3} parent=107 // pred_region
          %690 = dma.done [#allocation3], 1024
        $region112: #{conformer_layer_forward.3} parent=107 // pred_fallthru
          _
        // Predicated region
        $region113: #{conformer_layer_forward.3} parent=107 // pred_check
          %p691 = pneg %p188
        $region114: #{conformer_layer_forward.3} parent=107 // pred_check_branch
          %693 = sbr.rel (%p691) target = $region116
        $region115: #{conformer_layer_forward.3} parent=107 // pred_region
          %695 = dma.done [#allocation5], 2048
        $region116: #{conformer_layer_forward.3} parent=107 // pred_fallthru
          _
        // Predicated region
        $region117: #{conformer_layer_forward.3} parent=107 // pred_check
          %p696 = pneg %p314
        $region118: #{conformer_layer_forward.3} parent=107 // pred_check_branch
          %698 = sbr.rel (%p696) target = $region120
        $region119: #{conformer_layer_forward.3} parent=107 // pred_region
          %700 = dma.done [#allocation5], 1024
        $region120: #{conformer_layer_forward.3} parent=107 // pred_fallthru
          _
        // Predicated region
        $region121: #{conformer_layer_forward.3} parent=107 // pred_check
          %p701 = pneg %p398
        $region122: #{conformer_layer_forward.3} parent=107 // pred_check_branch
          %703 = sbr.rel (%p701) target = $region124
        $region123: #{conformer_layer_forward.3} parent=107 // pred_region
          %705 = dma.done [#allocation8], 2048
        $region124: #{conformer_layer_forward.3} parent=107 // pred_fallthru
          _
        // Predicated region
        $region125: #{conformer_layer_forward.3} parent=107 // pred_check
          %p706 = pneg %p440
        $region126: #{conformer_layer_forward.3} parent=107 // pred_check_branch
          %708 = sbr.rel (%p706) target = $region128
        $region127: #{conformer_layer_forward.3} parent=107 // pred_region
          %710 = dma.done [#allocation8], 2048
        $region128: #{conformer_layer_forward.3} parent=107 // pred_fallthru
          _
        %p711 = scmp.lt.s32.totalorder %s36, 1
        %s712 = scalar_select %p711, %s36, 1
        %s713 = smul.addr %s712, 3
        %s714 = smul.addr %s713, 4
        %s715 = scalar_lea.vmem %s0, %s714
        %p716 = pneg %p57
        %p717 = pneg %p54
        %p718 = scmp.lt.s32.totalorder %s36, 1
        %s719 = scalar_select %p718, %s36, 1
        %s720 = smul.addr %s719, 9
        %s721 = smul.addr %s720, 4
        %s722 = scalar_lea.vmem %s1, %s721
        %p723 = pneg %p83
        %p724 = pneg %p80
        %p725 = pneg %p104
        %p726 = pneg %p101
        %p727 = pneg %p125
        %p728 = pneg %p122
        %p729 = pneg %p146
        %p730 = pneg %p143
        %p731 = pneg %p167
        %p732 = pneg %p164
        %p733 = pneg %p188
        %p734 = pneg %p185
        %p735 = pneg %p209
        %p736 = pneg %p206
        %p737 = pneg %p230
        %p738 = pneg %p227
        %p739 = pneg %p251
        %p740 = pneg %p248
        %p741 = pneg %p272
        %p742 = pneg %p269
        %p743 = pneg %p293
        %p744 = pneg %p290
        %p745 = pneg %p314
        %p746 = pneg %p311
        %p747 = pneg %p335
        %p748 = pneg %p332
        %p749 = pneg %p356
        %p750 = pneg %p353
        %p751 = pneg %p377
        %p752 = pneg %p374
        %p753 = pneg %p398
        %p754 = pneg %p395
        %p755 = pneg %p419
        %p756 = pneg %p416
        %p757 = pneg %p440
        %p758 = pneg %p437
        %p759 = pneg %p461
        %p760 = pneg %p458
        %p761 = pneg %p482
        %p762 = pneg %p479
        %p763 = pneg %p503
        %p764 = pneg %p500
        %p765 = pneg %p529
        %p766 = pneg %p526
        %p767 = scmp.lt.s32.totalorder %s36, 1
        %s768 = scalar_select %p767, %s36, 1
        %s769 = smul.addr %s768, 3
        %s770 = smul.addr %s769, 8
        %s771 = scalar_lea.vmem %s22, %s770
        %p772 = scmp.lt.s32.totalorder %s36, 1
        %s773 = scalar_select %p772, %s36, 1
        %s774 = smul.addr %s773, 3
        %s775 = smul.addr %s774, 4
        %s776 = scalar_lea.vmem %s0, %s775
        %p777 = scmp.lt.s32.totalorder %s36, 1
        %s778 = scalar_select %p777, %s36, 1
        %s779 = smul.addr %s778, 9
        %s780 = smul.addr %s779, 4
        %s781 = scalar_lea.vmem %s1, %s780
        %p782 = scmp.lt.s32.totalorder %s36, 1
        %s783 = scalar_select %p782, %s36, 1
        %s784 = smul.addr %s783, 3
        %s785 = smul.addr %s784, 8
        %s786 = scalar_lea.vmem %s22, %s785
        %v788 = vld [vmem:[%s776] sm:$0xf]
        %v789 = vld [vmem:[%s776 + $0x4] sm:$0xf]
        %v790 = vld [vmem:[%s776 + $0x8] sm:$0xf]
        %v791 = vunpack.c.l.bf16 %v788
        %v792 = vunpack.c.l.bf16 %v789
        %v793 = vunpack.c.l.bf16 %v790
        %v794 = vld [vmem:[%s781] sm:$0xff]
        %v795 = vld [vmem:[%s781 + $0x8] sm:$0xf]
        %v796 = vld [vmem:[%s781 + $0xc] sm:$0xff]
        %v797 = vld [vmem:[%s781 + $0x14] sm:$0xf]
        %v798 = vld [vmem:[%s781 + $0x18] sm:$0xff]
        %v799 = vld [vmem:[%s781 + $0x20] sm:$0xf]
        %v800 = vunpack.c.l.bf16 %v794
        %v801 = vunpack.c.l.bf16 %v796
        %v802 = vunpack.c.l.bf16 %v798
        %v803 = vmul.f32 %v800, 0.17675781
        %v804 = vmul.f32 %v801, 0.17675781
        %v805 = vmul.f32 %v802, 0.17675781
        %v806 = vpack.c.bf16 %v803, %v803
        %v807 = vpack.c.bf16 %v804, %v804
        %v808 = vpack.c.bf16 %v805, %v805
        %812 = vrot.lane.b32.xlu0 %v806, 96
        %v813 = vpop.permute.xlu0 %812
        %814 = vrot.lane.b32.xlu0 %v807, 96
        %v815 = vpop.permute.xlu0 %814
        %816 = vrot.lane.b32.xlu0 %v808, 96
        %v817 = vpop.permute.xlu0 %816
        %818 = vrot.lane.b32.xlu0 %v806, 64
        %v819 = vpop.permute.xlu0 %818
        %820 = vrot.lane.b32.xlu0 %v807, 64
        %v821 = vpop.permute.xlu0 %820
        %822 = vrot.lane.b32.xlu0 %v808, 64
        %v823 = vpop.permute.xlu0 %822
        %824 = vrot.lane.b32.xlu0 %v806, 32
        %v825 = vpop.permute.xlu0 %824
        %826 = vrot.lane.b32.xlu0 %v807, 32
        %v827 = vpop.permute.xlu0 %826
        %828 = vrot.lane.b32.xlu0 %v808, 32
        %v829 = vpop.permute.xlu0 %828
        %v833 = vrot.slane %v794, 4
        %v834 = vrot.slane %v796, 4
        %v835 = vrot.slane %v798, 4
        %836 = vrot.lane.b32.xlu0 %v794, 96
        %v837 = vpop.permute.xlu0 %836
        %838 = vrot.lane.b32.xlu0 %v796, 96
        %v839 = vpop.permute.xlu0 %838
        %840 = vrot.lane.b32.xlu0 %v798, 96
        %v841 = vpop.permute.xlu0 %840
        %v842 = vrot.slane %v837, 4
        %v843 = vrot.slane %v839, 4
        %v844 = vrot.slane %v841, 4
        %845 = vrot.lane.b32.xlu0 %v794, 64
        %v846 = vpop.permute.xlu0 %845
        %847 = vrot.lane.b32.xlu0 %v796, 64
        %v848 = vpop.permute.xlu0 %847
        %849 = vrot.lane.b32.xlu0 %v798, 64
        %v850 = vpop.permute.xlu0 %849
        %v851 = vrot.slane %v846, 4
        %v852 = vrot.slane %v848, 4
        %v853 = vrot.slane %v850, 4
        %854 = vrot.lane.b32.xlu0 %v794, 32
        %v855 = vpop.permute.xlu0 %854
        %856 = vrot.lane.b32.xlu0 %v796, 32
        %v857 = vpop.permute.xlu0 %856
        %858 = vrot.lane.b32.xlu0 %v798, 32
        %v859 = vpop.permute.xlu0 %858
        %v860 = vrot.slane %v855, 4
        %v861 = vrot.slane %v857, 4
        %v862 = vrot.slane %v859, 4
        %866 = vrot.lane.b32.xlu0 %v795, 96
        %v867 = vpop.permute.xlu0 %866
        %868 = vrot.lane.b32.xlu0 %v797, 96
        %v869 = vpop.permute.xlu0 %868
        %870 = vrot.lane.b32.xlu0 %v799, 96
        %v871 = vpop.permute.xlu0 %870
        %872 = vrot.lane.b32.xlu0 %v795, 64
        %v873 = vpop.permute.xlu0 %872
        %874 = vrot.lane.b32.xlu0 %v797, 64
        %v875 = vpop.permute.xlu0 %874
        %876 = vrot.lane.b32.xlu0 %v799, 64
        %v877 = vpop.permute.xlu0 %876
        %878 = vrot.lane.b32.xlu0 %v795, 32
        %v879 = vpop.permute.xlu0 %878
        %880 = vrot.lane.b32.xlu0 %v797, 32
        %v881 = vpop.permute.xlu0 %880
        %882 = vrot.lane.b32.xlu0 %v799, 32
        %v883 = vpop.permute.xlu0 %882
        %v884 = vunpack.c.l.b16 %v833
        %v885 = vunpack.c.l.b16 %v834
        %v886 = vunpack.c.l.b16 %v835
        %v887 = vunpack.c.l.b16 %v842
        %v888 = vunpack.c.l.b16 %v843
        %v889 = vunpack.c.l.b16 %v844
        %v890 = vunpack.c.l.b16 %v851
        %v891 = vunpack.c.l.b16 %v852
        %v892 = vunpack.c.l.b16 %v853
        %v893 = vunpack.c.l.b16 %v860
        %v894 = vunpack.c.l.b16 %v861
        %v895 = vunpack.c.l.b16 %v862
        %v896 = vpack.c.b16 %v885, %v884
        %v897 = vpack.c.b16 %v886, %v886
        %v898 = vpack.c.b16 %v888, %v887
        %v899 = vpack.c.b16 %v889, %v889
        %v900 = vpack.c.b16 %v891, %v890
        %v901 = vpack.c.b16 %v892, %v892
        %v902 = vpack.c.b16 %v894, %v893
        %v903 = vpack.c.b16 %v895, %v895
        %912 = vxpose.xlu0.c.b16.start [1/8] %v896, 128
        %913 = vxpose.xlu0.c.b16.cont [2/8] %v897, 128
        %914 = vxpose.xlu0.c.b16.cont [3/8] 0, 128
        %915 = vxpose.xlu0.c.b16.cont [4/8] 0, 128
        %916 = vxpose.xlu0.c.b16.cont [5/8] 0, 128
        %917 = vxpose.xlu0.c.b16.cont [6/8] 0, 128
        %918 = vxpose.xlu0.c.b16.cont [7/8] 0, 128
        %919 = vxpose.xlu0.c.b16.end [8/8] 0, 128
        %v920 = vpop.trf.xlu0
        %v921 = vpop.trf.xlu0
        %v922 = vpop.trf.xlu0
        %v923 = vpop.trf.xlu0
        %v924 = vpop.trf.xlu0
        %v925 = vpop.trf.xlu0
        %v926 = vpop.trf.xlu0
        %v927 = vpop.trf.xlu0
        %928 = vxpose.xlu0.c.b16.start [1/8] %v898, 128
        %929 = vxpose.xlu0.c.b16.cont [2/8] %v899, 128
        %930 = vxpose.xlu0.c.b16.cont [3/8] 0, 128
        %931 = vxpose.xlu0.c.b16.cont [4/8] 0, 128
        %932 = vxpose.xlu0.c.b16.cont [5/8] 0, 128
        %933 = vxpose.xlu0.c.b16.cont [6/8] 0, 128
        %934 = vxpose.xlu0.c.b16.cont [7/8] 0, 128
        %935 = vxpose.xlu0.c.b16.end [8/8] 0, 128
        %v936 = vpop.trf.xlu0
        %v937 = vpop.trf.xlu0
        %v938 = vpop.trf.xlu0
        %v939 = vpop.trf.xlu0
        %v940 = vpop.trf.xlu0
        %v941 = vpop.trf.xlu0
        %v942 = vpop.trf.xlu0
        %v943 = vpop.trf.xlu0
        %944 = vxpose.xlu0.c.b16.start [1/8] %v900, 128
        %945 = vxpose.xlu0.c.b16.cont [2/8] %v901, 128
        %946 = vxpose.xlu0.c.b16.cont [3/8] 0, 128
        %947 = vxpose.xlu0.c.b16.cont [4/8] 0, 128
        %948 = vxpose.xlu0.c.b16.cont [5/8] 0, 128
        %949 = vxpose.xlu0.c.b16.cont [6/8] 0, 128
        %950 = vxpose.xlu0.c.b16.cont [7/8] 0, 128
        %951 = vxpose.xlu0.c.b16.end [8/8] 0, 128
        %v952 = vpop.trf.xlu0
        %v953 = vpop.trf.xlu0
        %v954 = vpop.trf.xlu0
        %v955 = vpop.trf.xlu0
        %v956 = vpop.trf.xlu0
        %v957 = vpop.trf.xlu0
        %v958 = vpop.trf.xlu0
        %v959 = vpop.trf.xlu0
        %960 = vxpose.xlu0.c.b16.start [1/8] %v902, 128
        %961 = vxpose.xlu0.c.b16.cont [2/8] %v903, 128
        %962 = vxpose.xlu0.c.b16.cont [3/8] 0, 128
        %963 = vxpose.xlu0.c.b16.cont [4/8] 0, 128
        %964 = vxpose.xlu0.c.b16.cont [5/8] 0, 128
        %965 = vxpose.xlu0.c.b16.cont [6/8] 0, 128
        %966 = vxpose.xlu0.c.b16.cont [7/8] 0, 128
        %967 = vxpose.xlu0.c.b16.end [8/8] 0, 128
        %v968 = vpop.trf.xlu0
        %v969 = vpop.trf.xlu0
        %v970 = vpop.trf.xlu0
        %v971 = vpop.trf.xlu0
        %v972 = vpop.trf.xlu0
        %v973 = vpop.trf.xlu0
        %v974 = vpop.trf.xlu0
        %v975 = vpop.trf.xlu0
        %v976 = vunpack.c.l.b16 %v806
        %v977 = vunpack.c.l.b16 %v807
        %v978 = vunpack.c.l.b16 %v808
        %v979 = vpack.c.b16 %v977, %v976
        %v980 = vpack.c.b16 %v978, %v978
        %vm981 = vcmask 261120
        %v983 = vsel %vm981, %v979, 0
        %v986 = vsel %vm981, %v980, 0
        %988 = vmatpush.bf16.msra.mxu0 0
        %989 = vmatpush.bf16.msra.mxu0 0
        %990 = vmatpush.bf16.msra.mxu0 0
        %991 = vmatpush.bf16.msra.mxu0 0
        %992 = vmatpush.bf16.msra.mxu0 0
        %993 = vmatpush.bf16.msra.mxu0 0
        %994 = vmatpush.bf16.msra.mxu0 %v921
        %995 = vmatpush.bf16.msra.mxu0 %v920
        %996 = vmatmul.bf16.gmra.mxu0 %v983
        %v997 = vpop.f32.mrf.mxu0
        %v998 = vadd.f32 0.0, %v997
        %v999 = vpop.f32.mrf.mxu0
        %v1000 = vadd.f32 0.0, %v999
        %1001 = vmatmul.bf16.gmra.mxu0 %v986
        %v1002 = vpop.f32.mrf.mxu0
        %v1003 = vadd.f32 0.0, %v1002
        %v1004 = vpop.f32.mrf.mxu0
        %1005 = vdwg.mxu0
        %v1006 = vunpack.c.l.b16 %v813
        %v1007 = vunpack.c.l.b16 %v815
        %v1008 = vunpack.c.l.b16 %v817
        %v1009 = vpack.c.b16 %v1007, %v1006
        %v1010 = vpack.c.b16 %v1008, %v1008
        %v1012 = vsel %vm981, %v1009, 0
        %v1015 = vsel %vm981, %v1010, 0
        %1017 = vmatpush.bf16.msra.mxu0 0
        %1018 = vmatpush.bf16.msra.mxu0 0
        %1019 = vmatpush.bf16.msra.mxu0 0
        %1020 = vmatpush.bf16.msra.mxu0 0
        %1021 = vmatpush.bf16.msra.mxu0 0
        %1022 = vmatpush.bf16.msra.mxu0 0
        %1023 = vmatpush.bf16.msra.mxu0 %v937
        %1024 = vmatpush.bf16.msra.mxu0 %v936
        %1025 = vmatmul.bf16.gmra.mxu0 %v1012
        %v1026 = vpop.f32.mrf.mxu0
        %v1027 = vadd.f32 0.0, %v1026
        %v1028 = vpop.f32.mrf.mxu0
        %v1029 = vadd.f32 0.0, %v1028
        %1030 = vmatmul.bf16.gmra.mxu0 %v1015
        %v1031 = vpop.f32.mrf.mxu0
        %v1032 = vadd.f32 0.0, %v1031
        %v1033 = vpop.f32.mrf.mxu0
        %1034 = vdwg.mxu0
        %v1035 = vunpack.c.l.b16 %v819
        %v1036 = vunpack.c.l.b16 %v821
        %v1037 = vunpack.c.l.b16 %v823
        %v1038 = vpack.c.b16 %v1036, %v1035
        %v1039 = vpack.c.b16 %v1037, %v1037
        %v1041 = vsel %vm981, %v1038, 0
        %v1044 = vsel %vm981, %v1039, 0
        %1046 = vmatpush.bf16.msra.mxu0 0
        %1047 = vmatpush.bf16.msra.mxu0 0
        %1048 = vmatpush.bf16.msra.mxu0 0
        %1049 = vmatpush.bf16.msra.mxu0 0
        %1050 = vmatpush.bf16.msra.mxu0 0
        %1051 = vmatpush.bf16.msra.mxu0 0
        %1052 = vmatpush.bf16.msra.mxu0 %v953
        %1053 = vmatpush.bf16.msra.mxu0 %v952
        %1054 = vmatmul.bf16.gmra.mxu0 %v1041
        %v1055 = vpop.f32.mrf.mxu0
        %v1056 = vadd.f32 0.0, %v1055
        %v1057 = vpop.f32.mrf.mxu0
        %v1058 = vadd.f32 0.0, %v1057
        %1059 = vmatmul.bf16.gmra.mxu0 %v1044
        %v1060 = vpop.f32.mrf.mxu0
        %v1061 = vadd.f32 0.0, %v1060
        %v1062 = vpop.f32.mrf.mxu0
        %1063 = vdwg.mxu0
        %v1064 = vunpack.c.l.b16 %v825
        %v1065 = vunpack.c.l.b16 %v827
        %v1066 = vunpack.c.l.b16 %v829
        %v1067 = vpack.c.b16 %v1065, %v1064
        %v1068 = vpack.c.b16 %v1066, %v1066
        %v1070 = vsel %vm981, %v1067, 0
        %v1073 = vsel %vm981, %v1068, 0
        %1075 = vmatpush.bf16.msra.mxu0 0
        %1076 = vmatpush.bf16.msra.mxu0 0
        %1077 = vmatpush.bf16.msra.mxu0 0
        %1078 = vmatpush.bf16.msra.mxu0 0
        %1079 = vmatpush.bf16.msra.mxu0 0
        %1080 = vmatpush.bf16.msra.mxu0 0
        %1081 = vmatpush.bf16.msra.mxu0 %v969
        %1082 = vmatpush.bf16.msra.mxu0 %v968
        %1083 = vmatmul.bf16.gmra.mxu0 %v1070
        %v1084 = vpop.f32.mrf.mxu0
        %v1085 = vadd.f32 0.0, %v1084
        %v1086 = vpop.f32.mrf.mxu0
        %v1087 = vadd.f32 0.0, %v1086
        %1088 = vmatmul.bf16.gmra.mxu0 %v1073
        %v1089 = vpop.f32.mrf.mxu0
        %v1090 = vadd.f32 0.0, %v1089
        %v1091 = vpop.f32.mrf.mxu0
        %1092 = vdwg.mxu0
        %vm1093 = vcmask 195584
        %v1094 = vsel %vm1093, %v998, -inf
        %1095 = vmax.xlane.f32.xlu0 %v1094
        %v1096 = vpop.xlane.xlu0 %1095
        %v1097 = vsel %vm1093, %v1000, -inf
        %1098 = vmax.xlane.f32.xlu0 %v1097
        %v1099 = vpop.xlane.xlu0 %1098
        %v1100 = vsel %vm1093, %v1003, -inf
        %1101 = vmax.xlane.f32.xlu0 %v1100
        %v1102 = vpop.xlane.xlu0 %1101
        %v1103 = vsel %vm1093, %v1027, -inf
        %1104 = vmax.xlane.f32.xlu0 %v1103
        %v1105 = vpop.xlane.xlu0 %1104
        %v1106 = vsel %vm1093, %v1029, -inf
        %1107 = vmax.xlane.f32.xlu0 %v1106
        %v1108 = vpop.xlane.xlu0 %1107
        %v1109 = vsel %vm1093, %v1032, -inf
        %1110 = vmax.xlane.f32.xlu0 %v1109
        %v1111 = vpop.xlane.xlu0 %1110
        %v1112 = vsel %vm1093, %v1056, -inf
        %1113 = vmax.xlane.f32.xlu0 %v1112
        %v1114 = vpop.xlane.xlu0 %1113
        %v1115 = vsel %vm1093, %v1058, -inf
        %1116 = vmax.xlane.f32.xlu0 %v1115
        %v1117 = vpop.xlane.xlu0 %1116
        %v1118 = vsel %vm1093, %v1061, -inf
        %1119 = vmax.xlane.f32.xlu0 %v1118
        %v1120 = vpop.xlane.xlu0 %1119
        %v1121 = vsel %vm1093, %v1085, -inf
        %1122 = vmax.xlane.f32.xlu0 %v1121
        %v1123 = vpop.xlane.xlu0 %1122
        %v1124 = vsel %vm1093, %v1087, -inf
        %1125 = vmax.xlane.f32.xlu0 %v1124
        %v1126 = vpop.xlane.xlu0 %1125
        %v1127 = vsel %vm1093, %v1090, -inf
        %1128 = vmax.xlane.f32.xlu0 %v1127
        %v1129 = vpop.xlane.xlu0 %1128
        %v1130 = vsub.f32 %v998, %v1096
        %v1131 = vsub.f32 %v1000, %v1099
        %v1132 = vsub.f32 %v1003, %v1102
        %v1133 = vsub.f32 %v1027, %v1105
        %v1134 = vsub.f32 %v1029, %v1108
        %v1135 = vsub.f32 %v1032, %v1111
        %v1136 = vsub.f32 %v1056, %v1114
        %v1137 = vsub.f32 %v1058, %v1117
        %v1138 = vsub.f32 %v1061, %v1120
        %v1139 = vsub.f32 %v1085, %v1123
        %v1140 = vsub.f32 %v1087, %v1126
        %v1141 = vsub.f32 %v1090, %v1129
        %v1142 = vmul.f32 %v1130, 1.442695
        %v1143 = vpow.pop %v1142
        %v1144 = vmul.f32 %v1131, 1.442695
        %v1145 = vpow.pop %v1144
        %v1146 = vmul.f32 %v1132, 1.442695
        %v1147 = vpow.pop %v1146
        %v1148 = vmul.f32 %v1133, 1.442695
        %v1149 = vpow.pop %v1148
        %v1150 = vmul.f32 %v1134, 1.442695
        %v1151 = vpow.pop %v1150
        %v1152 = vmul.f32 %v1135, 1.442695
        %v1153 = vpow.pop %v1152
        %v1154 = vmul.f32 %v1136, 1.442695
        %v1155 = vpow.pop %v1154
        %v1156 = vmul.f32 %v1137, 1.442695
        %v1157 = vpow.pop %v1156
        %v1158 = vmul.f32 %v1138, 1.442695
        %v1159 = vpow.pop %v1158
        %v1160 = vmul.f32 %v1139, 1.442695
        %v1161 = vpow.pop %v1160
        %v1162 = vmul.f32 %v1140, 1.442695
        %v1163 = vpow.pop %v1162
        %v1164 = vmul.f32 %v1141, 1.442695
        %v1165 = vpow.pop %v1164
        %v1166 = vsel %vm1093, %v1143, 0.0
        %1167 = vadd.xlane.f32.xlu0 %v1166
        %v1168 = vpop.xlane.xlu0 %1167
        %v1169 = vsel %vm1093, %v1145, 0.0
        %1170 = vadd.xlane.f32.xlu0 %v1169
        %v1171 = vpop.xlane.xlu0 %1170
        %v1172 = vsel %vm1093, %v1147, 0.0
        %1173 = vadd.xlane.f32.xlu0 %v1172
        %v1174 = vpop.xlane.xlu0 %1173
        %v1175 = vsel %vm1093, %v1149, 0.0
        %1176 = vadd.xlane.f32.xlu0 %v1175
        %v1177 = vpop.xlane.xlu0 %1176
        %v1178 = vsel %vm1093, %v1151, 0.0
        %1179 = vadd.xlane.f32.xlu0 %v1178
        %v1180 = vpop.xlane.xlu0 %1179
        %v1181 = vsel %vm1093, %v1153, 0.0
        %1182 = vadd.xlane.f32.xlu0 %v1181
        %v1183 = vpop.xlane.xlu0 %1182
        %v1184 = vsel %vm1093, %v1155, 0.0
        %1185 = vadd.xlane.f32.xlu0 %v1184
        %v1186 = vpop.xlane.xlu0 %1185
        %v1187 = vsel %vm1093, %v1157, 0.0
        %1188 = vadd.xlane.f32.xlu0 %v1187
        %v1189 = vpop.xlane.xlu0 %1188
        %v1190 = vsel %vm1093, %v1159, 0.0
        %1191 = vadd.xlane.f32.xlu0 %v1190
        %v1192 = vpop.xlane.xlu0 %1191
        %v1193 = vsel %vm1093, %v1161, 0.0
        %1194 = vadd.xlane.f32.xlu0 %v1193
        %v1195 = vpop.xlane.xlu0 %1194
        %v1196 = vsel %vm1093, %v1163, 0.0
        %1197 = vadd.xlane.f32.xlu0 %v1196
        %v1198 = vpop.xlane.xlu0 %1197
        %v1199 = vsel %vm1093, %v1165, 0.0
        %1200 = vadd.xlane.f32.xlu0 %v1199
        %v1201 = vpop.xlane.xlu0 %1200
        %v1202 = vrcp.pop %v1168
        %v1203 = vrcp.pop %v1171
        %v1204 = vrcp.pop %v1174
        %v1205 = vrcp.pop %v1177
        %v1206 = vrcp.pop %v1180
        %v1207 = vrcp.pop %v1183
        %v1208 = vrcp.pop %v1186
        %v1209 = vrcp.pop %v1189
        %v1210 = vrcp.pop %v1192
        %v1211 = vrcp.pop %v1195
        %v1212 = vrcp.pop %v1198
        %v1213 = vrcp.pop %v1201
        %v1214 = vpack.c.bf16 %v1143, %v1143
        %v1215 = vpack.c.bf16 %v1145, %v1145
        %v1216 = vpack.c.bf16 %v1147, %v1147
        %v1217 = vpack.c.bf16 %v1149, %v1149
        %v1218 = vpack.c.bf16 %v1151, %v1151
        %v1219 = vpack.c.bf16 %v1153, %v1153
        %v1220 = vpack.c.bf16 %v1155, %v1155
        %v1221 = vpack.c.bf16 %v1157, %v1157
        %v1222 = vpack.c.bf16 %v1159, %v1159
        %v1223 = vpack.c.bf16 %v1161, %v1161
        %v1224 = vpack.c.bf16 %v1163, %v1163
        %v1225 = vpack.c.bf16 %v1165, %v1165
        %v1229 = vunpack.c.l.b16 %v1214
        %v1230 = vunpack.c.l.b16 %v1215
        %v1231 = vunpack.c.l.b16 %v1216
        %v1232 = vpack.c.b16 %v1230, %v1229
        %v1233 = vpack.c.b16 %v1231, %v1231
        %v1234 = vunpack.c.l.b16 %v795
        %v1235 = vunpack.c.l.b16 %v797
        %v1236 = vunpack.c.l.b16 %v799
        %v1237 = vpack.c.b16 %v1235, %v1234
        %v1238 = vpack.c.b16 %v1236, %v1236
        %v1241 = vsel %vm1093, %v1232, 0
        %v1244 = vsel %vm1093, %v1233, 0
        %vm1246 = vcmask 1043456
        %v1248 = vsel %vm1246, %v1238, 0
        %1250 = vmatpush.bf16.msra.mxu0 0
        %1251 = vmatpush.bf16.msra.mxu0 0
        %1252 = vmatpush.bf16.msra.mxu0 0
        %1253 = vmatpush.bf16.msra.mxu0 0
        %1254 = vmatpush.bf16.msra.mxu0 0
        %1255 = vmatpush.bf16.msra.mxu0 0
        %1256 = vmatpush.bf16.msra.mxu0 %v1248
        %1257 = vmatpush.bf16.msra.mxu0 %v1237
        %1258 = vmatmul.bf16.gmra.mxu0 %v1241
        %v1259 = vpop.f32.mrf.mxu0
        %v1260 = vadd.f32 0.0, %v1259
        %v1261 = vpop.f32.mrf.mxu0
        %v1262 = vadd.f32 0.0, %v1261
        %1263 = vmatmul.bf16.gmra.mxu0 %v1244
        %v1264 = vpop.f32.mrf.mxu0
        %v1265 = vadd.f32 0.0, %v1264
        %v1266 = vpop.f32.mrf.mxu0
        %1267 = vdwg.mxu0
        %v1271 = vunpack.c.l.b16 %v1217
        %v1272 = vunpack.c.l.b16 %v1218
        %v1273 = vunpack.c.l.b16 %v1219
        %v1274 = vpack.c.b16 %v1272, %v1271
        %v1275 = vpack.c.b16 %v1273, %v1273
        %v1276 = vunpack.c.l.b16 %v867
        %v1277 = vunpack.c.l.b16 %v869
        %v1278 = vunpack.c.l.b16 %v871
        %v1279 = vpack.c.b16 %v1277, %v1276
        %v1280 = vpack.c.b16 %v1278, %v1278
        %v1283 = vsel %vm1093, %v1274, 0
        %v1286 = vsel %vm1093, %v1275, 0
        %v1289 = vsel %vm1246, %v1280, 0
        %1291 = vmatpush.bf16.msra.mxu0 0
        %1292 = vmatpush.bf16.msra.mxu0 0
        %1293 = vmatpush.bf16.msra.mxu0 0
        %1294 = vmatpush.bf16.msra.mxu0 0
        %1295 = vmatpush.bf16.msra.mxu0 0
        %1296 = vmatpush.bf16.msra.mxu0 0
        %1297 = vmatpush.bf16.msra.mxu0 %v1289
        %1298 = vmatpush.bf16.msra.mxu0 %v1279
        %1299 = vmatmul.bf16.gmra.mxu0 %v1283
        %v1300 = vpop.f32.mrf.mxu0
        %v1301 = vadd.f32 0.0, %v1300
        %v1302 = vpop.f32.mrf.mxu0
        %v1303 = vadd.f32 0.0, %v1302
        %1304 = vmatmul.bf16.gmra.mxu0 %v1286
        %v1305 = vpop.f32.mrf.mxu0
        %v1306 = vadd.f32 0.0, %v1305
        %v1307 = vpop.f32.mrf.mxu0
        %1308 = vdwg.mxu0
        %v1312 = vunpack.c.l.b16 %v1220
        %v1313 = vunpack.c.l.b16 %v1221
        %v1314 = vunpack.c.l.b16 %v1222
        %v1315 = vpack.c.b16 %v1313, %v1312
        %v1316 = vpack.c.b16 %v1314, %v1314
        %v1317 = vunpack.c.l.b16 %v873
        %v1318 = vunpack.c.l.b16 %v875
        %v1319 = vunpack.c.l.b16 %v877
        %v1320 = vpack.c.b16 %v1318, %v1317
        %v1321 = vpack.c.b16 %v1319, %v1319
        %v1324 = vsel %vm1093, %v1315, 0
        %v1327 = vsel %vm1093, %v1316, 0
        %v1330 = vsel %vm1246, %v1321, 0
        %1332 = vmatpush.bf16.msra.mxu0 0
        %1333 = vmatpush.bf16.msra.mxu0 0
        %1334 = vmatpush.bf16.msra.mxu0 0
        %1335 = vmatpush.bf16.msra.mxu0 0
        %1336 = vmatpush.bf16.msra.mxu0 0
        %1337 = vmatpush.bf16.msra.mxu0 0
        %1338 = vmatpush.bf16.msra.mxu0 %v1330
        %1339 = vmatpush.bf16.msra.mxu0 %v1320
        %1340 = vmatmul.bf16.gmra.mxu0 %v1324
        %v1341 = vpop.f32.mrf.mxu0
        %v1342 = vadd.f32 0.0, %v1341
        %v1343 = vpop.f32.mrf.mxu0
        %v1344 = vadd.f32 0.0, %v1343
        %1345 = vmatmul.bf16.gmra.mxu0 %v1327
        %v1346 = vpop.f32.mrf.mxu0
        %v1347 = vadd.f32 0.0, %v1346
        %v1348 = vpop.f32.mrf.mxu0
        %1349 = vdwg.mxu0
        %v1353 = vunpack.c.l.b16 %v1223
        %v1354 = vunpack.c.l.b16 %v1224
        %v1355 = vunpack.c.l.b16 %v1225
        %v1356 = vpack.c.b16 %v1354, %v1353
        %v1357 = vpack.c.b16 %v1355, %v1355
        %v1358 = vunpack.c.l.b16 %v879
        %v1359 = vunpack.c.l.b16 %v881
        %v1360 = vunpack.c.l.b16 %v883
        %v1361 = vpack.c.b16 %v1359, %v1358
        %v1362 = vpack.c.b16 %v1360, %v1360
        %v1365 = vsel %vm1093, %v1356, 0
        %v1368 = vsel %vm1093, %v1357, 0
        %v1371 = vsel %vm1246, %v1362, 0
        %1373 = vmatpush.bf16.msra.mxu0 0
        %1374 = vmatpush.bf16.msra.mxu0 0
        %1375 = vmatpush.bf16.msra.mxu0 0
        %1376 = vmatpush.bf16.msra.mxu0 0
        %1377 = vmatpush.bf16.msra.mxu0 0
        %1378 = vmatpush.bf16.msra.mxu0 0
        %1379 = vmatpush.bf16.msra.mxu0 %v1371
        %1380 = vmatpush.bf16.msra.mxu0 %v1361
        %1381 = vmatmul.bf16.gmra.mxu0 %v1365
        %v1382 = vpop.f32.mrf.mxu0
        %v1383 = vadd.f32 0.0, %v1382
        %v1384 = vpop.f32.mrf.mxu0
        %v1385 = vadd.f32 0.0, %v1384
        %1386 = vmatmul.bf16.gmra.mxu0 %v1368
        %v1387 = vpop.f32.mrf.mxu0
        %v1388 = vadd.f32 0.0, %v1387
        %v1389 = vpop.f32.mrf.mxu0
        %1390 = vdwg.mxu0
        %v1391 = vmul.f32 %v1260, %v1202
        %v1392 = vmul.f32 %v1262, %v1203
        %v1393 = vmul.f32 %v1265, %v1204
        %v1394 = vmul.f32 %v1301, %v1205
        %v1395 = vmul.f32 %v1303, %v1206
        %v1396 = vmul.f32 %v1306, %v1207
        %v1397 = vmul.f32 %v1342, %v1208
        %v1398 = vmul.f32 %v1344, %v1209
        %v1399 = vmul.f32 %v1347, %v1210
        %v1400 = vmul.f32 %v1383, %v1211
        %v1401 = vmul.f32 %v1385, %v1212
        %v1402 = vmul.f32 %v1388, %v1213
        %v1403 = vrot.slane %v1397, 4
        %vm1404 = vcmask 1047556
        %v1405 = vsel %vm1404, %v1403, %v1391
        %v1406 = vrot.slane %v1391, 4
        %v1407 = vsel %vm1404, %v1397, %v1406
        %v1409 = vunpack.c.l.s4 1983009808
        %v1410 = vunpack.c.0.s8 %v1409
        %v1411 = vperm.slane %v1405, %v1410
        %v1413 = vunpack.c.l.s4 1983009808
        %v1414 = vunpack.c.0.s8 %v1413
        %v1415 = vperm.slane %v1407, %v1414
        %v1416 = vrot.slane %v1400, 4
        %v1417 = vsel %vm1404, %v1416, %v1394
        %v1418 = vrot.slane %v1394, 4
        %v1419 = vsel %vm1404, %v1400, %v1418
        %v1421 = vunpack.c.l.s4 1983009808
        %v1422 = vunpack.c.0.s8 %v1421
        %v1423 = vperm.slane %v1417, %v1422
        %v1425 = vunpack.c.l.s4 1983009808
        %v1426 = vunpack.c.0.s8 %v1425
        %v1427 = vperm.slane %v1419, %v1426
        %v1428 = vrot.slane %v1423, 4
        %v1429 = vsel %vm1404, %v1428, %v1411
        %v1430 = vrot.slane %v1411, 4
        %v1431 = vsel %vm1404, %v1423, %v1430
        %v1433 = vunpack.c.l.s4 1934713408
        %v1434 = vunpack.c.0.s8 %v1433
        %v1435 = vperm.slane %v1429, %v1434
        %v1437 = vunpack.c.l.s4 1934713408
        %v1438 = vunpack.c.0.s8 %v1437
        %v1439 = vperm.slane %v1431, %v1438
        %v1440 = vrot.slane %v1427, 4
        %v1441 = vsel %vm1404, %v1440, %v1415
        %v1442 = vrot.slane %v1415, 4
        %v1443 = vsel %vm1404, %v1427, %v1442
        %v1445 = vunpack.c.l.s4 1934713408
        %v1446 = vunpack.c.0.s8 %v1445
        %v1447 = vperm.slane %v1441, %v1446
        %v1449 = vunpack.c.l.s4 1934713408
        %v1450 = vunpack.c.0.s8 %v1449
        %v1451 = vperm.slane %v1443, %v1450
        %v1452 = vrot.slane %v1435, 4
        %v1453 = vsel %vm1404, 0.0, %v1452
        %v1454 = vrot.slane %v1439, 4
        %v1455 = vsel %vm1404, 0.0, %v1454
        %v1456 = vrot.slane %v1447, 4
        %v1457 = vsel %vm1404, 0.0, %v1456
        %v1458 = vrot.slane %v1451, 4
        %v1459 = vsel %vm1404, 0.0, %v1458
        %v1460 = vrot.slane %v1398, 4
        %v1461 = vsel %vm1404, %v1460, %v1392
        %v1462 = vrot.slane %v1392, 4
        %v1463 = vsel %vm1404, %v1398, %v1462
        %v1465 = vunpack.c.l.s4 1983009808
        %v1466 = vunpack.c.0.s8 %v1465
        %v1467 = vperm.slane %v1461, %v1466
        %v1469 = vunpack.c.l.s4 1983009808
        %v1470 = vunpack.c.0.s8 %v1469
        %v1471 = vperm.slane %v1463, %v1470
        %v1472 = vrot.slane %v1401, 4
        %v1473 = vsel %vm1404, %v1472, %v1395
        %v1474 = vrot.slane %v1395, 4
        %v1475 = vsel %vm1404, %v1401, %v1474
        %v1477 = vunpack.c.l.s4 1983009808
        %v1478 = vunpack.c.0.s8 %v1477
        %v1479 = vperm.slane %v1473, %v1478
        %v1481 = vunpack.c.l.s4 1983009808
        %v1482 = vunpack.c.0.s8 %v1481
        %v1483 = vperm.slane %v1475, %v1482
        %v1484 = vrot.slane %v1479, 4
        %v1485 = vsel %vm1404, %v1484, %v1467
        %v1486 = vrot.slane %v1467, 4
        %v1487 = vsel %vm1404, %v1479, %v1486
        %v1489 = vunpack.c.l.s4 1934713408
        %v1490 = vunpack.c.0.s8 %v1489
        %v1491 = vperm.slane %v1485, %v1490
        %v1493 = vunpack.c.l.s4 1934713408
        %v1494 = vunpack.c.0.s8 %v1493
        %v1495 = vperm.slane %v1487, %v1494
        %v1496 = vrot.slane %v1483, 4
        %v1497 = vsel %vm1404, %v1496, %v1471
        %v1498 = vrot.slane %v1471, 4
        %v1499 = vsel %vm1404, %v1483, %v1498
        %v1501 = vunpack.c.l.s4 1934713408
        %v1502 = vunpack.c.0.s8 %v1501
        %v1503 = vperm.slane %v1497, %v1502
        %v1505 = vunpack.c.l.s4 1934713408
        %v1506 = vunpack.c.0.s8 %v1505
        %v1507 = vperm.slane %v1499, %v1506
        %v1508 = vrot.slane %v1491, 4
        %v1509 = vsel %vm1404, 0.0, %v1508
        %v1510 = vrot.slane %v1495, 4
        %v1511 = vsel %vm1404, 0.0, %v1510
        %v1512 = vrot.slane %v1503, 4
        %v1513 = vsel %vm1404, 0.0, %v1512
        %v1514 = vrot.slane %v1507, 4
        %v1515 = vsel %vm1404, 0.0, %v1514
        %v1516 = vrot.slane %v1399, 4
        %v1517 = vsel %vm1404, %v1516, %v1393
        %v1518 = vrot.slane %v1393, 4
        %v1519 = vsel %vm1404, %v1399, %v1518
        %v1521 = vunpack.c.l.s4 1983009808
        %v1522 = vunpack.c.0.s8 %v1521
        %v1523 = vperm.slane %v1517, %v1522
        %v1525 = vunpack.c.l.s4 1983009808
        %v1526 = vunpack.c.0.s8 %v1525
        %v1527 = vperm.slane %v1519, %v1526
        %v1528 = vrot.slane %v1402, 4
        %v1529 = vsel %vm1404, %v1528, %v1396
        %v1530 = vrot.slane %v1396, 4
        %v1531 = vsel %vm1404, %v1402, %v1530
        %v1533 = vunpack.c.l.s4 1983009808
        %v1534 = vunpack.c.0.s8 %v1533
        %v1535 = vperm.slane %v1529, %v1534
        %v1537 = vunpack.c.l.s4 1983009808
        %v1538 = vunpack.c.0.s8 %v1537
        %v1539 = vperm.slane %v1531, %v1538
        %v1540 = vrot.slane %v1535, 4
        %v1541 = vsel %vm1404, %v1540, %v1523
        %v1542 = vrot.slane %v1523, 4
        %v1543 = vsel %vm1404, %v1535, %v1542
        %v1545 = vunpack.c.l.s4 1934713408
        %v1546 = vunpack.c.0.s8 %v1545
        %v1547 = vperm.slane %v1541, %v1546
        %v1549 = vunpack.c.l.s4 1934713408
        %v1550 = vunpack.c.0.s8 %v1549
        %v1551 = vperm.slane %v1543, %v1550
        %v1552 = vrot.slane %v1539, 4
        %v1553 = vsel %vm1404, %v1552, %v1527
        %v1554 = vrot.slane %v1527, 4
        %v1555 = vsel %vm1404, %v1539, %v1554
        %v1557 = vunpack.c.l.s4 1934713408
        %v1558 = vunpack.c.0.s8 %v1557
        %v1559 = vperm.slane %v1553, %v1558
        %v1561 = vunpack.c.l.s4 1934713408
        %v1562 = vunpack.c.0.s8 %v1561
        %v1563 = vperm.slane %v1555, %v1562
        %v1564 = vrot.slane %v1547, 4
        %v1565 = vsel %vm1404, 0.0, %v1564
        %v1566 = vrot.slane %v1551, 4
        %v1567 = vsel %vm1404, 0.0, %v1566
        %v1568 = vrot.slane %v1559, 4
        %v1569 = vsel %vm1404, 0.0, %v1568
        %v1570 = vrot.slane %v1563, 4
        %v1571 = vsel %vm1404, 0.0, %v1570
        %v1572 = vsel %vm1404, %v1454, %v1435
        %v1574 = vunpack.c.l.s4 1983009808
        %v1575 = vunpack.c.0.s8 %v1574
        %v1576 = vperm.slane %v1572, %v1575
        %v1577 = vrot.slane %v1455, 4
        %v1578 = vsel %vm1404, %v1577, %v1453
        %v1580 = vunpack.c.l.s4 1983009808
        %v1581 = vunpack.c.0.s8 %v1580
        %v1582 = vperm.slane %v1578, %v1581
        %v1583 = vsel %vm1404, %v1458, %v1447
        %v1585 = vunpack.c.l.s4 1983009808
        %v1586 = vunpack.c.0.s8 %v1585
        %v1587 = vperm.slane %v1583, %v1586
        %v1588 = vrot.slane %v1459, 4
        %v1589 = vsel %vm1404, %v1588, %v1457
        %v1591 = vunpack.c.l.s4 1983009808
        %v1592 = vunpack.c.0.s8 %v1591
        %v1593 = vperm.slane %v1589, %v1592
        %v1594 = vrot.slane %v1582, 4
        %v1595 = vsel %vm1404, %v1594, %v1576
        %v1596 = vrot.slane %v1576, 4
        %v1597 = vsel %vm1404, %v1582, %v1596
        %v1599 = vunpack.c.l.s4 1934713408
        %v1600 = vunpack.c.0.s8 %v1599
        %v1601 = vperm.slane %v1595, %v1600
        %v1603 = vunpack.c.l.s4 1934713408
        %v1604 = vunpack.c.0.s8 %v1603
        %v1605 = vperm.slane %v1597, %v1604
        %v1606 = vrot.slane %v1593, 4
        %v1607 = vsel %vm1404, %v1606, %v1587
        %v1608 = vrot.slane %v1587, 4
        %v1609 = vsel %vm1404, %v1593, %v1608
        %v1611 = vunpack.c.l.s4 1934713408
        %v1612 = vunpack.c.0.s8 %v1611
        %v1613 = vperm.slane %v1607, %v1612
        %v1615 = vunpack.c.l.s4 1934713408
        %v1616 = vunpack.c.0.s8 %v1615
        %v1617 = vperm.slane %v1609, %v1616
        %v1618 = vrot.slane %v1613, 4
        %v1619 = vsel %vm1404, %v1618, %v1601
        %v1620 = vrot.slane %v1601, 4
        %v1621 = vsel %vm1404, %v1613, %v1620
        %v1622 = vrot.slane %v1617, 4
        %v1623 = vsel %vm1404, %v1622, %v1605
        %v1624 = vrot.slane %v1605, 4
        %v1625 = vsel %vm1404, %v1617, %v1624
        %v1626 = vsel %vm1404, %v1510, %v1491
        %v1628 = vunpack.c.l.s4 1983009808
        %v1629 = vunpack.c.0.s8 %v1628
        %v1630 = vperm.slane %v1626, %v1629
        %v1631 = vrot.slane %v1511, 4
        %v1632 = vsel %vm1404, %v1631, %v1509
        %v1634 = vunpack.c.l.s4 1983009808
        %v1635 = vunpack.c.0.s8 %v1634
        %v1636 = vperm.slane %v1632, %v1635
        %v1637 = vsel %vm1404, %v1514, %v1503
        %v1639 = vunpack.c.l.s4 1983009808
        %v1640 = vunpack.c.0.s8 %v1639
        %v1641 = vperm.slane %v1637, %v1640
        %v1642 = vrot.slane %v1515, 4
        %v1643 = vsel %vm1404, %v1642, %v1513
        %v1645 = vunpack.c.l.s4 1983009808
        %v1646 = vunpack.c.0.s8 %v1645
        %v1647 = vperm.slane %v1643, %v1646
        %v1648 = vrot.slane %v1636, 4
        %v1649 = vsel %vm1404, %v1648, %v1630
        %v1650 = vrot.slane %v1630, 4
        %v1651 = vsel %vm1404, %v1636, %v1650
        %v1653 = vunpack.c.l.s4 1934713408
        %v1654 = vunpack.c.0.s8 %v1653
        %v1655 = vperm.slane %v1649, %v1654
        %v1657 = vunpack.c.l.s4 1934713408
        %v1658 = vunpack.c.0.s8 %v1657
        %v1659 = vperm.slane %v1651, %v1658
        %v1660 = vrot.slane %v1647, 4
        %v1661 = vsel %vm1404, %v1660, %v1641
        %v1662 = vrot.slane %v1641, 4
        %v1663 = vsel %vm1404, %v1647, %v1662
        %v1665 = vunpack.c.l.s4 1934713408
        %v1666 = vunpack.c.0.s8 %v1665
        %v1667 = vperm.slane %v1661, %v1666
        %v1669 = vunpack.c.l.s4 1934713408
        %v1670 = vunpack.c.0.s8 %v1669
        %v1671 = vperm.slane %v1663, %v1670
        %v1672 = vrot.slane %v1667, 4
        %v1673 = vsel %vm1404, %v1672, %v1655
        %v1674 = vrot.slane %v1655, 4
        %v1675 = vsel %vm1404, %v1667, %v1674
        %v1676 = vrot.slane %v1671, 4
        %v1677 = vsel %vm1404, %v1676, %v1659
        %v1678 = vrot.slane %v1659, 4
        %v1679 = vsel %vm1404, %v1671, %v1678
        %v1680 = vsel %vm1404, %v1566, %v1547
        %v1682 = vunpack.c.l.s4 1983009808
        %v1683 = vunpack.c.0.s8 %v1682
        %v1684 = vperm.slane %v1680, %v1683
        %v1685 = vrot.slane %v1567, 4
        %v1686 = vsel %vm1404, %v1685, %v1565
        %v1688 = vunpack.c.l.s4 1983009808
        %v1689 = vunpack.c.0.s8 %v1688
        %v1690 = vperm.slane %v1686, %v1689
        %v1691 = vsel %vm1404, %v1570, %v1559
        %v1693 = vunpack.c.l.s4 1983009808
        %v1694 = vunpack.c.0.s8 %v1693
        %v1695 = vperm.slane %v1691, %v1694
        %v1696 = vrot.slane %v1571, 4
        %v1697 = vsel %vm1404, %v1696, %v1569
        %v1699 = vunpack.c.l.s4 1983009808
        %v1700 = vunpack.c.0.s8 %v1699
        %v1701 = vperm.slane %v1697, %v1700
        %v1702 = vrot.slane %v1690, 4
        %v1703 = vsel %vm1404, %v1702, %v1684
        %v1704 = vrot.slane %v1684, 4
        %v1705 = vsel %vm1404, %v1690, %v1704
        %v1707 = vunpack.c.l.s4 1934713408
        %v1708 = vunpack.c.0.s8 %v1707
        %v1709 = vperm.slane %v1703, %v1708
        %v1711 = vunpack.c.l.s4 1934713408
        %v1712 = vunpack.c.0.s8 %v1711
        %v1713 = vperm.slane %v1705, %v1712
        %v1714 = vrot.slane %v1701, 4
        %v1715 = vsel %vm1404, %v1714, %v1695
        %v1716 = vrot.slane %v1695, 4
        %v1717 = vsel %vm1404, %v1701, %v1716
        %v1719 = vunpack.c.l.s4 1934713408
        %v1720 = vunpack.c.0.s8 %v1719
        %v1721 = vperm.slane %v1715, %v1720
        %v1723 = vunpack.c.l.s4 1934713408
        %v1724 = vunpack.c.0.s8 %v1723
        %v1725 = vperm.slane %v1717, %v1724
        %v1726 = vrot.slane %v1721, 4
        %v1727 = vsel %vm1404, %v1726, %v1709
        %v1728 = vrot.slane %v1709, 4
        %v1729 = vsel %vm1404, %v1721, %v1728
        %v1730 = vrot.slane %v1725, 4
        %v1731 = vsel %vm1404, %v1730, %v1713
        %v1732 = vrot.slane %v1713, 4
        %v1733 = vsel %vm1404, %v1725, %v1732
        %1737 = vrot.lane.b32.xlu0 %v1621, 32
        %v1738 = vpop.permute.xlu0 %1737
        %1739 = vrot.lane.b32.xlu0 %v1675, 32
        %v1740 = vpop.permute.xlu0 %1739
        %1741 = vrot.lane.b32.xlu0 %v1729, 32
        %v1742 = vpop.permute.xlu0 %1741
        %1749 = vrot.lane.b32.xlu0 %v1623, 64
        %v1750 = vpop.permute.xlu0 %1749
        %1751 = vrot.lane.b32.xlu0 %v1677, 64
        %v1752 = vpop.permute.xlu0 %1751
        %1753 = vrot.lane.b32.xlu0 %v1731, 64
        %v1754 = vpop.permute.xlu0 %1753
        %1761 = vrot.lane.b32.xlu0 %v1625, 96
        %v1762 = vpop.permute.xlu0 %1761
        %1763 = vrot.lane.b32.xlu0 %v1679, 96
        %v1764 = vpop.permute.xlu0 %1763
        %1765 = vrot.lane.b32.xlu0 %v1733, 96
        %v1766 = vpop.permute.xlu0 %1765
        %v1770 = vsel %vm981, %v1619, %v1738
        %v1771 = vsel %vm981, %v1673, %v1740
        %v1772 = vsel %vm981, %v1727, %v1742
        %vm1773 = vcmask 523264
        %v1774 = vsel %vm1773, %v1770, %v1750
        %v1775 = vsel %vm1773, %v1771, %v1752
        %v1776 = vsel %vm1773, %v1772, %v1754
        %vm1777 = vcmask 785408
        %v1778 = vsel %vm1777, %v1774, %v1762
        %v1779 = vsel %vm1777, %v1775, %v1764
        %v1780 = vsel %vm1777, %v1776, %v1766
        %v1781 = vld [vmem:[#allocation2] sm:$0xf]
        %v1782 = vld [vmem:[#allocation2 + $0x4] sm:$0xf]
        %v1783 = vld [vmem:[#allocation2 + $0x8] sm:$0xf]
        %v1784 = vld [vmem:[#allocation2 + $0xc] sm:$0xf]
        %v1785 = vld [vmem:[#allocation2 + $0x10] sm:$0xf]
        %v1786 = vld [vmem:[#allocation2 + $0x14] sm:$0xf]
        %v1787 = vld [vmem:[#allocation2 + $0x18] sm:$0xf]
        %v1788 = vld [vmem:[#allocation2 + $0x1c] sm:$0xf]
        %v1789 = vld [vmem:[#allocation2 + $0x20] sm:$0xf]
        %v1790 = vld [vmem:[#allocation2 + $0x24] sm:$0xf]
        %v1791 = vld [vmem:[#allocation2 + $0x28] sm:$0xf]
        %v1792 = vld [vmem:[#allocation2 + $0x2c] sm:$0xf]
        %v1793 = vld [vmem:[#allocation2 + $0x30] sm:$0xf]
        %v1794 = vld [vmem:[#allocation2 + $0x34] sm:$0xf]
        %v1795 = vld [vmem:[#allocation2 + $0x38] sm:$0xf]
        %v1796 = vld [vmem:[#allocation2 + $0x3c] sm:$0xf]
        %v1797 = vpack.c.bf16 %v1779, %v1778
        %v1798 = vpack.c.bf16 %v1780, %v1780
        %v1799 = vld [vmem:[%s3] sm:$0x1]
        %v1800 = vunpack.c.l.bf16 %v1799
        %v1801 = vperm.slane %v1800, 0
        %v1818 = vunpack.c.l.b16 %v1781
        %v1819 = vunpack.c.l.b16 %v1782
        %v1820 = vunpack.c.l.b16 %v1783
        %v1821 = vunpack.c.l.b16 %v1784
        %v1822 = vunpack.c.l.b16 %v1785
        %v1823 = vunpack.c.l.b16 %v1786
        %v1824 = vunpack.c.l.b16 %v1787
        %v1825 = vunpack.c.l.b16 %v1788
        %v1826 = vunpack.c.l.b16 %v1789
        %v1827 = vunpack.c.l.b16 %v1790
        %v1828 = vunpack.c.l.b16 %v1791
        %v1829 = vunpack.c.l.b16 %v1792
        %v1830 = vunpack.c.l.b16 %v1793
        %v1831 = vunpack.c.l.b16 %v1794
        %v1832 = vunpack.c.l.b16 %v1795
        %v1833 = vunpack.c.l.b16 %v1796
        %v1834 = vpack.c.b16 %v1819, %v1818
        %v1835 = vpack.c.b16 %v1821, %v1820
        %v1836 = vpack.c.b16 %v1823, %v1822
        %v1837 = vpack.c.b16 %v1825, %v1824
        %v1838 = vpack.c.b16 %v1827, %v1826
        %v1839 = vpack.c.b16 %v1829, %v1828
        %v1840 = vpack.c.b16 %v1831, %v1830
        %v1841 = vpack.c.b16 %v1833, %v1832
        %1850 = vmatpush.bf16.msra.mxu0 %v1841
        %1851 = vmatpush.bf16.msra.mxu0 %v1840
        %1852 = vmatpush.bf16.msra.mxu0 %v1839
        %1853 = vmatpush.bf16.msra.mxu0 %v1838
        %1854 = vmatpush.bf16.msra.mxu0 %v1837
        %1855 = vmatpush.bf16.msra.mxu0 %v1836
        %1856 = vmatpush.bf16.msra.mxu0 %v1835
        %1857 = vmatpush.bf16.msra.mxu0 %v1834
        %1858 = vmatmul.bf16.gmra.mxu0 %v1797
        %v1859 = vpop.f32.mrf.mxu0
        %v1860 = vadd.f32 %v1801, %v1859
        %v1861 = vpop.f32.mrf.mxu0
        %v1862 = vadd.f32 %v1801, %v1861
        %1863 = vmatmul.bf16.gmra.mxu0 %v1798
        %v1864 = vpop.f32.mrf.mxu0
        %v1865 = vadd.f32 %v1801, %v1864
        %v1866 = vpop.f32.mrf.mxu0
        %1867 = vdwg.mxu0
        %v1868 = vadd.f32 %v791, %v1860
        %v1869 = vadd.f32 %v792, %v1862
        %v1870 = vadd.f32 %v793, %v1865
        %1871 = vadd.xlane.f32.xlu0 %v1868
        %v1872 = vpop.xlane.xlu0 %1871
        %1873 = vadd.xlane.f32.xlu0 %v1869
        %v1874 = vpop.xlane.xlu0 %1873
        %1875 = vadd.xlane.f32.xlu0 %v1870
        %v1876 = vpop.xlane.xlu0 %1875
        %v1877 = vrcp.pop 128.0
        %v1878 = vmul.f32 128.0, %v1877
        %v1879 = vsub.f32 1.0, %v1878
        %v1880 = vmul.f32 %v1877, %v1879
        %v1881 = vadd.f32 %v1877, %v1880
        %vm1882 = vweird.f32 %v1877
        %v1883 = vsel %vm1882, %v1877, %v1881
        %v1884 = vmul.f32 %v1872, %v1883
        %v1885 = vmul.f32 %v1874, %v1883
        %v1886 = vmul.f32 %v1876, %v1883
        %v1887 = vsub.f32 %v1868, %v1884
        %v1888 = vsub.f32 %v1869, %v1885
        %v1889 = vsub.f32 %v1870, %v1886
        %v1890 = vmul.f32 %v1887, %v1887
        %v1891 = vmul.f32 %v1888, %v1888
        %v1892 = vmul.f32 %v1889, %v1889
        %1893 = vadd.xlane.f32.xlu0 %v1890
        %v1894 = vpop.xlane.xlu0 %1893
        %1895 = vadd.xlane.f32.xlu0 %v1891
        %v1896 = vpop.xlane.xlu0 %1895
        %1897 = vadd.xlane.f32.xlu0 %v1892
        %v1898 = vpop.xlane.xlu0 %1897
        %v1899 = vmul.f32 %v1894, %v1883
        %v1900 = vmul.f32 %v1896, %v1883
        %v1901 = vmul.f32 %v1898, %v1883
        %v1902 = vadd.f32 %v1899, 1e-05
        %v1903 = vadd.f32 %v1900, 1e-05
        %v1904 = vadd.f32 %v1901, 1e-05
        %v1905 = vrsqrt.pop %v1902
        %v1906 = vmul.f32 %v1905, %v1902
        %v1907 = vmul.f32 %v1906, %v1905
        %v1908 = vmul.f32 0.5, %v1907
        %v1909 = vsub.f32 1.5, %v1908
        %v1910 = vmul.f32 %v1905, %v1909
        %vm1911 = vweird.f32 %v1902
        %vm1912 = vweird.f32 %v1905
        %vm1913 = vmor %vm1911, %vm1912
        %v1914 = vsel %vm1913, %v1905, %v1910
        %v1915 = vrsqrt.pop %v1903
        %v1916 = vmul.f32 %v1915, %v1903
        %v1917 = vmul.f32 %v1916, %v1915
        %v1918 = vmul.f32 0.5, %v1917
        %v1919 = vsub.f32 1.5, %v1918
        %v1920 = vmul.f32 %v1915, %v1919
        %vm1921 = vweird.f32 %v1903
        %vm1922 = vweird.f32 %v1915
        %vm1923 = vmor %vm1921, %vm1922
        %v1924 = vsel %vm1923, %v1915, %v1920
        %v1925 = vrsqrt.pop %v1904
        %v1926 = vmul.f32 %v1925, %v1904
        %v1927 = vmul.f32 %v1926, %v1925
        %v1928 = vmul.f32 0.5, %v1927
        %v1929 = vsub.f32 1.5, %v1928
        %v1930 = vmul.f32 %v1925, %v1929
        %vm1931 = vweird.f32 %v1904
        %vm1932 = vweird.f32 %v1925
        %vm1933 = vmor %vm1931, %vm1932
        %v1934 = vsel %vm1933, %v1925, %v1930
        %v1935 = vmul.f32 %v1887, %v1914
        %v1936 = vmul.f32 %v1888, %v1924
        %v1937 = vmul.f32 %v1889, %v1934
        %v1938 = vld [vmem:[%s4] sm:$0x1]
        %v1939 = vunpack.c.l.bf16 %v1938
        %v1940 = vperm.slane %v1939, 0
        %v1941 = vmul.f32 %v1935, %v1940
        %v1942 = vmul.f32 %v1936, %v1940
        %v1943 = vmul.f32 %v1937, %v1940
        %v1944 = vld [vmem:[%s5] sm:$0x1]
        %v1945 = vunpack.c.l.bf16 %v1944
        %v1946 = vperm.slane %v1945, 0
        %v1947 = vadd.f32 %v1941, %v1946
        %v1948 = vadd.f32 %v1942, %v1946
        %v1949 = vadd.f32 %v1943, %v1946
        %v1950 = vld [vmem:[#allocation4] sm:$0xff]
        %v1951 = vld [vmem:[#allocation4 + $0x8] sm:$0xff]
        %v1952 = vld [vmem:[#allocation4 + $0x10] sm:$0xff]
        %v1953 = vld [vmem:[#allocation4 + $0x18] sm:$0xff]
        %v1954 = vld [vmem:[#allocation4 + $0x20] sm:$0xff]
        %v1955 = vld [vmem:[#allocation4 + $0x28] sm:$0xff]
        %v1956 = vld [vmem:[#allocation4 + $0x30] sm:$0xff]
        %v1957 = vld [vmem:[#allocation4 + $0x38] sm:$0xff]
        %v1958 = vld [vmem:[#allocation4 + $0x40] sm:$0xff]
        %v1959 = vld [vmem:[#allocation4 + $0x48] sm:$0xff]
        %v1960 = vld [vmem:[#allocation4 + $0x50] sm:$0xff]
        %v1961 = vld [vmem:[#allocation4 + $0x58] sm:$0xff]
        %v1962 = vld [vmem:[#allocation4 + $0x60] sm:$0xff]
        %v1963 = vld [vmem:[#allocation4 + $0x68] sm:$0xff]
        %v1964 = vld [vmem:[#allocation4 + $0x70] sm:$0xff]
        %v1965 = vld [vmem:[#allocation4 + $0x78] sm:$0xff]
        %v1966 = vpack.c.bf16 %v1948, %v1947
        %v1967 = vpack.c.bf16 %v1949, %v1949
        %v1968 = vld [vmem:[%s7] sm:$0x3]
        %v1969 = vunpack.c.l.bf16 %v1968
        %v1971 = vperm.slane %v1969, 0
        %v1972 = vperm.slane %v1969, 2
        %v1975 = vperm.slane %v1971, 0
        %v1976 = vperm.slane %v1972, 0
        %v1993 = vunpack.c.l.b16 %v1950
        %v1994 = vunpack.c.h.b16 %v1950
        %v1995 = vunpack.c.l.b16 %v1951
        %v1996 = vunpack.c.h.b16 %v1951
        %v1997 = vunpack.c.l.b16 %v1952
        %v1998 = vunpack.c.h.b16 %v1952
        %v1999 = vunpack.c.l.b16 %v1953
        %v2000 = vunpack.c.h.b16 %v1953
        %v2001 = vunpack.c.l.b16 %v1954
        %v2002 = vunpack.c.h.b16 %v1954
        %v2003 = vunpack.c.l.b16 %v1955
        %v2004 = vunpack.c.h.b16 %v1955
        %v2005 = vunpack.c.l.b16 %v1956
        %v2006 = vunpack.c.h.b16 %v1956
        %v2007 = vunpack.c.l.b16 %v1957
        %v2008 = vunpack.c.h.b16 %v1957
        %v2009 = vunpack.c.l.b16 %v1958
        %v2010 = vunpack.c.h.b16 %v1958
        %v2011 = vunpack.c.l.b16 %v1959
        %v2012 = vunpack.c.h.b16 %v1959
        %v2013 = vunpack.c.l.b16 %v1960
        %v2014 = vunpack.c.h.b16 %v1960
        %v2015 = vunpack.c.l.b16 %v1961
        %v2016 = vunpack.c.h.b16 %v1961
        %v2017 = vunpack.c.l.b16 %v1962
        %v2018 = vunpack.c.h.b16 %v1962
        %v2019 = vunpack.c.l.b16 %v1963
        %v2020 = vunpack.c.h.b16 %v1963
        %v2021 = vunpack.c.l.b16 %v1964
        %v2022 = vunpack.c.h.b16 %v1964
        %v2023 = vunpack.c.l.b16 %v1965
        %v2024 = vunpack.c.h.b16 %v1965
        %v2025 = vpack.c.b16 %v1995, %v1993
        %v2026 = vpack.c.b16 %v1996, %v1994
        %v2027 = vpack.c.b16 %v1999, %v1997
        %v2028 = vpack.c.b16 %v2000, %v1998
        %v2029 = vpack.c.b16 %v2003, %v2001
        %v2030 = vpack.c.b16 %v2004, %v2002
        %v2031 = vpack.c.b16 %v2007, %v2005
        %v2032 = vpack.c.b16 %v2008, %v2006
        %v2033 = vpack.c.b16 %v2011, %v2009
        %v2034 = vpack.c.b16 %v2012, %v2010
        %v2035 = vpack.c.b16 %v2015, %v2013
        %v2036 = vpack.c.b16 %v2016, %v2014
        %v2037 = vpack.c.b16 %v2019, %v2017
        %v2038 = vpack.c.b16 %v2020, %v2018
        %v2039 = vpack.c.b16 %v2023, %v2021
        %v2040 = vpack.c.b16 %v2024, %v2022
        %2057 = vmatpush.bf16.msra.mxu0 %v2039
        %2058 = vmatpush.bf16.msra.mxu0 %v2037
        %2059 = vmatpush.bf16.msra.mxu0 %v2035
        %2060 = vmatpush.bf16.msra.mxu0 %v2033
        %2061 = vmatpush.bf16.msra.mxu0 %v2031
        %2062 = vmatpush.bf16.msra.mxu0 %v2029
        %2063 = vmatpush.bf16.msra.mxu0 %v2027
        %2064 = vmatpush.bf16.msra.mxu0 %v2025
        %2065 = vmatmul.bf16.gmra.mxu0 %v1966
        %v2066 = vpop.f32.mrf.mxu0
        %v2067 = vadd.f32 %v1975, %v2066
        %v2068 = vpop.f32.mrf.mxu0
        %v2069 = vadd.f32 %v1975, %v2068
        %2070 = vmatmul.bf16.gmra.mxu0 %v1967
        %v2071 = vpop.f32.mrf.mxu0
        %v2072 = vadd.f32 %v1975, %v2071
        %v2073 = vpop.f32.mrf.mxu0
        %2074 = vdwg.mxu0
        %2075 = vmatpush.bf16.msra.mxu0 %v2040
        %2076 = vmatpush.bf16.msra.mxu0 %v2038
        %2077 = vmatpush.bf16.msra.mxu0 %v2036
        %2078 = vmatpush.bf16.msra.mxu0 %v2034
        %2079 = vmatpush.bf16.msra.mxu0 %v2032
        %2080 = vmatpush.bf16.msra.mxu0 %v2030
        %2081 = vmatpush.bf16.msra.mxu0 %v2028
        %2082 = vmatpush.bf16.msra.mxu0 %v2026
        %2083 = vmatmul.bf16.gmra.mxu0 %v1966
        %v2084 = vpop.f32.mrf.mxu0
        %v2085 = vadd.f32 %v1976, %v2084
        %v2086 = vpop.f32.mrf.mxu0
        %v2087 = vadd.f32 %v1976, %v2086
        %2088 = vmatmul.bf16.gmra.mxu0 %v1967
        %v2089 = vpop.f32.mrf.mxu0
        %v2090 = vadd.f32 %v1976, %v2089
        %v2091 = vpop.f32.mrf.mxu0
        %2092 = vdwg.mxu0
        %v2093 = vxor.u32 %v2085, 2147483648
        %v2094 = vxor.u32 %v2087, 2147483648
        %v2095 = vxor.u32 %v2090, 2147483648
        %v2096 = vmul.f32 %v2093, 1.442695
        %v2097 = vpow.pop %v2096
        %v2098 = vmul.f32 %v2094, 1.442695
        %v2099 = vpow.pop %v2098
        %v2100 = vmul.f32 %v2095, 1.442695
        %v2101 = vpow.pop %v2100
        %v2102 = vadd.f32 %v2097, 1.0
        %v2103 = vadd.f32 %v2099, 1.0
        %v2104 = vadd.f32 %v2101, 1.0
        %v2105 = vrcp.pop %v2102
        %v2106 = vmul.f32 %v2102, %v2105
        %v2107 = vsub.f32 1.0, %v2106
        %v2108 = vmul.f32 %v2105, %v2107
        %v2109 = vadd.f32 %v2105, %v2108
        %vm2110 = vweird.f32 %v2102
        %vm2111 = vweird.f32 %v2105
        %vm2112 = vmor %vm2110, %vm2111
        %v2113 = vsel %vm2112, %v2105, %v2109
        %v2114 = vand.u32 2147483647, %v2102
        %vm2115 = vcmp.eq.f32.partialorder %v2114, 8.507059e+37
        %v2116 = vand.u32 %v2102, 2147483648
        %v2117 = vor.u32 1.1754944e-38, %v2116
        %v2118 = vsel %vm2115, %v2117, %v2113
        %v2119 = vmul.f32 1.0, %v2118
        %v2120 = vrcp.pop %v2103
        %v2121 = vmul.f32 %v2103, %v2120
        %v2122 = vsub.f32 1.0, %v2121
        %v2123 = vmul.f32 %v2120, %v2122
        %v2124 = vadd.f32 %v2120, %v2123
        %vm2125 = vweird.f32 %v2103
        %vm2126 = vweird.f32 %v2120
        %vm2127 = vmor %vm2125, %vm2126
        %v2128 = vsel %vm2127, %v2120, %v2124
        %v2129 = vand.u32 2147483647, %v2103
        %vm2130 = vcmp.eq.f32.partialorder %v2129, 8.507059e+37
        %v2131 = vand.u32 %v2103, 2147483648
        %v2132 = vor.u32 1.1754944e-38, %v2131
        %v2133 = vsel %vm2130, %v2132, %v2128
        %v2134 = vmul.f32 1.0, %v2133
        %v2135 = vrcp.pop %v2104
        %v2136 = vmul.f32 %v2104, %v2135
        %v2137 = vsub.f32 1.0, %v2136
        %v2138 = vmul.f32 %v2135, %v2137
        %v2139 = vadd.f32 %v2135, %v2138
        %vm2140 = vweird.f32 %v2104
        %vm2141 = vweird.f32 %v2135
        %vm2142 = vmor %vm2140, %vm2141
        %v2143 = vsel %vm2142, %v2135, %v2139
        %v2144 = vand.u32 2147483647, %v2104
        %vm2145 = vcmp.eq.f32.partialorder %v2144, 8.507059e+37
        %v2146 = vand.u32 %v2104, 2147483648
        %v2147 = vor.u32 1.1754944e-38, %v2146
        %v2148 = vsel %vm2145, %v2147, %v2143
        %v2149 = vmul.f32 1.0, %v2148
        %v2150 = vmul.f32 %v2067, %v2119
        %v2151 = vmul.f32 %v2069, %v2134
        %v2152 = vmul.f32 %v2072, %v2149
        %vm2156 = vcmask 1041408
        %v2157 = vrot.slane %v2150, 6
        %v2158 = vrot.slane %v2151, 6
        %v2159 = vsel %vm2156, %v2157, %v2158
        %v2160 = vrot.slane %v2152, 6
        %v2161 = vsel %vm2156, %v2158, %v2160
        %v2166 = vsel %vm2156, 0.0, %v2157
        %v2167 = vsel %vm2156, %v2160, 0.0
        %v2168 = vld [vmem:[%s8] sm:$0x7]
        %v2169 = vunpack.c.l.bf16 %v2168
        %v2170 = vperm.slane %v2169, 0
        %v2171 = vmul.f32 %v2166, %v2170
        %v2172 = vmul.f32 %v2159, %v2170
        %v2173 = vmul.f32 %v2161, %v2170
        %v2174 = vadd.f32 %v2171, 0.0
        %v2175 = vadd.f32 %v2172, 0.0
        %v2176 = vadd.f32 %v2173, 0.0
        %v2177 = vperm.slane %v2169, 1
        %v2178 = vmul.f32 %v2166, %v2177
        %v2179 = vmul.f32 %v2159, %v2177
        %v2180 = vmul.f32 %v2161, %v2177
        %v2181 = vmul.f32 %v2167, %v2177
        %vm2186 = vcmask 1046528
        %v2187 = vrot.slane %v2178, 1
        %v2188 = vrot.slane %v2179, 1
        %v2189 = vsel %vm2186, %v2187, %v2188
        %v2190 = vrot.slane %v2180, 1
        %v2191 = vsel %vm2186, %v2188, %v2190
        %v2192 = vrot.slane %v2181, 1
        %v2193 = vsel %vm2186, %v2190, %v2192
        %v2197 = vadd.f32 %v2174, %v2189
        %v2198 = vadd.f32 %v2175, %v2191
        %v2199 = vadd.f32 %v2176, %v2193
        %v2200 = vperm.slane %v2169, 2
        %v2201 = vmul.f32 %v2166, %v2200
        %v2202 = vmul.f32 %v2159, %v2200
        %v2203 = vmul.f32 %v2161, %v2200
        %v2204 = vmul.f32 %v2167, %v2200
        %vm2209 = vcmask 1045504
        %v2210 = vrot.slane %v2201, 2
        %v2211 = vrot.slane %v2202, 2
        %v2212 = vsel %vm2209, %v2210, %v2211
        %v2213 = vrot.slane %v2203, 2
        %v2214 = vsel %vm2209, %v2211, %v2213
        %v2215 = vrot.slane %v2204, 2
        %v2216 = vsel %vm2209, %v2213, %v2215
        %v2220 = vadd.f32 %v2197, %v2212
        %v2221 = vadd.f32 %v2198, %v2214
        %v2222 = vadd.f32 %v2199, %v2216
        %v2223 = vperm.slane %v2169, 3
        %v2224 = vmul.f32 %v2166, %v2223
        %v2225 = vmul.f32 %v2159, %v2223
        %v2226 = vmul.f32 %v2161, %v2223
        %v2227 = vmul.f32 %v2167, %v2223
        %vm2232 = vcmask 1044480
        %v2233 = vrot.slane %v2224, 3
        %v2234 = vrot.slane %v2225, 3
        %v2235 = vsel %vm2232, %v2233, %v2234
        %v2236 = vrot.slane %v2226, 3
        %v2237 = vsel %vm2232, %v2234, %v2236
        %v2238 = vrot.slane %v2227, 3
        %v2239 = vsel %vm2232, %v2236, %v2238
        %v2243 = vadd.f32 %v2220, %v2235
        %v2244 = vadd.f32 %v2221, %v2237
        %v2245 = vadd.f32 %v2222, %v2239
        %v2246 = vperm.slane %v2169, 4
        %v2247 = vmul.f32 %v2166, %v2246
        %v2248 = vmul.f32 %v2159, %v2246
        %v2249 = vmul.f32 %v2161, %v2246
        %v2250 = vmul.f32 %v2167, %v2246
        %v2255 = vrot.slane %v2247, 4
        %v2256 = vrot.slane %v2248, 4
        %v2257 = vsel %vm1246, %v2255, %v2256
        %v2258 = vrot.slane %v2249, 4
        %v2259 = vsel %vm1246, %v2256, %v2258
        %v2260 = vrot.slane %v2250, 4
        %v2261 = vsel %vm1246, %v2258, %v2260
        %v2265 = vadd.f32 %v2243, %v2257
        %v2266 = vadd.f32 %v2244, %v2259
        %v2267 = vadd.f32 %v2245, %v2261
        %v2268 = vld [vmem:[%s9] sm:$0x1]
        %v2269 = vunpack.c.l.bf16 %v2268
        %v2270 = vperm.slane %v2269, 0
        %v2271 = vadd.f32 %v2265, %v2270
        %v2272 = vadd.f32 %v2266, %v2270
        %v2273 = vadd.f32 %v2267, %v2270
        %v2274 = vld [vmem:[%s10] sm:$0x1]
        %v2276 = vperm.slane %v2274, 0
        %v2278 = vmul.f32 %v2271, %v2276
        %v2279 = vmul.f32 %v2272, %v2276
        %v2280 = vmul.f32 %v2273, %v2276
        %v2281 = vld [vmem:[%s11] sm:$0x1]
        %v2283 = vperm.slane %v2281, 0
        %v2285 = vadd.f32 %v2278, %v2283
        %v2286 = vadd.f32 %v2279, %v2283
        %v2287 = vadd.f32 %v2280, %v2283
        %v2288 = vxor.u32 %v2285, 2147483648
        %v2289 = vxor.u32 %v2286, 2147483648
        %v2290 = vxor.u32 %v2287, 2147483648
        %v2291 = vmul.f32 %v2288, 1.442695
        %v2292 = vpow.pop %v2291
        %v2293 = vmul.f32 %v2289, 1.442695
        %v2294 = vpow.pop %v2293
        %v2295 = vmul.f32 %v2290, 1.442695
        %v2296 = vpow.pop %v2295
        %v2297 = vadd.f32 %v2292, 1.0
        %v2298 = vadd.f32 %v2294, 1.0
        %v2299 = vadd.f32 %v2296, 1.0
        %v2300 = vrcp.pop %v2297
        %v2301 = vmul.f32 %v2297, %v2300
        %v2302 = vsub.f32 1.0, %v2301
        %v2303 = vmul.f32 %v2300, %v2302
        %v2304 = vadd.f32 %v2300, %v2303
        %vm2305 = vweird.f32 %v2297
        %vm2306 = vweird.f32 %v2300
        %vm2307 = vmor %vm2305, %vm2306
        %v2308 = vsel %vm2307, %v2300, %v2304
        %v2309 = vand.u32 2147483647, %v2297
        %vm2310 = vcmp.eq.f32.partialorder %v2309, 8.507059e+37
        %v2311 = vand.u32 %v2297, 2147483648
        %v2312 = vor.u32 1.1754944e-38, %v2311
        %v2313 = vsel %vm2310, %v2312, %v2308
        %v2314 = vmul.f32 1.0, %v2313
        %v2315 = vrcp.pop %v2298
        %v2316 = vmul.f32 %v2298, %v2315
        %v2317 = vsub.f32 1.0, %v2316
        %v2318 = vmul.f32 %v2315, %v2317
        %v2319 = vadd.f32 %v2315, %v2318
        %vm2320 = vweird.f32 %v2298
        %vm2321 = vweird.f32 %v2315
        %vm2322 = vmor %vm2320, %vm2321
        %v2323 = vsel %vm2322, %v2315, %v2319
        %v2324 = vand.u32 2147483647, %v2298
        %vm2325 = vcmp.eq.f32.partialorder %v2324, 8.507059e+37
        %v2326 = vand.u32 %v2298, 2147483648
        %v2327 = vor.u32 1.1754944e-38, %v2326
        %v2328 = vsel %vm2325, %v2327, %v2323
        %v2329 = vmul.f32 1.0, %v2328
        %v2330 = vrcp.pop %v2299
        %v2331 = vmul.f32 %v2299, %v2330
        %v2332 = vsub.f32 1.0, %v2331
        %v2333 = vmul.f32 %v2330, %v2332
        %v2334 = vadd.f32 %v2330, %v2333
        %vm2335 = vweird.f32 %v2299
        %vm2336 = vweird.f32 %v2330
        %vm2337 = vmor %vm2335, %vm2336
        %v2338 = vsel %vm2337, %v2330, %v2334
        %v2339 = vand.u32 2147483647, %v2299
        %vm2340 = vcmp.eq.f32.partialorder %v2339, 8.507059e+37
        %v2341 = vand.u32 %v2299, 2147483648
        %v2342 = vor.u32 1.1754944e-38, %v2341
        %v2343 = vsel %vm2340, %v2342, %v2338
        %v2344 = vmul.f32 1.0, %v2343
        %v2345 = vmul.f32 %v2285, %v2314
        %v2346 = vmul.f32 %v2286, %v2329
        %v2347 = vmul.f32 %v2287, %v2344
        %v2348 = vld [vmem:[#allocation6] sm:$0xf]
        %v2349 = vld [vmem:[#allocation6 + $0x4] sm:$0xf]
        %v2350 = vld [vmem:[#allocation6 + $0x8] sm:$0xf]
        %v2351 = vld [vmem:[#allocation6 + $0xc] sm:$0xf]
        %v2352 = vld [vmem:[#allocation6 + $0x10] sm:$0xf]
        %v2353 = vld [vmem:[#allocation6 + $0x14] sm:$0xf]
        %v2354 = vld [vmem:[#allocation6 + $0x18] sm:$0xf]
        %v2355 = vld [vmem:[#allocation6 + $0x1c] sm:$0xf]
        %v2356 = vld [vmem:[#allocation6 + $0x20] sm:$0xf]
        %v2357 = vld [vmem:[#allocation6 + $0x24] sm:$0xf]
        %v2358 = vld [vmem:[#allocation6 + $0x28] sm:$0xf]
        %v2359 = vld [vmem:[#allocation6 + $0x2c] sm:$0xf]
        %v2360 = vld [vmem:[#allocation6 + $0x30] sm:$0xf]
        %v2361 = vld [vmem:[#allocation6 + $0x34] sm:$0xf]
        %v2362 = vld [vmem:[#allocation6 + $0x38] sm:$0xf]
        %v2363 = vld [vmem:[#allocation6 + $0x3c] sm:$0xf]
        %v2364 = vpack.c.bf16 %v2346, %v2345
        %v2365 = vpack.c.bf16 %v2347, %v2347
        %v2366 = vld [vmem:[%s13] sm:$0x1]
        %v2367 = vunpack.c.l.bf16 %v2366
        %v2368 = vperm.slane %v2367, 0
        %v2385 = vunpack.c.l.b16 %v2348
        %v2386 = vunpack.c.l.b16 %v2349
        %v2387 = vunpack.c.l.b16 %v2350
        %v2388 = vunpack.c.l.b16 %v2351
        %v2389 = vunpack.c.l.b16 %v2352
        %v2390 = vunpack.c.l.b16 %v2353
        %v2391 = vunpack.c.l.b16 %v2354
        %v2392 = vunpack.c.l.b16 %v2355
        %v2393 = vunpack.c.l.b16 %v2356
        %v2394 = vunpack.c.l.b16 %v2357
        %v2395 = vunpack.c.l.b16 %v2358
        %v2396 = vunpack.c.l.b16 %v2359
        %v2397 = vunpack.c.l.b16 %v2360
        %v2398 = vunpack.c.l.b16 %v2361
        %v2399 = vunpack.c.l.b16 %v2362
        %v2400 = vunpack.c.l.b16 %v2363
        %v2401 = vpack.c.b16 %v2386, %v2385
        %v2402 = vpack.c.b16 %v2388, %v2387
        %v2403 = vpack.c.b16 %v2390, %v2389
        %v2404 = vpack.c.b16 %v2392, %v2391
        %v2405 = vpack.c.b16 %v2394, %v2393
        %v2406 = vpack.c.b16 %v2396, %v2395
        %v2407 = vpack.c.b16 %v2398, %v2397
        %v2408 = vpack.c.b16 %v2400, %v2399
        %2417 = vmatpush.bf16.msra.mxu0 %v2408
        %2418 = vmatpush.bf16.msra.mxu0 %v2407
        %2419 = vmatpush.bf16.msra.mxu0 %v2406
        %2420 = vmatpush.bf16.msra.mxu0 %v2405
        %2421 = vmatpush.bf16.msra.mxu0 %v2404
        %2422 = vmatpush.bf16.msra.mxu0 %v2403
        %2423 = vmatpush.bf16.msra.mxu0 %v2402
        %2424 = vmatpush.bf16.msra.mxu0 %v2401
        %2425 = vmatmul.bf16.gmra.mxu0 %v2364
        %v2426 = vpop.f32.mrf.mxu0
        %v2427 = vadd.f32 %v2368, %v2426
        %v2428 = vpop.f32.mrf.mxu0
        %v2429 = vadd.f32 %v2368, %v2428
        %2430 = vmatmul.bf16.gmra.mxu0 %v2365
        %v2431 = vpop.f32.mrf.mxu0
        %v2432 = vadd.f32 %v2368, %v2431
        %v2433 = vpop.f32.mrf.mxu0
        %2434 = vdwg.mxu0
        %v2435 = vadd.f32 %v1868, %v2427
        %v2436 = vadd.f32 %v1869, %v2429
        %v2437 = vadd.f32 %v1870, %v2432
        %2438 = vadd.xlane.f32.xlu0 %v2435
        %v2439 = vpop.xlane.xlu0 %2438
        %2440 = vadd.xlane.f32.xlu0 %v2436
        %v2441 = vpop.xlane.xlu0 %2440
        %2442 = vadd.xlane.f32.xlu0 %v2437
        %v2443 = vpop.xlane.xlu0 %2442
        %v2444 = vmul.f32 %v2439, %v1883
        %v2445 = vmul.f32 %v2441, %v1883
        %v2446 = vmul.f32 %v2443, %v1883
        %v2447 = vsub.f32 %v2435, %v2444
        %v2448 = vsub.f32 %v2436, %v2445
        %v2449 = vsub.f32 %v2437, %v2446
        %v2450 = vmul.f32 %v2447, %v2447
        %v2451 = vmul.f32 %v2448, %v2448
        %v2452 = vmul.f32 %v2449, %v2449
        %2453 = vadd.xlane.f32.xlu0 %v2450
        %v2454 = vpop.xlane.xlu0 %2453
        %2455 = vadd.xlane.f32.xlu0 %v2451
        %v2456 = vpop.xlane.xlu0 %2455
        %2457 = vadd.xlane.f32.xlu0 %v2452
        %v2458 = vpop.xlane.xlu0 %2457
        %v2459 = vmul.f32 %v2454, %v1883
        %v2460 = vmul.f32 %v2456, %v1883
        %v2461 = vmul.f32 %v2458, %v1883
        %v2462 = vadd.f32 %v2459, 1e-05
        %v2463 = vadd.f32 %v2460, 1e-05
        %v2464 = vadd.f32 %v2461, 1e-05
        %v2465 = vrsqrt.pop %v2462
        %v2466 = vmul.f32 %v2465, %v2462
        %v2467 = vmul.f32 %v2466, %v2465
        %v2468 = vmul.f32 0.5, %v2467
        %v2469 = vsub.f32 1.5, %v2468
        %v2470 = vmul.f32 %v2465, %v2469
        %vm2471 = vweird.f32 %v2462
        %vm2472 = vweird.f32 %v2465
        %vm2473 = vmor %vm2471, %vm2472
        %v2474 = vsel %vm2473, %v2465, %v2470
        %v2475 = vrsqrt.pop %v2463
        %v2476 = vmul.f32 %v2475, %v2463
        %v2477 = vmul.f32 %v2476, %v2475
        %v2478 = vmul.f32 0.5, %v2477
        %v2479 = vsub.f32 1.5, %v2478
        %v2480 = vmul.f32 %v2475, %v2479
        %vm2481 = vweird.f32 %v2463
        %vm2482 = vweird.f32 %v2475
        %vm2483 = vmor %vm2481, %vm2482
        %v2484 = vsel %vm2483, %v2475, %v2480
        %v2485 = vrsqrt.pop %v2464
        %v2486 = vmul.f32 %v2485, %v2464
        %v2487 = vmul.f32 %v2486, %v2485
        %v2488 = vmul.f32 0.5, %v2487
        %v2489 = vsub.f32 1.5, %v2488
        %v2490 = vmul.f32 %v2485, %v2489
        %vm2491 = vweird.f32 %v2464
        %vm2492 = vweird.f32 %v2485
        %vm2493 = vmor %vm2491, %vm2492
        %v2494 = vsel %vm2493, %v2485, %v2490
        %v2495 = vmul.f32 %v2447, %v2474
        %v2496 = vmul.f32 %v2448, %v2484
        %v2497 = vmul.f32 %v2449, %v2494
        %v2498 = vld [vmem:[%s14] sm:$0x1]
        %v2499 = vunpack.c.l.bf16 %v2498
        %v2500 = vperm.slane %v2499, 0
        %v2501 = vmul.f32 %v2495, %v2500
        %v2502 = vmul.f32 %v2496, %v2500
        %v2503 = vmul.f32 %v2497, %v2500
        %v2504 = vld [vmem:[%s15] sm:$0x1]
        %v2505 = vunpack.c.l.bf16 %v2504
        %v2506 = vperm.slane %v2505, 0
        %v2507 = vadd.f32 %v2501, %v2506
        %v2508 = vadd.f32 %v2502, %v2506
        %v2509 = vadd.f32 %v2503, %v2506
        %v2510 = vld [vmem:[#allocation7] sm:$0xff]
        %v2511 = vld [vmem:[#allocation7 + $0x8] sm:$0xff]
        %v2512 = vld [vmem:[#allocation7 + $0x10] sm:$0xff]
        %v2513 = vld [vmem:[#allocation7 + $0x18] sm:$0xff]
        %v2514 = vld [vmem:[#allocation7 + $0x20] sm:$0xff]
        %v2515 = vld [vmem:[#allocation7 + $0x28] sm:$0xff]
        %v2516 = vld [vmem:[#allocation7 + $0x30] sm:$0xff]
        %v2517 = vld [vmem:[#allocation7 + $0x38] sm:$0xff]
        %v2518 = vld [vmem:[#allocation7 + $0x40] sm:$0xff]
        %v2519 = vld [vmem:[#allocation7 + $0x48] sm:$0xff]
        %v2520 = vld [vmem:[#allocation7 + $0x50] sm:$0xff]
        %v2521 = vld [vmem:[#allocation7 + $0x58] sm:$0xff]
        %v2522 = vld [vmem:[#allocation7 + $0x60] sm:$0xff]
        %v2523 = vld [vmem:[#allocation7 + $0x68] sm:$0xff]
        %v2524 = vld [vmem:[#allocation7 + $0x70] sm:$0xff]
        %v2525 = vld [vmem:[#allocation7 + $0x78] sm:$0xff]
        %v2526 = vpack.c.bf16 %v2508, %v2507
        %v2527 = vpack.c.bf16 %v2509, %v2509
        %v2528 = vld [vmem:[%s17] sm:$0x3]
        %v2529 = vunpack.c.l.bf16 %v2528
        %v2531 = vperm.slane %v2529, 0
        %v2532 = vperm.slane %v2529, 2
        %v2535 = vperm.slane %v2531, 0
        %v2536 = vperm.slane %v2532, 0
        %v2553 = vunpack.c.l.b16 %v2510
        %v2554 = vunpack.c.h.b16 %v2510
        %v2555 = vunpack.c.l.b16 %v2511
        %v2556 = vunpack.c.h.b16 %v2511
        %v2557 = vunpack.c.l.b16 %v2512
        %v2558 = vunpack.c.h.b16 %v2512
        %v2559 = vunpack.c.l.b16 %v2513
        %v2560 = vunpack.c.h.b16 %v2513
        %v2561 = vunpack.c.l.b16 %v2514
        %v2562 = vunpack.c.h.b16 %v2514
        %v2563 = vunpack.c.l.b16 %v2515
        %v2564 = vunpack.c.h.b16 %v2515
        %v2565 = vunpack.c.l.b16 %v2516
        %v2566 = vunpack.c.h.b16 %v2516
        %v2567 = vunpack.c.l.b16 %v2517
        %v2568 = vunpack.c.h.b16 %v2517
        %v2569 = vunpack.c.l.b16 %v2518
        %v2570 = vunpack.c.h.b16 %v2518
        %v2571 = vunpack.c.l.b16 %v2519
        %v2572 = vunpack.c.h.b16 %v2519
        %v2573 = vunpack.c.l.b16 %v2520
        %v2574 = vunpack.c.h.b16 %v2520
        %v2575 = vunpack.c.l.b16 %v2521
        %v2576 = vunpack.c.h.b16 %v2521
        %v2577 = vunpack.c.l.b16 %v2522
        %v2578 = vunpack.c.h.b16 %v2522
        %v2579 = vunpack.c.l.b16 %v2523
        %v2580 = vunpack.c.h.b16 %v2523
        %v2581 = vunpack.c.l.b16 %v2524
        %v2582 = vunpack.c.h.b16 %v2524
        %v2583 = vunpack.c.l.b16 %v2525
        %v2584 = vunpack.c.h.b16 %v2525
        %v2585 = vpack.c.b16 %v2555, %v2553
        %v2586 = vpack.c.b16 %v2556, %v2554
        %v2587 = vpack.c.b16 %v2559, %v2557
        %v2588 = vpack.c.b16 %v2560, %v2558
        %v2589 = vpack.c.b16 %v2563, %v2561
        %v2590 = vpack.c.b16 %v2564, %v2562
        %v2591 = vpack.c.b16 %v2567, %v2565
        %v2592 = vpack.c.b16 %v2568, %v2566
        %v2593 = vpack.c.b16 %v2571, %v2569
        %v2594 = vpack.c.b16 %v2572, %v2570
        %v2595 = vpack.c.b16 %v2575, %v2573
        %v2596 = vpack.c.b16 %v2576, %v2574
        %v2597 = vpack.c.b16 %v2579, %v2577
        %v2598 = vpack.c.b16 %v2580, %v2578
        %v2599 = vpack.c.b16 %v2583, %v2581
        %v2600 = vpack.c.b16 %v2584, %v2582
        %2617 = vmatpush.bf16.msra.mxu0 %v2599
        %2618 = vmatpush.bf16.msra.mxu0 %v2597
        %2619 = vmatpush.bf16.msra.mxu0 %v2595
        %2620 = vmatpush.bf16.msra.mxu0 %v2593
        %2621 = vmatpush.bf16.msra.mxu0 %v2591
        %2622 = vmatpush.bf16.msra.mxu0 %v2589
        %2623 = vmatpush.bf16.msra.mxu0 %v2587
        %2624 = vmatpush.bf16.msra.mxu0 %v2585
        %2625 = vmatmul.bf16.gmra.mxu0 %v2526
        %v2626 = vpop.f32.mrf.mxu0
        %v2627 = vadd.f32 %v2535, %v2626
        %v2628 = vpop.f32.mrf.mxu0
        %v2629 = vadd.f32 %v2535, %v2628
        %2630 = vmatmul.bf16.gmra.mxu0 %v2527
        %v2631 = vpop.f32.mrf.mxu0
        %v2632 = vadd.f32 %v2535, %v2631
        %v2633 = vpop.f32.mrf.mxu0
        %2634 = vdwg.mxu0
        %2635 = vmatpush.bf16.msra.mxu0 %v2600
        %2636 = vmatpush.bf16.msra.mxu0 %v2598
        %2637 = vmatpush.bf16.msra.mxu0 %v2596
        %2638 = vmatpush.bf16.msra.mxu0 %v2594
        %2639 = vmatpush.bf16.msra.mxu0 %v2592
        %2640 = vmatpush.bf16.msra.mxu0 %v2590
        %2641 = vmatpush.bf16.msra.mxu0 %v2588
        %2642 = vmatpush.bf16.msra.mxu0 %v2586
        %2643 = vmatmul.bf16.gmra.mxu0 %v2526
        %v2644 = vpop.f32.mrf.mxu0
        %v2645 = vadd.f32 %v2536, %v2644
        %v2646 = vpop.f32.mrf.mxu0
        %v2647 = vadd.f32 %v2536, %v2646
        %2648 = vmatmul.bf16.gmra.mxu0 %v2527
        %v2649 = vpop.f32.mrf.mxu0
        %v2650 = vadd.f32 %v2536, %v2649
        %v2651 = vpop.f32.mrf.mxu0
        %2652 = vdwg.mxu0
        %v2653 = vxor.u32 %v2627, 2147483648
        %v2654 = vxor.u32 %v2645, 2147483648
        %v2655 = vxor.u32 %v2629, 2147483648
        %v2656 = vxor.u32 %v2647, 2147483648
        %v2657 = vxor.u32 %v2632, 2147483648
        %v2658 = vxor.u32 %v2650, 2147483648
        %v2659 = vmul.f32 %v2653, 1.442695
        %v2660 = vpow.pop %v2659
        %v2661 = vmul.f32 %v2654, 1.442695
        %v2662 = vpow.pop %v2661
        %v2663 = vmul.f32 %v2655, 1.442695
        %v2664 = vpow.pop %v2663
        %v2665 = vmul.f32 %v2656, 1.442695
        %v2666 = vpow.pop %v2665
        %v2667 = vmul.f32 %v2657, 1.442695
        %v2668 = vpow.pop %v2667
        %v2669 = vmul.f32 %v2658, 1.442695
        %v2670 = vpow.pop %v2669
        %v2671 = vadd.f32 %v2660, 1.0
        %v2672 = vadd.f32 %v2662, 1.0
        %v2673 = vadd.f32 %v2664, 1.0
        %v2674 = vadd.f32 %v2666, 1.0
        %v2675 = vadd.f32 %v2668, 1.0
        %v2676 = vadd.f32 %v2670, 1.0
        %v2677 = vrcp.pop %v2671
        %v2678 = vmul.f32 %v2671, %v2677
        %v2679 = vsub.f32 1.0, %v2678
        %v2680 = vmul.f32 %v2677, %v2679
        %v2681 = vadd.f32 %v2677, %v2680
        %vm2682 = vweird.f32 %v2671
        %vm2683 = vweird.f32 %v2677
        %vm2684 = vmor %vm2682, %vm2683
        %v2685 = vsel %vm2684, %v2677, %v2681
        %v2686 = vand.u32 2147483647, %v2671
        %vm2687 = vcmp.eq.f32.partialorder %v2686, 8.507059e+37
        %v2688 = vand.u32 %v2671, 2147483648
        %v2689 = vor.u32 1.1754944e-38, %v2688
        %v2690 = vsel %vm2687, %v2689, %v2685
        %v2691 = vmul.f32 1.0, %v2690
        %v2692 = vrcp.pop %v2672
        %v2693 = vmul.f32 %v2672, %v2692
        %v2694 = vsub.f32 1.0, %v2693
        %v2695 = vmul.f32 %v2692, %v2694
        %v2696 = vadd.f32 %v2692, %v2695
        %vm2697 = vweird.f32 %v2672
        %vm2698 = vweird.f32 %v2692
        %vm2699 = vmor %vm2697, %vm2698
        %v2700 = vsel %vm2699, %v2692, %v2696
        %v2701 = vand.u32 2147483647, %v2672
        %vm2702 = vcmp.eq.f32.partialorder %v2701, 8.507059e+37
        %v2703 = vand.u32 %v2672, 2147483648
        %v2704 = vor.u32 1.1754944e-38, %v2703
        %v2705 = vsel %vm2702, %v2704, %v2700
        %v2706 = vmul.f32 1.0, %v2705
        %v2707 = vrcp.pop %v2673
        %v2708 = vmul.f32 %v2673, %v2707
        %v2709 = vsub.f32 1.0, %v2708
        %v2710 = vmul.f32 %v2707, %v2709
        %v2711 = vadd.f32 %v2707, %v2710
        %vm2712 = vweird.f32 %v2673
        %vm2713 = vweird.f32 %v2707
        %vm2714 = vmor %vm2712, %vm2713
        %v2715 = vsel %vm2714, %v2707, %v2711
        %v2716 = vand.u32 2147483647, %v2673
        %vm2717 = vcmp.eq.f32.partialorder %v2716, 8.507059e+37
        %v2718 = vand.u32 %v2673, 2147483648
        %v2719 = vor.u32 1.1754944e-38, %v2718
        %v2720 = vsel %vm2717, %v2719, %v2715
        %v2721 = vmul.f32 1.0, %v2720
        %v2722 = vrcp.pop %v2674
        %v2723 = vmul.f32 %v2674, %v2722
        %v2724 = vsub.f32 1.0, %v2723
        %v2725 = vmul.f32 %v2722, %v2724
        %v2726 = vadd.f32 %v2722, %v2725
        %vm2727 = vweird.f32 %v2674
        %vm2728 = vweird.f32 %v2722
        %vm2729 = vmor %vm2727, %vm2728
        %v2730 = vsel %vm2729, %v2722, %v2726
        %v2731 = vand.u32 2147483647, %v2674
        %vm2732 = vcmp.eq.f32.partialorder %v2731, 8.507059e+37
        %v2733 = vand.u32 %v2674, 2147483648
        %v2734 = vor.u32 1.1754944e-38, %v2733
        %v2735 = vsel %vm2732, %v2734, %v2730
        %v2736 = vmul.f32 1.0, %v2735
        %v2737 = vrcp.pop %v2675
        %v2738 = vmul.f32 %v2675, %v2737
        %v2739 = vsub.f32 1.0, %v2738
        %v2740 = vmul.f32 %v2737, %v2739
        %v2741 = vadd.f32 %v2737, %v2740
        %vm2742 = vweird.f32 %v2675
        %vm2743 = vweird.f32 %v2737
        %vm2744 = vmor %vm2742, %vm2743
        %v2745 = vsel %vm2744, %v2737, %v2741
        %v2746 = vand.u32 2147483647, %v2675
        %vm2747 = vcmp.eq.f32.partialorder %v2746, 8.507059e+37
        %v2748 = vand.u32 %v2675, 2147483648
        %v2749 = vor.u32 1.1754944e-38, %v2748
        %v2750 = vsel %vm2747, %v2749, %v2745
        %v2751 = vmul.f32 1.0, %v2750
        %v2752 = vrcp.pop %v2676
        %v2753 = vmul.f32 %v2676, %v2752
        %v2754 = vsub.f32 1.0, %v2753
        %v2755 = vmul.f32 %v2752, %v2754
        %v2756 = vadd.f32 %v2752, %v2755
        %vm2757 = vweird.f32 %v2676
        %vm2758 = vweird.f32 %v2752
        %vm2759 = vmor %vm2757, %vm2758
        %v2760 = vsel %vm2759, %v2752, %v2756
        %v2761 = vand.u32 2147483647, %v2676
        %vm2762 = vcmp.eq.f32.partialorder %v2761, 8.507059e+37
        %v2763 = vand.u32 %v2676, 2147483648
        %v2764 = vor.u32 1.1754944e-38, %v2763
        %v2765 = vsel %vm2762, %v2764, %v2760
        %v2766 = vmul.f32 1.0, %v2765
        %v2767 = vmul.f32 %v2627, %v2691
        %v2768 = vmul.f32 %v2645, %v2706
        %v2769 = vmul.f32 %v2629, %v2721
        %v2770 = vmul.f32 %v2647, %v2736
        %v2771 = vmul.f32 %v2632, %v2751
        %v2772 = vmul.f32 %v2650, %v2766
        %v2773 = vld [vmem:[#allocation9] sm:$0xf]
        %v2774 = vld [vmem:[#allocation9 + $0x4] sm:$0xf]
        %v2775 = vld [vmem:[#allocation9 + $0x8] sm:$0xf]
        %v2776 = vld [vmem:[#allocation9 + $0xc] sm:$0xf]
        %v2777 = vld [vmem:[#allocation9 + $0x10] sm:$0xf]
        %v2778 = vld [vmem:[#allocation9 + $0x14] sm:$0xf]
        %v2779 = vld [vmem:[#allocation9 + $0x18] sm:$0xf]
        %v2780 = vld [vmem:[#allocation9 + $0x1c] sm:$0xf]
        %v2781 = vld [vmem:[#allocation9 + $0x20] sm:$0xf]
        %v2782 = vld [vmem:[#allocation9 + $0x24] sm:$0xf]
        %v2783 = vld [vmem:[#allocation9 + $0x28] sm:$0xf]
        %v2784 = vld [vmem:[#allocation9 + $0x2c] sm:$0xf]
        %v2785 = vld [vmem:[#allocation9 + $0x30] sm:$0xf]
        %v2786 = vld [vmem:[#allocation9 + $0x34] sm:$0xf]
        %v2787 = vld [vmem:[#allocation9 + $0x38] sm:$0xf]
        %v2788 = vld [vmem:[#allocation9 + $0x3c] sm:$0xf]
        %v2789 = vld [vmem:[#allocation9 + $0x40] sm:$0xf]
        %v2790 = vld [vmem:[#allocation9 + $0x44] sm:$0xf]
        %v2791 = vld [vmem:[#allocation9 + $0x48] sm:$0xf]
        %v2792 = vld [vmem:[#allocation9 + $0x4c] sm:$0xf]
        %v2793 = vld [vmem:[#allocation9 + $0x50] sm:$0xf]
        %v2794 = vld [vmem:[#allocation9 + $0x54] sm:$0xf]
        %v2795 = vld [vmem:[#allocation9 + $0x58] sm:$0xf]
        %v2796 = vld [vmem:[#allocation9 + $0x5c] sm:$0xf]
        %v2797 = vld [vmem:[#allocation9 + $0x60] sm:$0xf]
        %v2798 = vld [vmem:[#allocation9 + $0x64] sm:$0xf]
        %v2799 = vld [vmem:[#allocation9 + $0x68] sm:$0xf]
        %v2800 = vld [vmem:[#allocation9 + $0x6c] sm:$0xf]
        %v2801 = vld [vmem:[#allocation9 + $0x70] sm:$0xf]
        %v2802 = vld [vmem:[#allocation9 + $0x74] sm:$0xf]
        %v2803 = vld [vmem:[#allocation9 + $0x78] sm:$0xf]
        %v2804 = vld [vmem:[#allocation9 + $0x7c] sm:$0xf]
        %v2805 = vpack.c.bf16 %v2769, %v2767
        %v2806 = vpack.c.bf16 %v2770, %v2768
        %v2807 = vpack.c.bf16 %v2771, %v2771
        %v2808 = vpack.c.bf16 %v2772, %v2772
        %v2809 = vld [vmem:[%s19] sm:$0x1]
        %v2810 = vunpack.c.l.bf16 %v2809
        %v2811 = vperm.slane %v2810, 0
        %v2844 = vunpack.c.l.b16 %v2773
        %v2845 = vunpack.c.l.b16 %v2774
        %v2846 = vunpack.c.l.b16 %v2775
        %v2847 = vunpack.c.l.b16 %v2776
        %v2848 = vunpack.c.l.b16 %v2777
        %v2849 = vunpack.c.l.b16 %v2778
        %v2850 = vunpack.c.l.b16 %v2779
        %v2851 = vunpack.c.l.b16 %v2780
        %v2852 = vunpack.c.l.b16 %v2781
        %v2853 = vunpack.c.l.b16 %v2782
        %v2854 = vunpack.c.l.b16 %v2783
        %v2855 = vunpack.c.l.b16 %v2784
        %v2856 = vunpack.c.l.b16 %v2785
        %v2857 = vunpack.c.l.b16 %v2786
        %v2858 = vunpack.c.l.b16 %v2787
        %v2859 = vunpack.c.l.b16 %v2788
        %v2860 = vunpack.c.l.b16 %v2789
        %v2861 = vunpack.c.l.b16 %v2790
        %v2862 = vunpack.c.l.b16 %v2791
        %v2863 = vunpack.c.l.b16 %v2792
        %v2864 = vunpack.c.l.b16 %v2793
        %v2865 = vunpack.c.l.b16 %v2794
        %v2866 = vunpack.c.l.b16 %v2795
        %v2867 = vunpack.c.l.b16 %v2796
        %v2868 = vunpack.c.l.b16 %v2797
        %v2869 = vunpack.c.l.b16 %v2798
        %v2870 = vunpack.c.l.b16 %v2799
        %v2871 = vunpack.c.l.b16 %v2800
        %v2872 = vunpack.c.l.b16 %v2801
        %v2873 = vunpack.c.l.b16 %v2802
        %v2874 = vunpack.c.l.b16 %v2803
        %v2875 = vunpack.c.l.b16 %v2804
        %v2876 = vpack.c.b16 %v2845, %v2844
        %v2877 = vpack.c.b16 %v2847, %v2846
        %v2878 = vpack.c.b16 %v2849, %v2848
        %v2879 = vpack.c.b16 %v2851, %v2850
        %v2880 = vpack.c.b16 %v2853, %v2852
        %v2881 = vpack.c.b16 %v2855, %v2854
        %v2882 = vpack.c.b16 %v2857, %v2856
        %v2883 = vpack.c.b16 %v2859, %v2858
        %v2884 = vpack.c.b16 %v2861, %v2860
        %v2885 = vpack.c.b16 %v2863, %v2862
        %v2886 = vpack.c.b16 %v2865, %v2864
        %v2887 = vpack.c.b16 %v2867, %v2866
        %v2888 = vpack.c.b16 %v2869, %v2868
        %v2889 = vpack.c.b16 %v2871, %v2870
        %v2890 = vpack.c.b16 %v2873, %v2872
        %v2891 = vpack.c.b16 %v2875, %v2874
        %2908 = vmatpush.bf16.msra.mxu0 %v2883
        %2909 = vmatpush.bf16.msra.mxu0 %v2882
        %2910 = vmatpush.bf16.msra.mxu0 %v2881
        %2911 = vmatpush.bf16.msra.mxu0 %v2880
        %2912 = vmatpush.bf16.msra.mxu0 %v2879
        %2913 = vmatpush.bf16.msra.mxu0 %v2878
        %2914 = vmatpush.bf16.msra.mxu0 %v2877
        %2915 = vmatpush.bf16.msra.mxu0 %v2876
        %2916 = vmatmul.bf16.gmra.mxu0 %v2805
        %v2917 = vpop.f32.mrf.mxu0
        %v2918 = vadd.f32 %v2811, %v2917
        %v2919 = vpop.f32.mrf.mxu0
        %v2920 = vadd.f32 %v2811, %v2919
        %2921 = vmatmul.bf16.gmra.mxu0 %v2807
        %v2922 = vpop.f32.mrf.mxu0
        %v2923 = vadd.f32 %v2811, %v2922
        %v2924 = vpop.f32.mrf.mxu0
        %2925 = vdwg.mxu0
        %2926 = vmatpush.bf16.msra.mxu0 %v2891
        %2927 = vmatpush.bf16.msra.mxu0 %v2890
        %2928 = vmatpush.bf16.msra.mxu0 %v2889
        %2929 = vmatpush.bf16.msra.mxu0 %v2888
        %2930 = vmatpush.bf16.msra.mxu0 %v2887
        %2931 = vmatpush.bf16.msra.mxu0 %v2886
        %2932 = vmatpush.bf16.msra.mxu0 %v2885
        %2933 = vmatpush.bf16.msra.mxu0 %v2884
        %2934 = vmatmul.bf16.gmra.mxu0 %v2806
        %v2935 = vpop.f32.mrf.mxu0
        %v2936 = vadd.f32 %v2918, %v2935
        %v2937 = vpop.f32.mrf.mxu0
        %v2938 = vadd.f32 %v2920, %v2937
        %2939 = vmatmul.bf16.gmra.mxu0 %v2808
        %v2940 = vpop.f32.mrf.mxu0
        %v2941 = vadd.f32 %v2923, %v2940
        %v2942 = vpop.f32.mrf.mxu0
        %2943 = vdwg.mxu0
        %v2944 = vmul.f32 %v2936, 0.5
        %v2945 = vmul.f32 %v2938, 0.5
        %v2946 = vmul.f32 %v2941, 0.5
        %v2947 = vadd.f32 %v2435, %v2944
        %v2948 = vadd.f32 %v2436, %v2945
        %v2949 = vadd.f32 %v2437, %v2946
        %2950 = vadd.xlane.f32.xlu0 %v2947
        %v2951 = vpop.xlane.xlu0 %2950
        %2952 = vadd.xlane.f32.xlu0 %v2948
        %v2953 = vpop.xlane.xlu0 %2952
        %2954 = vadd.xlane.f32.xlu0 %v2949
        %v2955 = vpop.xlane.xlu0 %2954
        %v2956 = vmul.f32 %v2951, %v1883
        %v2957 = vmul.f32 %v2953, %v1883
        %v2958 = vmul.f32 %v2955, %v1883
        %v2959 = vsub.f32 %v2947, %v2956
        %v2960 = vsub.f32 %v2948, %v2957
        %v2961 = vsub.f32 %v2949, %v2958
        %v2962 = vmul.f32 %v2959, %v2959
        %v2963 = vmul.f32 %v2960, %v2960
        %v2964 = vmul.f32 %v2961, %v2961
        %2965 = vadd.xlane.f32.xlu0 %v2962
        %v2966 = vpop.xlane.xlu0 %2965
        %2967 = vadd.xlane.f32.xlu0 %v2963
        %v2968 = vpop.xlane.xlu0 %2967
        %2969 = vadd.xlane.f32.xlu0 %v2964
        %v2970 = vpop.xlane.xlu0 %2969
        %v2971 = vmul.f32 %v2966, %v1883
        %v2972 = vmul.f32 %v2968, %v1883
        %v2973 = vmul.f32 %v2970, %v1883
        %v2974 = vadd.f32 %v2971, 1e-05
        %v2975 = vadd.f32 %v2972, 1e-05
        %v2976 = vadd.f32 %v2973, 1e-05
        %v2977 = vrsqrt.pop %v2974
        %v2978 = vmul.f32 %v2977, %v2974
        %v2979 = vmul.f32 %v2978, %v2977
        %v2980 = vmul.f32 0.5, %v2979
        %v2981 = vsub.f32 1.5, %v2980
        %v2982 = vmul.f32 %v2977, %v2981
        %vm2983 = vweird.f32 %v2974
        %vm2984 = vweird.f32 %v2977
        %vm2985 = vmor %vm2983, %vm2984
        %v2986 = vsel %vm2985, %v2977, %v2982
        %v2987 = vrsqrt.pop %v2975
        %v2988 = vmul.f32 %v2987, %v2975
        %v2989 = vmul.f32 %v2988, %v2987
        %v2990 = vmul.f32 0.5, %v2989
        %v2991 = vsub.f32 1.5, %v2990
        %v2992 = vmul.f32 %v2987, %v2991
        %vm2993 = vweird.f32 %v2975
        %vm2994 = vweird.f32 %v2987
        %vm2995 = vmor %vm2993, %vm2994
        %v2996 = vsel %vm2995, %v2987, %v2992
        %v2997 = vrsqrt.pop %v2976
        %v2998 = vmul.f32 %v2997, %v2976
        %v2999 = vmul.f32 %v2998, %v2997
        %v3000 = vmul.f32 0.5, %v2999
        %v3001 = vsub.f32 1.5, %v3000
        %v3002 = vmul.f32 %v2997, %v3001
        %vm3003 = vweird.f32 %v2976
        %vm3004 = vweird.f32 %v2997
        %vm3005 = vmor %vm3003, %vm3004
        %v3006 = vsel %vm3005, %v2997, %v3002
        %v3007 = vmul.f32 %v2959, %v2986
        %v3008 = vmul.f32 %v2960, %v2996
        %v3009 = vmul.f32 %v2961, %v3006
        %v3010 = vld [vmem:[%s20] sm:$0x1]
        %v3011 = vunpack.c.l.bf16 %v3010
        %v3012 = vperm.slane %v3011, 0
        %v3013 = vmul.f32 %v3007, %v3012
        %v3014 = vmul.f32 %v3008, %v3012
        %v3015 = vmul.f32 %v3009, %v3012
        %v3016 = vld [vmem:[%s21] sm:$0x1]
        %v3017 = vunpack.c.l.bf16 %v3016
        %v3018 = vperm.slane %v3017, 0
        %v3019 = vadd.f32 %v3013, %v3018
        %v3020 = vadd.f32 %v3014, %v3018
        %v3021 = vadd.f32 %v3015, %v3018
        %3022 = vst [vmem:[%s786] sm:$0xff] %v3019
        %3023 = vst [vmem:[%s786 + $0x8] sm:$0xff] %v3020
        %3024 = vst [vmem:[%s786 + $0x10] sm:$0xff] %v3021
        %p3025 = scmp.lt.s32.totalorder %s36, 1
        %s3026 = scalar_select %p3025, %s36, 1
        %s3027 = smul.addr %s3026, 3
        %s3028 = smul.addr %s3027, 8
        %s3029 = scalar_lea.vmem %s22, %s3028
        // Predicated region
        $region129: #{conformer_layer_forward.3} parent=107 // pred_check
          %p3030 = pneg %p526
        $region130: #{conformer_layer_forward.3} parent=107 // pred_check_branch
          %3032 = sbr.rel (%p3030) target = $region132
        $region131: #{conformer_layer_forward.3} parent=107 // pred_region
          _
        $region132: #{conformer_layer_forward.3} parent=107 // pred_fallthru
          _
      $region108: #{conformer_layer_forward.3} parent=5 // pred_fallthru
        _
      %p3033 = scmp.le.s32.totalorder 2, %s31
      // Predicated region
      $region133: #{conformer_layer_forward.3} parent=5 // pred_check
        %p3034 = pneg %p3033
      $region134: #{conformer_layer_forward.3} parent=5 // pred_check_branch
        %3036 = sbr.rel (%p3034) target = $region136
      $region135: #{conformer_layer_forward.3} parent=5 // pred_region
        %s3037 = ssub.s32 %s31, 2
        // Predicated region
        $region137: #{conformer_layer_forward.3} parent=135 // pred_check
          %p3038 = pneg %p532
        $region138: #{conformer_layer_forward.3} parent=135 // pred_check_branch
          %3040 = sbr.rel (%p3038) target = $region140
        $region139: #{conformer_layer_forward.3} parent=135 // pred_region
          %p3041 = scmp.lt.s32.totalorder %s37, 1
          %s3042 = scalar_select %p3041, %s37, 1
          %s3043 = smul.addr %s3042, 3
          %s3044 = smul.addr %s3043, 8
          %s3045 = scalar_lea.vmem %s22, %s3044
        $region140: #{conformer_layer_forward.3} parent=135 // pred_fallthru
          _
      $region136: #{conformer_layer_forward.3} parent=5 // pred_fallthru
        _
    $region6: #{conformer_layer_forward.3} parent=1 // loop_footer
      %s35 = sadd.s32 1, %s31
    $region7: #{conformer_layer_forward.3} parent=1 // loop_footer_branch
      %30 = sbr.rel target = $region3
    $region8: #{conformer_layer_forward.3} parent=1 // loop_exit
      _
    %3046 = vsyncpa [#allocation3], 1
    %s3047 = scalar_lea.sflag [#allocation3], 1
    %3048 = vsyncpa %s3047, 1
    %3049 = vsyncpa [#allocation5], 1
    %3050 = vsyncpa [#allocation8], 1

</llo_original>
